<compile_context>
chip_gen: v5e
topology: v5e:2x2
jax: 0.10.0
libtpu: 0.0.40
codegen_flags: <defaults>
</compile_context>

<pallas_src>
import jax
import jax.numpy as jnp
from jax.experimental import pallas as pl
from jax.experimental.pallas import tpu as pltpu


# ---------------------------------------------------------------------------
# helpers
# ---------------------------------------------------------------------------
def _round_up(n, m):
    return ((n + m - 1) // m) * m


def _choose_time_tile(T, cap):
    """Time tile: full sequence, or a multiple-of-8 divisor of T (BlockSpec-legal)."""
    if T <= cap:
        return T
    for tt in range(min(cap, T), 7, -1):
        if T % tt == 0 and tt % 8 == 0:
            return tt
    # No lane/sublane-friendly divisor: fall back to the whole sequence per tile
    # (block == full dim is always legal); batch tile shrinks to fit VMEM below.
    return T


def _choose_batch_tile(B, Tt, F, Hp, n_out_pad, proj_bytes, max_batch_tile,
                       budget_bytes=12 * 1024 * 1024):
    """Largest multiple-of-8 batch tile whose estimated VMEM footprint fits."""
    Bt = min(_round_up(B, 8), _round_up(max_batch_tile, 8))
    # Weights are double-buffered once (index map constant -> fetched a single time).
    w_bytes = 2 * (F * 4 * Hp * proj_bytes        # w_ih
                   + Hp * 4 * Hp * 4              # w_hh
                   + 4 * Hp * 4                   # bias
                   + Hp * n_out_pad * 4           # w_cls
                   + n_out_pad * 4)               # b_cls

    def est(bt):
        x_b = 2 * bt * Tt * F * 4            # input slab, double-buffered
        gx_b = bt * Tt * 4 * Hp * 4          # hoisted input projection (f32)
        state_b = 2 * bt * Hp * 4            # h, c scratch
        out_b = 2 * bt * n_out_pad * 4       # logits block
        tmp_b = 2 * bt * 4 * Hp * 4          # per-step gates / nonlinearity temps
        return w_bytes + x_b + gx_b + state_b + out_b + tmp_b

    while Bt > 8 and est(Bt) > budget_bytes:
        Bt -= 8
    return Bt


# ---------------------------------------------------------------------------
# kernel
# ---------------------------------------------------------------------------
def _lstm_head_kernel(x_ref, w_ih_ref, w_hh_ref, b_ref, w_cls_ref, b_cls_ref,
                      out_ref, h_scr, c_scr):
    """One (batch tile, time tile) grid step of the LSTM + classification head.

    x_ref:     (Bt, Tt, F)      input slab (batch-major, straight from HBM)
    w_ih_ref:  (F, 4*Hp)        input->gates weights (gate blocks padded to Hp), bf16/f32
    w_hh_ref:  (Hp, 4*Hp)       hidden->gates weights, f32
    b_ref:     (1, 4*Hp)        combined bias (b_ih + b_hh), f32
    w_cls_ref: (Hp, n_out_pad)  classification weights, f32
    b_cls_ref: (1, n_out_pad)   classification bias, f32
    out_ref:   (Bt, n_out_pad)  logits (lane-dense, sliced in the wrapper)
    h_scr/c_scr: (Bt, Hp)       f32 recurrent state, persists across time tiles
    """
    Bt, Tt, F = x_ref.shape
    Hp = w_hh_ref.shape[0]

    t_idx = pl.program_id(1)
    n_t = pl.num_programs(1)

    # PyTorch default: zero initial state (re-init at the start of each batch tile).
    @pl.when(t_idx == 0)
    def _init():
        h_scr[...] = jnp.zeros_like(h_scr)
        c_scr[...] = jnp.zeros_like(c_scr)

    # ---- hoisted input projection for the whole time tile (one MXU matmul) ----
    # Tt is either a multiple of 8 or the full (only) time tile, so this reshape is
    # a pure re-tiling of (8,128) tiles, not a relayout copy.
    x2d = x_ref[...].reshape(Bt * Tt, F)
    gx = jnp.dot(x2d.astype(w_ih_ref.dtype), w_ih_ref[...],
                 preferred_element_type=jnp.float32)          # (Bt*Tt, 4Hp), f32 acc
    gx = gx + b_ref[...]                                      # bias folded in once per tile
    gx = gx.reshape(Bt, Tt, 4 * Hp)

    w_hh = w_hh_ref[...]
    h = h_scr[...]
    c = c_scr[...]

    # ---- recurrent loop: fully unrolled (Tt is a small static tile) ----------
    # Per step: one (Bt, Hp) @ (Hp, 4Hp) MXU matmul + lane-aligned gate
    # nonlinearities (sigmoid/tanh run on the EUP, off the MXU critical path).
    for tt in range(Tt):
        gates = gx[:, tt, :] + jnp.dot(h, w_hh, preferred_element_type=jnp.float32)
        i = jax.nn.sigmoid(gates[:, 0 * Hp:1 * Hp])
        f = jax.nn.sigmoid(gates[:, 1 * Hp:2 * Hp])
        g = jnp.tanh(gates[:, 2 * Hp:3 * Hp])
        o = jax.nn.sigmoid(gates[:, 3 * Hp:4 * Hp])
        c = f * c + i * g
        h = o * jnp.tanh(c)

    h_scr[...] = h
    c_scr[...] = c

    # ---- classification head on the last hidden state -------------------------
    @pl.when(t_idx == n_t - 1)
    def _head():
        logits = jnp.dot(h, w_cls_ref[...], preferred_element_type=jnp.float32)
        out_ref[...] = (logits + b_cls_ref[...]).astype(out_ref.dtype)


# ---------------------------------------------------------------------------
# wrapper
# ---------------------------------------------------------------------------
def classification_head_rnn(x, packed, *, max_batch_tile=128, max_time_tile=16):
    """x: (B, T, F) float32, batch_first (like the nn.Module). Returns (B, n_output)."""
    B, T, F = x.shape
    Hp = packed["w_hh_t"].shape[0]
    n_out_pad = packed["w_cls_t"].shape[1]
    n_out = packed["n_out"]
    proj_bytes = jnp.dtype(packed["w_ih_t"].dtype).itemsize

    # Time tile must divide T exactly (zero-padding time would change LSTM semantics).
    Tt = _choose_time_tile(T, max_time_tile)
    # Batch tile: multiple of 8 (sublanes), shrunk to fit the default scoped VMEM.
    Bt = _choose_batch_tile(B, Tt, F, Hp, n_out_pad, proj_bytes, max_batch_tile)

    B_pad = _round_up(B, Bt)
    if B_pad > B:
        x = jnp.pad(x, ((0, B_pad - B), (0, 0), (0, 0)))
    nb, nt = B_pad // Bt, T // Tt

    full = lambda a: pl.BlockSpec(a.shape, lambda b, t: (0,) * a.ndim)

    out = pl.pallas_call(
        _lstm_head_kernel,
        out_shape=jax.ShapeDtypeStruct((B_pad, n_out_pad), jnp.float32),
        grid=(nb, nt),
        in_specs=[
            pl.BlockSpec((Bt, Tt, F), lambda b, t: (b, t, 0)),   # x: pipelined per tile
            full(packed["w_ih_t"]),                              # weights stay resident
            full(packed["w_hh_t"]),
            full(packed["bias"]),
            full(packed["w_cls_t"]),
            full(packed["b_cls"]),
        ],
        out_specs=pl.BlockSpec((Bt, n_out_pad), lambda b, t: (b, 0)),
        scratch_shapes=[
            pltpu.VMEM((Bt, Hp), jnp.float32),   # h (carried across time tiles)
            pltpu.VMEM((Bt, Hp), jnp.float32),   # c
        ],
        # batch tiles are independent -> "parallel" (megacore); time is recurrent.
        compiler_params=pltpu.CompilerParams(
            dimension_semantics=("parallel", "arbitrary")),
    )(x, packed["w_ih_t"], packed["w_hh_t"], packed["bias"],
      packed["w_cls_t"], packed["b_cls"])

    return out[:B, :n_out]


# ---------------------------------------------------------------------------
# parameter construction (PyTorch layout) + packing into kernel layout
# ---------------------------------------------------------------------------
def init_raw_params(key, n_features, n_hidden, n_output):
    """PyTorch-style init: U(-1/sqrt(H), 1/sqrt(H)), PyTorch weight layout."""
    k = 1.0 / jnp.sqrt(jnp.float32(n_hidden))
    keys = jax.random.split(key, 6)
    return {
        "w_ih": jax.random.uniform(keys[0], (4 * n_hidden, n_features), jnp.float32, -k, k),
        "w_hh": jax.random.uniform(keys[1], (4 * n_hidden, n_hidden), jnp.float32, -k, k),
        "b_ih": jax.random.uniform(keys[2], (4 * n_hidden,), jnp.float32, -k, k),
        "b_hh": jax.random.uniform(keys[3], (4 * n_hidden,), jnp.float32, -k, k),
        "w_cls": jax.random.uniform(keys[4], (n_output, n_hidden), jnp.float32, -k, k),
        "b_cls": jax.random.uniform(keys[5], (n_output,), jnp.float32, -k, k),
    }


def pack_params(raw, *, proj_dtype=jnp.bfloat16):
    """Transpose + pad PyTorch-layout weights into the kernel layout.

    Hidden size is padded per-gate to Hp = round_up(H, 128) so each gate occupies
    whole 128-lane vregs; padded hidden units get zero weights/bias and therefore
    stay exactly zero through the recurrence.  n_output is padded to 128 so the
    output store is lane-dense.  `proj_dtype` controls the MXU operand dtype of the
    bulk input projection (bf16 by default; recurrent/head matmuls stay f32).
    """
    w_ih, w_hh = raw["w_ih"], raw["w_hh"]
    b = raw["b_ih"] + raw["b_hh"]
    w_cls, b_cls = raw["w_cls"], raw["b_cls"]
    H = w_hh.shape[1]
    n_out = w_cls.shape[0]
    Hp = _round_up(H, 128)
    n_out_p = _round_up(n_out, 128)

    def pad_gate_cols(w_t):  # (in_dim, 4H) -> (in_dim, 4Hp), gate blocks lane-aligned
        blocks = [jnp.pad(w_t[:, g * H:(g + 1) * H], ((0, 0), (0, Hp - H)))
                  for g in range(4)]
        return jnp.concatenate(blocks, axis=1)

    return {
        "w_ih_t": pad_gate_cols(w_ih.T).astype(proj_dtype),                  # (F, 4Hp)
        "w_hh_t": jnp.pad(pad_gate_cols(w_hh.T), ((0, Hp - H), (0, 0))),     # (Hp, 4Hp) f32
        "bias": pad_gate_cols(b[None, :]).astype(jnp.float32),               # (1, 4Hp)
        "w_cls_t": jnp.pad(w_cls.T, ((0, Hp - H), (0, n_out_p - n_out))),    # (Hp, n_out_p)
        "b_cls": jnp.pad(b_cls[None, :], ((0, 0), (0, n_out_p - n_out))),    # (1, n_out_p)
        "n_out": n_out,
    }


# ---------------------------------------------------------------------------
# pure-JAX reference (PyTorch layout, f32) for correctness checking
# ---------------------------------------------------------------------------
def _reference(x, raw):
    B, T, F = x.shape
    H = raw["w_hh"].shape[1]
    bias = raw["b_ih"] + raw["b_hh"]
    h = jnp.zeros((B, H), jnp.float32)
    c = jnp.zeros((B, H), jnp.float32)
    for t in range(T):
        gates = x[:, t] @ raw["w_ih"].T + h @ raw["w_hh"].T + bias
        i = jax.nn.sigmoid(gates[:, 0 * H:1 * H])
        f = jax.nn.sigmoid(gates[:, 1 * H:2 * H])
        g = jnp.tanh(gates[:, 2 * H:3 * H])
        o = jax.nn.sigmoid(gates[:, 3 * H:4 * H])
        c = f * c + i * g
        h = o * jnp.tanh(c)
    return h @ raw["w_cls"].T + raw["b_cls"]


if __name__ == "__main__":
    # Small shapes consistent with the module's forward: x is (batch, seq, features).
    B, T, n_features, n_hidden, n_output = 2, 8, 32, 32, 3

    key = jax.random.PRNGKey(0)
    kx, kp = jax.random.split(key)
    x = jax.random.normal(kx, (B, T, n_features), jnp.float32)
    raw = init_raw_params(kp, n_features, n_hidden, n_output)
    ref = _reference(x, raw)

    # 1) f32 projection path: must match the reference tightly.
    out_f32 = jax.block_until_ready(
        classification_head_rnn(x, pack_params(raw, proj_dtype=jnp.float32)))
    assert out_f32.shape == (B, n_output)
    assert jnp.allclose(out_f32, ref, atol=1e-4, rtol=1e-4)

    # 2) default path: bf16 operands for the bulk input projection (MXU-friendly on
    #    v6e/v7x); recurrent state and nonlinearities stay f32, so drift is tiny.
    out_bf16 = jax.block_until_ready(
        classification_head_rnn(x, pack_params(raw)))
    assert out_bf16.shape == (B, n_output)
    assert jnp.allclose(out_bf16, ref, atol=5e-2, rtol=5e-2)

    print("KERNEL_OK")
</pallas_src>

<mosaic_0001>
module attributes {stable_mosaic.version = 11 : i64} {
  func.func @_lstm_head_kernel(%arg0: i32, %arg1: i32, %arg2: memref<8x8x32xf32, #tpu.memory_space<vmem>>, %arg3: memref<32x512xf32, #tpu.memory_space<vmem>>, %arg4: memref<128x512xf32, #tpu.memory_space<vmem>>, %arg5: memref<1x512xf32, #tpu.memory_space<vmem>>, %arg6: memref<128x128xf32, #tpu.memory_space<vmem>>, %arg7: memref<1x128xf32, #tpu.memory_space<vmem>>, %arg8: memref<8x128xf32, #tpu.memory_space<vmem>>, %arg9: memref<8x128xf32, #tpu.memory_space<vmem>>, %arg10: memref<8x128xf32, #tpu.memory_space<vmem>>) attributes {dimension_semantics = [#tpu.dimension_semantics<parallel>, #tpu.dimension_semantics<arbitrary>], iteration_bounds = array<i64: 1, 1>, scalar_prefetch = 0 : i64, scratch_operands = 2 : i64, tpu.core_type = #tpu.core_type<tc>, window_params = [{transform_indices = @transform_0, window_bounds = array<i64: 8, 8, 32>}, {pipeline_mode = #tpu.pipeline_mode<synchronous>, transform_indices = @transform_1, window_bounds = array<i64: 32, 512>}, {pipeline_mode = #tpu.pipeline_mode<synchronous>, transform_indices = @transform_2, window_bounds = array<i64: 128, 512>}, {pipeline_mode = #tpu.pipeline_mode<synchronous>, transform_indices = @transform_3, window_bounds = array<i64: 1, 512>}, {pipeline_mode = #tpu.pipeline_mode<synchronous>, transform_indices = @transform_4, window_bounds = array<i64: 128, 128>}, {pipeline_mode = #tpu.pipeline_mode<synchronous>, transform_indices = @transform_5, window_bounds = array<i64: 1, 128>}, {transform_indices = @transform_6, window_bounds = array<i64: 8, 128>}]} {
    %c0_i32 = arith.constant 0 : i32
    %0 = arith.cmpi eq, %arg1, %c0_i32 : i32
    %1 = arith.extui %0 : i1 to i32
    %c0_i32_0 = arith.constant 0 : i32
    %2 = arith.cmpi ne, %1, %c0_i32_0 : i32
    scf.if %2 {
      %cst_51 = arith.constant 0.000000e+00 : f32
      %251 = vector.broadcast %cst_51 : f32 to vector<8x128xf32>
      %c0_52 = arith.constant 0 : index
      %c0_53 = arith.constant 0 : index
      %252 = vector.load %arg9[%c0_52, %c0_53] : memref<8x128xf32, #tpu.memory_space<vmem>>, vector<8x128xf32>
      tpu.vector_store %arg9[%c0_52, %c0_53], %251 {strides = array<i32>} : memref<8x128xf32, #tpu.memory_space<vmem>>, vector<8x128xf32>,
      %cst_54 = arith.constant 0.000000e+00 : f32
      %253 = vector.broadcast %cst_54 : f32 to vector<8x128xf32>
      %c0_55 = arith.constant 0 : index
      %c0_56 = arith.constant 0 : index
      %254 = vector.load %arg10[%c0_55, %c0_56] : memref<8x128xf32, #tpu.memory_space<vmem>>, vector<8x128xf32>
      tpu.vector_store %arg10[%c0_55, %c0_56], %253 {strides = array<i32>} : memref<8x128xf32, #tpu.memory_space<vmem>>, vector<8x128xf32>,
    } else {
    }
    %c0 = arith.constant 0 : index
    %c0_1 = arith.constant 0 : index
    %c0_2 = arith.constant 0 : index
    %3 = vector.load %arg2[%c0, %c0_1, %c0_2] : memref<8x8x32xf32, #tpu.memory_space<vmem>>, vector<8x8x32xf32>
    %4 = vector.shape_cast %3 : vector<8x8x32xf32> to vector<64x32xf32>
    %c0_3 = arith.constant 0 : index
    %c0_4 = arith.constant 0 : index
    %5 = vector.load %arg3[%c0_3, %c0_4] : memref<32x512xf32, #tpu.memory_space<vmem>>, vector<32x512xf32>
    %cst = arith.constant dense<0.000000e+00> : vector<64x512xf32>
    %6 = tpu.matmul %4, %5, %cst {dimension_numbers = #tpu.dot_dimension_numbers<[1], [0], [0], [1], [0, 0, 1, 1], [], []>} : vector<64x32xf32>, vector<32x512xf32>, vector<64x512xf32> -> vector<64x512xf32>
    %c0_5 = arith.constant 0 : index
    %c0_6 = arith.constant 0 : index
    %7 = vector.load %arg5[%c0_5, %c0_6] : memref<1x512xf32, #tpu.memory_space<vmem>>, vector<1x512xf32>
    %8 = vector.broadcast %7 : vector<1x512xf32> to vector<64x512xf32>
    %9 = arith.addf %6, %8 : vector<64x512xf32>
    %10 = vector.shape_cast %9 : vector<64x512xf32> to vector<8x8x512xf32>
    %c0_7 = arith.constant 0 : index
    %c0_8 = arith.constant 0 : index
    %11 = vector.load %arg4[%c0_7, %c0_8] : memref<128x512xf32, #tpu.memory_space<vmem>>, vector<128x512xf32>
    %c0_9 = arith.constant 0 : index
    %c0_10 = arith.constant 0 : index
    %12 = vector.load %arg9[%c0_9, %c0_10] : memref<8x128xf32, #tpu.memory_space<vmem>>, vector<8x128xf32>
    %c0_11 = arith.constant 0 : index
    %c0_12 = arith.constant 0 : index
    %13 = vector.load %arg10[%c0_11, %c0_12] : memref<8x128xf32, #tpu.memory_space<vmem>>, vector<8x128xf32>
    %14 = vector.extract_strided_slice %10 {offsets = [0, 0, 0], sizes = [8, 1, 512], strides = [1, 1, 1]} : vector<8x8x512xf32> to vector<8x1x512xf32>
    %15 = vector.shape_cast %14 : vector<8x1x512xf32> to vector<8x512xf32>
    %cst_13 = arith.constant dense<0.000000e+00> : vector<8x512xf32>
    %16 = tpu.matmul %12, %11, %cst_13 {dimension_numbers = #tpu.dot_dimension_numbers<[1], [0], [0], [1], [0, 0, 1, 1], [], []>} : vector<8x128xf32>, vector<128x512xf32>, vector<8x512xf32> -> vector<8x512xf32>
    %17 = arith.addf %15, %16 : vector<8x512xf32>
    %18 = vector.extract_strided_slice %17 {offsets = [0, 0], sizes = [8, 128], strides = [1, 1]} : vector<8x512xf32> to vector<8x128xf32>
    %19 = arith.negf %18 : vector<8x128xf32>
    %20 = math.exp %19 : vector<8x128xf32>
    %cst_14 = arith.constant 1.000000e+00 : f32
    %21 = vector.broadcast %cst_14 : f32 to vector<8x128xf32>
    %22 = arith.addf %21, %20 : vector<8x128xf32>
    %23 = arith.divf %21, %22 : vector<8x128xf32>
    %24 = vector.extract_strided_slice %17 {offsets = [0, 128], sizes = [8, 128], strides = [1, 1]} : vector<8x512xf32> to vector<8x128xf32>
    %25 = arith.negf %24 : vector<8x128xf32>
    %26 = math.exp %25 : vector<8x128xf32>
    %cst_15 = arith.constant 1.000000e+00 : f32
    %27 = vector.broadcast %cst_15 : f32 to vector<8x128xf32>
    %28 = arith.addf %27, %26 : vector<8x128xf32>
    %29 = arith.divf %27, %28 : vector<8x128xf32>
    %30 = vector.extract_strided_slice %17 {offsets = [0, 256], sizes = [8, 128], strides = [1, 1]} : vector<8x512xf32> to vector<8x128xf32>
    %31 = math.tanh %30 : vector<8x128xf32>
    %32 = vector.extract_strided_slice %17 {offsets = [0, 384], sizes = [8, 128], strides = [1, 1]} : vector<8x512xf32> to vector<8x128xf32>
    %33 = arith.negf %32 : vector<8x128xf32>
    %34 = math.exp %33 : vector<8x128xf32>
    %cst_16 = arith.constant 1.000000e+00 : f32
    %35 = vector.broadcast %cst_16 : f32 to vector<8x128xf32>
    %36 = arith.addf %35, %34 : vector<8x128xf32>
    %37 = arith.divf %35, %36 : vector<8x128xf32>
    %38 = arith.mulf %29, %13 : vector<8x128xf32>
    %39 = arith.mulf %23, %31 : vector<8x128xf32>
    %40 = arith.addf %38, %39 : vector<8x128xf32>
    %41 = math.tanh %40 : vector<8x128xf32>
    %42 = arith.mulf %37, %41 : vector<8x128xf32>
    %43 = vector.extract_strided_slice %10 {offsets = [0, 1, 0], sizes = [8, 1, 512], strides = [1, 1, 1]} : vector<8x8x512xf32> to vector<8x1x512xf32>
    %44 = vector.shape_cast %43 : vector<8x1x512xf32> to vector<8x512xf32>
    %cst_17 = arith.constant dense<0.000000e+00> : vector<8x512xf32>
    %45 = tpu.matmul %42, %11, %cst_17 {dimension_numbers = #tpu.dot_dimension_numbers<[1], [0], [0], [1], [0, 0, 1, 1], [], []>} : vector<8x128xf32>, vector<128x512xf32>, vector<8x512xf32> -> vector<8x512xf32>
    %46 = arith.addf %44, %45 : vector<8x512xf32>
    %47 = vector.extract_strided_slice %46 {offsets = [0, 0], sizes = [8, 128], strides = [1, 1]} : vector<8x512xf32> to vector<8x128xf32>
    %48 = arith.negf %47 : vector<8x128xf32>
    %49 = math.exp %48 : vector<8x128xf32>
    %cst_18 = arith.constant 1.000000e+00 : f32
    %50 = vector.broadcast %cst_18 : f32 to vector<8x128xf32>
    %51 = arith.addf %50, %49 : vector<8x128xf32>
    %52 = arith.divf %50, %51 : vector<8x128xf32>
    %53 = vector.extract_strided_slice %46 {offsets = [0, 128], sizes = [8, 128], strides = [1, 1]} : vector<8x512xf32> to vector<8x128xf32>
    %54 = arith.negf %53 : vector<8x128xf32>
    %55 = math.exp %54 : vector<8x128xf32>
    %cst_19 = arith.constant 1.000000e+00 : f32
    %56 = vector.broadcast %cst_19 : f32 to vector<8x128xf32>
    %57 = arith.addf %56, %55 : vector<8x128xf32>
    %58 = arith.divf %56, %57 : vector<8x128xf32>
    %59 = vector.extract_strided_slice %46 {offsets = [0, 256], sizes = [8, 128], strides = [1, 1]} : vector<8x512xf32> to vector<8x128xf32>
    %60 = math.tanh %59 : vector<8x128xf32>
    %61 = vector.extract_strided_slice %46 {offsets = [0, 384], sizes = [8, 128], strides = [1, 1]} : vector<8x512xf32> to vector<8x128xf32>
    %62 = arith.negf %61 : vector<8x128xf32>
    %63 = math.exp %62 : vector<8x128xf32>
    %cst_20 = arith.constant 1.000000e+00 : f32
    %64 = vector.broadcast %cst_20 : f32 to vector<8x128xf32>
    %65 = arith.addf %64, %63 : vector<8x128xf32>
    %66 = arith.divf %64, %65 : vector<8x128xf32>
    %67 = arith.mulf %58, %40 : vector<8x128xf32>
    %68 = arith.mulf %52, %60 : vector<8x128xf32>
    %69 = arith.addf %67, %68 : vector<8x128xf32>
    %70 = math.tanh %69 : vector<8x128xf32>
    %71 = arith.mulf %66, %70 : vector<8x128xf32>
    %72 = vector.extract_strided_slice %10 {offsets = [0, 2, 0], sizes = [8, 1, 512], strides = [1, 1, 1]} : vector<8x8x512xf32> to vector<8x1x512xf32>
    %73 = vector.shape_cast %72 : vector<8x1x512xf32> to vector<8x512xf32>
    %cst_21 = arith.constant dense<0.000000e+00> : vector<8x512xf32>
    %74 = tpu.matmul %71, %11, %cst_21 {dimension_numbers = #tpu.dot_dimension_numbers<[1], [0], [0], [1], [0, 0, 1, 1], [], []>} : vector<8x128xf32>, vector<128x512xf32>, vector<8x512xf32> -> vector<8x512xf32>
    %75 = arith.addf %73, %74 : vector<8x512xf32>
    %76 = vector.extract_strided_slice %75 {offsets = [0, 0], sizes = [8, 128], strides = [1, 1]} : vector<8x512xf32> to vector<8x128xf32>
    %77 = arith.negf %76 : vector<8x128xf32>
    %78 = math.exp %77 : vector<8x128xf32>
    %cst_22 = arith.constant 1.000000e+00 : f32
    %79 = vector.broadcast %cst_22 : f32 to vector<8x128xf32>
    %80 = arith.addf %79, %78 : vector<8x128xf32>
    %81 = arith.divf %79, %80 : vector<8x128xf32>
    %82 = vector.extract_strided_slice %75 {offsets = [0, 128], sizes = [8, 128], strides = [1, 1]} : vector<8x512xf32> to vector<8x128xf32>
    %83 = arith.negf %82 : vector<8x128xf32>
    %84 = math.exp %83 : vector<8x128xf32>
    %cst_23 = arith.constant 1.000000e+00 : f32
    %85 = vector.broadcast %cst_23 : f32 to vector<8x128xf32>
    %86 = arith.addf %85, %84 : vector<8x128xf32>
    %87 = arith.divf %85, %86 : vector<8x128xf32>
    %88 = vector.extract_strided_slice %75 {offsets = [0, 256], sizes = [8, 128], strides = [1, 1]} : vector<8x512xf32> to vector<8x128xf32>
    %89 = math.tanh %88 : vector<8x128xf32>
    %90 = vector.extract_strided_slice %75 {offsets = [0, 384], sizes = [8, 128], strides = [1, 1]} : vector<8x512xf32> to vector<8x128xf32>
    %91 = arith.negf %90 : vector<8x128xf32>
    %92 = math.exp %91 : vector<8x128xf32>
    %cst_24 = arith.constant 1.000000e+00 : f32
    %93 = vector.broadcast %cst_24 : f32 to vector<8x128xf32>
    %94 = arith.addf %93, %92 : vector<8x128xf32>
    %95 = arith.divf %93, %94 : vector<8x128xf32>
    %96 = arith.mulf %87, %69 : vector<8x128xf32>
    %97 = arith.mulf %81, %89 : vector<8x128xf32>
    %98 = arith.addf %96, %97 : vector<8x128xf32>
    %99 = math.tanh %98 : vector<8x128xf32>
    %100 = arith.mulf %95, %99 : vector<8x128xf32>
    %101 = vector.extract_strided_slice %10 {offsets = [0, 3, 0], sizes = [8, 1, 512], strides = [1, 1, 1]} : vector<8x8x512xf32> to vector<8x1x512xf32>
    %102 = vector.shape_cast %101 : vector<8x1x512xf32> to vector<8x512xf32>
    %cst_25 = arith.constant dense<0.000000e+00> : vector<8x512xf32>
    %103 = tpu.matmul %100, %11, %cst_25 {dimension_numbers = #tpu.dot_dimension_numbers<[1], [0], [0], [1], [0, 0, 1, 1], [], []>} : vector<8x128xf32>, vector<128x512xf32>, vector<8x512xf32> -> vector<8x512xf32>
    %104 = arith.addf %102, %103 : vector<8x512xf32>
    %105 = vector.extract_strided_slice %104 {offsets = [0, 0], sizes = [8, 128], strides = [1, 1]} : vector<8x512xf32> to vector<8x128xf32>
    %106 = arith.negf %105 : vector<8x128xf32>
    %107 = math.exp %106 : vector<8x128xf32>
    %cst_26 = arith.constant 1.000000e+00 : f32
    %108 = vector.broadcast %cst_26 : f32 to vector<8x128xf32>
    %109 = arith.addf %108, %107 : vector<8x128xf32>
    %110 = arith.divf %108, %109 : vector<8x128xf32>
    %111 = vector.extract_strided_slice %104 {offsets = [0, 128], sizes = [8, 128], strides = [1, 1]} : vector<8x512xf32> to vector<8x128xf32>
    %112 = arith.negf %111 : vector<8x128xf32>
    %113 = math.exp %112 : vector<8x128xf32>
    %cst_27 = arith.constant 1.000000e+00 : f32
    %114 = vector.broadcast %cst_27 : f32 to vector<8x128xf32>
    %115 = arith.addf %114, %113 : vector<8x128xf32>
    %116 = arith.divf %114, %115 : vector<8x128xf32>
    %117 = vector.extract_strided_slice %104 {offsets = [0, 256], sizes = [8, 128], strides = [1, 1]} : vector<8x512xf32> to vector<8x128xf32>
    %118 = math.tanh %117 : vector<8x128xf32>
    %119 = vector.extract_strided_slice %104 {offsets = [0, 384], sizes = [8, 128], strides = [1, 1]} : vector<8x512xf32> to vector<8x128xf32>
    %120 = arith.negf %119 : vector<8x128xf32>
    %121 = math.exp %120 : vector<8x128xf32>
    %cst_28 = arith.constant 1.000000e+00 : f32
    %122 = vector.broadcast %cst_28 : f32 to vector<8x128xf32>
    %123 = arith.addf %122, %121 : vector<8x128xf32>
    %124 = arith.divf %122, %123 : vector<8x128xf32>
    %125 = arith.mulf %116, %98 : vector<8x128xf32>
    %126 = arith.mulf %110, %118 : vector<8x128xf32>
    %127 = arith.addf %125, %126 : vector<8x128xf32>
    %128 = math.tanh %127 : vector<8x128xf32>
    %129 = arith.mulf %124, %128 : vector<8x128xf32>
    %130 = vector.extract_strided_slice %10 {offsets = [0, 4, 0], sizes = [8, 1, 512], strides = [1, 1, 1]} : vector<8x8x512xf32> to vector<8x1x512xf32>
    %131 = vector.shape_cast %130 : vector<8x1x512xf32> to vector<8x512xf32>
    %cst_29 = arith.constant dense<0.000000e+00> : vector<8x512xf32>
    %132 = tpu.matmul %129, %11, %cst_29 {dimension_numbers = #tpu.dot_dimension_numbers<[1], [0], [0], [1], [0, 0, 1, 1], [], []>} : vector<8x128xf32>, vector<128x512xf32>, vector<8x512xf32> -> vector<8x512xf32>
    %133 = arith.addf %131, %132 : vector<8x512xf32>
    %134 = vector.extract_strided_slice %133 {offsets = [0, 0], sizes = [8, 128], strides = [1, 1]} : vector<8x512xf32> to vector<8x128xf32>
    %135 = arith.negf %134 : vector<8x128xf32>
    %136 = math.exp %135 : vector<8x128xf32>
    %cst_30 = arith.constant 1.000000e+00 : f32
    %137 = vector.broadcast %cst_30 : f32 to vector<8x128xf32>
    %138 = arith.addf %137, %136 : vector<8x128xf32>
    %139 = arith.divf %137, %138 : vector<8x128xf32>
    %140 = vector.extract_strided_slice %133 {offsets = [0, 128], sizes = [8, 128], strides = [1, 1]} : vector<8x512xf32> to vector<8x128xf32>
    %141 = arith.negf %140 : vector<8x128xf32>
    %142 = math.exp %141 : vector<8x128xf32>
    %cst_31 = arith.constant 1.000000e+00 : f32
    %143 = vector.broadcast %cst_31 : f32 to vector<8x128xf32>
    %144 = arith.addf %143, %142 : vector<8x128xf32>
    %145 = arith.divf %143, %144 : vector<8x128xf32>
    %146 = vector.extract_strided_slice %133 {offsets = [0, 256], sizes = [8, 128], strides = [1, 1]} : vector<8x512xf32> to vector<8x128xf32>
    %147 = math.tanh %146 : vector<8x128xf32>
    %148 = vector.extract_strided_slice %133 {offsets = [0, 384], sizes = [8, 128], strides = [1, 1]} : vector<8x512xf32> to vector<8x128xf32>
    %149 = arith.negf %148 : vector<8x128xf32>
    %150 = math.exp %149 : vector<8x128xf32>
    %cst_32 = arith.constant 1.000000e+00 : f32
    %151 = vector.broadcast %cst_32 : f32 to vector<8x128xf32>
    %152 = arith.addf %151, %150 : vector<8x128xf32>
    %153 = arith.divf %151, %152 : vector<8x128xf32>
    %154 = arith.mulf %145, %127 : vector<8x128xf32>
    %155 = arith.mulf %139, %147 : vector<8x128xf32>
    %156 = arith.addf %154, %155 : vector<8x128xf32>
    %157 = math.tanh %156 : vector<8x128xf32>
    %158 = arith.mulf %153, %157 : vector<8x128xf32>
    %159 = vector.extract_strided_slice %10 {offsets = [0, 5, 0], sizes = [8, 1, 512], strides = [1, 1, 1]} : vector<8x8x512xf32> to vector<8x1x512xf32>
    %160 = vector.shape_cast %159 : vector<8x1x512xf32> to vector<8x512xf32>
    %cst_33 = arith.constant dense<0.000000e+00> : vector<8x512xf32>
    %161 = tpu.matmul %158, %11, %cst_33 {dimension_numbers = #tpu.dot_dimension_numbers<[1], [0], [0], [1], [0, 0, 1, 1], [], []>} : vector<8x128xf32>, vector<128x512xf32>, vector<8x512xf32> -> vector<8x512xf32>
    %162 = arith.addf %160, %161 : vector<8x512xf32>
    %163 = vector.extract_strided_slice %162 {offsets = [0, 0], sizes = [8, 128], strides = [1, 1]} : vector<8x512xf32> to vector<8x128xf32>
    %164 = arith.negf %163 : vector<8x128xf32>
    %165 = math.exp %164 : vector<8x128xf32>
    %cst_34 = arith.constant 1.000000e+00 : f32
    %166 = vector.broadcast %cst_34 : f32 to vector<8x128xf32>
    %167 = arith.addf %166, %165 : vector<8x128xf32>
    %168 = arith.divf %166, %167 : vector<8x128xf32>
    %169 = vector.extract_strided_slice %162 {offsets = [0, 128], sizes = [8, 128], strides = [1, 1]} : vector<8x512xf32> to vector<8x128xf32>
    %170 = arith.negf %169 : vector<8x128xf32>
    %171 = math.exp %170 : vector<8x128xf32>
    %cst_35 = arith.constant 1.000000e+00 : f32
    %172 = vector.broadcast %cst_35 : f32 to vector<8x128xf32>
    %173 = arith.addf %172, %171 : vector<8x128xf32>
    %174 = arith.divf %172, %173 : vector<8x128xf32>
    %175 = vector.extract_strided_slice %162 {offsets = [0, 256], sizes = [8, 128], strides = [1, 1]} : vector<8x512xf32> to vector<8x128xf32>
    %176 = math.tanh %175 : vector<8x128xf32>
    %177 = vector.extract_strided_slice %162 {offsets = [0, 384], sizes = [8, 128], strides = [1, 1]} : vector<8x512xf32> to vector<8x128xf32>
    %178 = arith.negf %177 : vector<8x128xf32>
    %179 = math.exp %178 : vector<8x128xf32>
    %cst_36 = arith.constant 1.000000e+00 : f32
    %180 = vector.broadcast %cst_36 : f32 to vector<8x128xf32>
    %181 = arith.addf %180, %179 : vector<8x128xf32>
    %182 = arith.divf %180, %181 : vector<8x128xf32>
    %183 = arith.mulf %174, %156 : vector<8x128xf32>
    %184 = arith.mulf %168, %176 : vector<8x128xf32>
    %185 = arith.addf %183, %184 : vector<8x128xf32>
    %186 = math.tanh %185 : vector<8x128xf32>
    %187 = arith.mulf %182, %186 : vector<8x128xf32>
    %188 = vector.extract_strided_slice %10 {offsets = [0, 6, 0], sizes = [8, 1, 512], strides = [1, 1, 1]} : vector<8x8x512xf32> to vector<8x1x512xf32>
    %189 = vector.shape_cast %188 : vector<8x1x512xf32> to vector<8x512xf32>
    %cst_37 = arith.constant dense<0.000000e+00> : vector<8x512xf32>
    %190 = tpu.matmul %187, %11, %cst_37 {dimension_numbers = #tpu.dot_dimension_numbers<[1], [0], [0], [1], [0, 0, 1, 1], [], []>} : vector<8x128xf32>, vector<128x512xf32>, vector<8x512xf32> -> vector<8x512xf32>
    %191 = arith.addf %189, %190 : vector<8x512xf32>
    %192 = vector.extract_strided_slice %191 {offsets = [0, 0], sizes = [8, 128], strides = [1, 1]} : vector<8x512xf32> to vector<8x128xf32>
    %193 = arith.negf %192 : vector<8x128xf32>
    %194 = math.exp %193 : vector<8x128xf32>
    %cst_38 = arith.constant 1.000000e+00 : f32
    %195 = vector.broadcast %cst_38 : f32 to vector<8x128xf32>
    %196 = arith.addf %195, %194 : vector<8x128xf32>
    %197 = arith.divf %195, %196 : vector<8x128xf32>
    %198 = vector.extract_strided_slice %191 {offsets = [0, 128], sizes = [8, 128], strides = [1, 1]} : vector<8x512xf32> to vector<8x128xf32>
    %199 = arith.negf %198 : vector<8x128xf32>
    %200 = math.exp %199 : vector<8x128xf32>
    %cst_39 = arith.constant 1.000000e+00 : f32
    %201 = vector.broadcast %cst_39 : f32 to vector<8x128xf32>
    %202 = arith.addf %201, %200 : vector<8x128xf32>
    %203 = arith.divf %201, %202 : vector<8x128xf32>
    %204 = vector.extract_strided_slice %191 {offsets = [0, 256], sizes = [8, 128], strides = [1, 1]} : vector<8x512xf32> to vector<8x128xf32>
    %205 = math.tanh %204 : vector<8x128xf32>
    %206 = vector.extract_strided_slice %191 {offsets = [0, 384], sizes = [8, 128], strides = [1, 1]} : vector<8x512xf32> to vector<8x128xf32>
    %207 = arith.negf %206 : vector<8x128xf32>
    %208 = math.exp %207 : vector<8x128xf32>
    %cst_40 = arith.constant 1.000000e+00 : f32
    %209 = vector.broadcast %cst_40 : f32 to vector<8x128xf32>
    %210 = arith.addf %209, %208 : vector<8x128xf32>
    %211 = arith.divf %209, %210 : vector<8x128xf32>
    %212 = arith.mulf %203, %185 : vector<8x128xf32>
    %213 = arith.mulf %197, %205 : vector<8x128xf32>
    %214 = arith.addf %212, %213 : vector<8x128xf32>
    %215 = math.tanh %214 : vector<8x128xf32>
    %216 = arith.mulf %211, %215 : vector<8x128xf32>
    %217 = vector.extract_strided_slice %10 {offsets = [0, 7, 0], sizes = [8, 1, 512], strides = [1, 1, 1]} : vector<8x8x512xf32> to vector<8x1x512xf32>
    %218 = vector.shape_cast %217 : vector<8x1x512xf32> to vector<8x512xf32>
    %cst_41 = arith.constant dense<0.000000e+00> : vector<8x512xf32>
    %219 = tpu.matmul %216, %11, %cst_41 {dimension_numbers = #tpu.dot_dimension_numbers<[1], [0], [0], [1], [0, 0, 1, 1], [], []>} : vector<8x128xf32>, vector<128x512xf32>, vector<8x512xf32> -> vector<8x512xf32>
    %220 = arith.addf %218, %219 : vector<8x512xf32>
    %221 = vector.extract_strided_slice %220 {offsets = [0, 0], sizes = [8, 128], strides = [1, 1]} : vector<8x512xf32> to vector<8x128xf32>
    %222 = arith.negf %221 : vector<8x128xf32>
    %223 = math.exp %222 : vector<8x128xf32>
    %cst_42 = arith.constant 1.000000e+00 : f32
    %224 = vector.broadcast %cst_42 : f32 to vector<8x128xf32>
    %225 = arith.addf %224, %223 : vector<8x128xf32>
    %226 = arith.divf %224, %225 : vector<8x128xf32>
    %227 = vector.extract_strided_slice %220 {offsets = [0, 128], sizes = [8, 128], strides = [1, 1]} : vector<8x512xf32> to vector<8x128xf32>
    %228 = arith.negf %227 : vector<8x128xf32>
    %229 = math.exp %228 : vector<8x128xf32>
    %cst_43 = arith.constant 1.000000e+00 : f32
    %230 = vector.broadcast %cst_43 : f32 to vector<8x128xf32>
    %231 = arith.addf %230, %229 : vector<8x128xf32>
    %232 = arith.divf %230, %231 : vector<8x128xf32>
    %233 = vector.extract_strided_slice %220 {offsets = [0, 256], sizes = [8, 128], strides = [1, 1]} : vector<8x512xf32> to vector<8x128xf32>
    %234 = math.tanh %233 : vector<8x128xf32>
    %235 = vector.extract_strided_slice %220 {offsets = [0, 384], sizes = [8, 128], strides = [1, 1]} : vector<8x512xf32> to vector<8x128xf32>
    %236 = arith.negf %235 : vector<8x128xf32>
    %237 = math.exp %236 : vector<8x128xf32>
    %cst_44 = arith.constant 1.000000e+00 : f32
    %238 = vector.broadcast %cst_44 : f32 to vector<8x128xf32>
    %239 = arith.addf %238, %237 : vector<8x128xf32>
    %240 = arith.divf %238, %239 : vector<8x128xf32>
    %241 = arith.mulf %232, %214 : vector<8x128xf32>
    %242 = arith.mulf %226, %234 : vector<8x128xf32>
    %243 = arith.addf %241, %242 : vector<8x128xf32>
    %244 = math.tanh %243 : vector<8x128xf32>
    %245 = arith.mulf %240, %244 : vector<8x128xf32>
    %c0_45 = arith.constant 0 : index
    %c0_46 = arith.constant 0 : index
    %246 = vector.load %arg9[%c0_45, %c0_46] : memref<8x128xf32, #tpu.memory_space<vmem>>, vector<8x128xf32>
    tpu.vector_store %arg9[%c0_45, %c0_46], %245 {strides = array<i32>} : memref<8x128xf32, #tpu.memory_space<vmem>>, vector<8x128xf32>,
    %c0_47 = arith.constant 0 : index
    %c0_48 = arith.constant 0 : index
    %247 = vector.load %arg10[%c0_47, %c0_48] : memref<8x128xf32, #tpu.memory_space<vmem>>, vector<8x128xf32>
    tpu.vector_store %arg10[%c0_47, %c0_48], %243 {strides = array<i32>} : memref<8x128xf32, #tpu.memory_space<vmem>>, vector<8x128xf32>,
    %c0_i32_49 = arith.constant 0 : i32
    %248 = arith.cmpi eq, %arg1, %c0_i32_49 : i32
    %249 = arith.extui %248 : i1 to i32
    %c0_i32_50 = arith.constant 0 : i32
    %250 = arith.cmpi ne, %249, %c0_i32_50 : i32
    scf.if %250 {
      %c0_51 = arith.constant 0 : index
      %c0_52 = arith.constant 0 : index
      %251 = vector.load %arg6[%c0_51, %c0_52] : memref<128x128xf32, #tpu.memory_space<vmem>>, vector<128x128xf32>
      %cst_53 = arith.constant dense<0.000000e+00> : vector<8x128xf32>
      %252 = tpu.matmul %245, %251, %cst_53 {dimension_numbers = #tpu.dot_dimension_numbers<[1], [0], [0], [1], [0, 0, 1, 1], [], []>} : vector<8x128xf32>, vector<128x128xf32>, vector<8x128xf32> -> vector<8x128xf32>
      %c0_54 = arith.constant 0 : index
      %c0_55 = arith.constant 0 : index
      %253 = vector.load %arg7[%c0_54, %c0_55] : memref<1x128xf32, #tpu.memory_space<vmem>>, vector<1x128xf32>
      %254 = vector.broadcast %253 : vector<1x128xf32> to vector<8x128xf32>
      %255 = arith.addf %252, %254 : vector<8x128xf32>
      %c0_56 = arith.constant 0 : index
      %c0_57 = arith.constant 0 : index
      %256 = vector.load %arg8[%c0_56, %c0_57] : memref<8x128xf32, #tpu.memory_space<vmem>>, vector<8x128xf32>
      tpu.vector_store %arg8[%c0_56, %c0_57], %255 {strides = array<i32>} : memref<8x128xf32, #tpu.memory_space<vmem>>, vector<8x128xf32>,
    } else {
    }
    return
  }
  func.func @transform_0(%arg0: i32, %arg1: i32) -> (i32, i32, i32) {
    %c0_i32 = arith.constant 0 : i32
    %c0_i32_0 = arith.constant 0 : i32
    return %arg0, %arg1, %c0_i32 : i32, i32, i32
  }
  func.func @transform_1(%arg0: i32, %arg1: i32) -> (i32, i32) {
    %c0_i32 = arith.constant 0 : i32
    %c0_i32_0 = arith.constant 0 : i32
    %c0_i32_1 = arith.constant 0 : i32
    return %c0_i32, %c0_i32_0 : i32, i32
  }
  func.func @transform_2(%arg0: i32, %arg1: i32) -> (i32, i32) {
    %c0_i32 = arith.constant 0 : i32
    %c0_i32_0 = arith.constant 0 : i32
    %c0_i32_1 = arith.constant 0 : i32
    return %c0_i32, %c0_i32_0 : i32, i32
  }
  func.func @transform_3(%arg0: i32, %arg1: i32) -> (i32, i32) {
    %c0_i32 = arith.constant 0 : i32
    %c0_i32_0 = arith.constant 0 : i32
    %c0_i32_1 = arith.constant 0 : i32
    return %c0_i32, %c0_i32_0 : i32, i32
  }
  func.func @transform_4(%arg0: i32, %arg1: i32) -> (i32, i32) {
    %c0_i32 = arith.constant 0 : i32
    %c0_i32_0 = arith.constant 0 : i32
    %c0_i32_1 = arith.constant 0 : i32
    return %c0_i32, %c0_i32_0 : i32, i32
  }
  func.func @transform_5(%arg0: i32, %arg1: i32) -> (i32, i32) {
    %c0_i32 = arith.constant 0 : i32
    %c0_i32_0 = arith.constant 0 : i32
    %c0_i32_1 = arith.constant 0 : i32
    return %c0_i32, %c0_i32_0 : i32, i32
  }
  func.func @transform_6(%arg0: i32, %arg1: i32) -> (i32, i32) {
    %c0_i32 = arith.constant 0 : i32
    %c0_i32_0 = arith.constant 0 : i32
    return %arg0, %c0_i32 : i32, i32
  }
}

</mosaic_0001>

<llo_original>
// kernel: tpu_custom_call.1
$region0: #{tpu_custom_call.1}
  #allocation0 [shape = 'u32[]', space=smem, size = 0x4, offset = 0x4, fixed_abs, tag = 'smem constant byte address 0x4 - core index']
  #allocation1 [shape = 'u32[72,128]{1,0:T(1,128)}', space=vmem, size = 0x9000, scoped, tag = 'internal scratch']
  #allocation2 [shape = 'f32[8,128]{1,0:T(8,128)}', space=vmem, size = 0x1000, scoped, tag = 'scratch operand']
  #allocation3 [shape = 'f32[8,128]{1,0:T(8,128)}', space=vmem, size = 0x1000, scoped, tag = 'scratch operand']
  %s0 = inlined_call_operand.hbm [shape: f32[8,8,32], index: 0, kind: input, shape index: {}]
  %s1 = inlined_call_operand.hbm [shape: f32[32,512], index: 1, kind: input, shape index: {}]
  %s2 = inlined_call_operand.hbm [shape: f32[128,512], index: 2, kind: input, shape index: {}]
  %s3 = inlined_call_operand.hbm [shape: f32[1,512], index: 3, kind: input, shape index: {}]
  %s4 = inlined_call_operand.hbm [shape: f32[128,128], index: 4, kind: input, shape index: {}]
  %s5 = inlined_call_operand.vmem [shape: f32[1,128], index: 5, kind: input, shape index: {}]
  %s6 = inlined_call_operand.hbm [shape: f32[8,128], index: 6, kind: output, shape index: {}]
  %s7 = sld [smem:[#allocation0]]
  $region62: #{tpu_custom_call.1} parent=0
    _
  %s9 = ssub.s32 1, %s7
  %s10 = scalar_select 0, %s9, %s7
  $region1: #{tpu_custom_call.1} parent=0
    #allocation4 [shape = 'u8[32768]{0}', space=vmem, size = 0x8000, scoped, tag = 'input window, operand 0, single buffered']
    #allocation5 [shape = 's32[1]{0}', space=sflag, size = 0x4, scoped, tag = 'scoped memory for tpu_custom_call.1']
    #allocation6 [shape = 's32[1]{0}', space=sflag, size = 0x4, scoped, tag = 'scoped memory for tpu_custom_call.1']
    #allocation7 [shape = 'u8[65536]{0}', space=vmem, size = 0x10000, scoped, tag = 'input window, operand 1, single buffered']
    #allocation8 [shape = 's32[1]{0}', space=sflag, size = 0x4, scoped, tag = 'scoped memory for tpu_custom_call.1']
    #allocation9 [shape = 'u8[262144]{0}', space=vmem, size = 0x40000, scoped, tag = 'input window, operand 2, single buffered']
    #allocation10 [shape = 'u8[2048]{0}', space=vmem, size = 0x800, scoped, tag = 'input window, operand 3, single buffered']
    #allocation11 [shape = 's32[1]{0}', space=sflag, size = 0x4, scoped, tag = 'scoped memory for tpu_custom_call.1']
    #allocation12 [shape = 'u8[65536]{0}', space=vmem, size = 0x10000, scoped, tag = 'input window, operand 4, single buffered']
    #allocation13 [shape = 'u8[4096]{0}', space=vmem, size = 0x1000, scoped, tag = 'output window, operand 0, single buffered']
    %11 = vsyncpa [#allocation5], 0
    %12 = vsyncpa [#allocation8], 0
    %13 = vsyncpa [#allocation11], 0
    %14 = vsyncpa [#allocation6], 0
    // Predicated region
    $region2: #{tpu_custom_call.1} parent=1 // pred_check
      _
    $region3: #{tpu_custom_call.1} parent=1 // pred_check_branch
      %16 = sbr.rel (0) target = $region5
    $region4: #{tpu_custom_call.1} parent=1 // pred_region
      %18 = vsyncadd [#allocation5], 0
      %s19 = sshll.u32 %s0, 4
      %s20 = int_to_ptr.hbm [resolvable:$true] %s19
      %s21 = sshll.u32 [#allocation4], 4
      %s22 = int_to_ptr.vmem [resolvable:$true] %s21
      %27 = dma.hbm_to_vmem [thread:$0]  %s20, 1024, %s22, [#allocation5], 128, 128, 8
    $region5: #{tpu_custom_call.1} parent=1 // pred_fallthru
      _
    // Predicated region
    $region6: #{tpu_custom_call.1} parent=1 // pred_check
      _
    $region7: #{tpu_custom_call.1} parent=1 // pred_check_branch
      %29 = sbr.rel (0) target = $region9
    $region8: #{tpu_custom_call.1} parent=1 // pred_region
      %31 = vsyncadd [#allocation8], 0
      %s32 = sshll.u32 %s1, 4
      %s33 = int_to_ptr.hbm [resolvable:$true] %s32
      %s34 = sshll.u32 [#allocation7], 4
      %s35 = int_to_ptr.vmem [resolvable:$true] %s34
      %40 = dma.hbm_to_vmem [thread:$0]  %s33, 2048, %s35, [#allocation8], 512, 512, 32
    $region9: #{tpu_custom_call.1} parent=1 // pred_fallthru
      _
    // Predicated region
    $region10: #{tpu_custom_call.1} parent=1 // pred_check
      _
    $region11: #{tpu_custom_call.1} parent=1 // pred_check_branch
      %42 = sbr.rel (0) target = $region13
    $region12: #{tpu_custom_call.1} parent=1 // pred_region
      %44 = vsyncadd [#allocation8], 0
      %s45 = sshll.u32 %s2, 4
      %s46 = int_to_ptr.hbm [resolvable:$true] %s45
      %s47 = sshll.u32 [#allocation9], 4
      %s48 = int_to_ptr.vmem [resolvable:$true] %s47
      %53 = dma.hbm_to_vmem [thread:$0]  %s46, 8192, %s48, [#allocation8], 512, 512, 32
    $region13: #{tpu_custom_call.1} parent=1 // pred_fallthru
      _
    // Predicated region
    $region14: #{tpu_custom_call.1} parent=1 // pred_check
      _
    $region15: #{tpu_custom_call.1} parent=1 // pred_check_branch
      %55 = sbr.rel (0) target = $region17
    $region16: #{tpu_custom_call.1} parent=1 // pred_region
      %57 = vsyncadd [#allocation11], 0
      %s59 = sshll.u32 %s3, 4
      %s60 = int_to_ptr.hbm [resolvable:$true] %s59
      %s61 = sshll.u32 [#allocation10], 4
      %s62 = int_to_ptr.vmem [resolvable:$true] %s61
      %64 = dma.hbm_to_vmem [thread:$0]  %s60, 64, %s62, [#allocation11]
    $region17: #{tpu_custom_call.1} parent=1 // pred_fallthru
      _
    // Predicated region
    $region18: #{tpu_custom_call.1} parent=1 // pred_check
      _
    $region19: #{tpu_custom_call.1} parent=1 // pred_check_branch
      %66 = sbr.rel (0) target = $region21
    $region20: #{tpu_custom_call.1} parent=1 // pred_region
      %68 = vsyncadd [#allocation11], 0
      %s69 = sshll.u32 %s4, 4
      %s70 = int_to_ptr.hbm [resolvable:$true] %s69
      %s71 = sshll.u32 [#allocation12], 4
      %s72 = int_to_ptr.vmem [resolvable:$true] %s71
      %77 = dma.hbm_to_vmem [thread:$0]  %s70, 2048, %s72, [#allocation11], 128, 128, 8
    $region21: #{tpu_custom_call.1} parent=1 // pred_fallthru
      _
    // Predicated region
    $region22: #{tpu_custom_call.1} parent=1 // pred_check
      _
    $region23: #{tpu_custom_call.1} parent=1 // pred_check_branch
      %79 = sbr.rel (0) target = $region25
    $region24: #{tpu_custom_call.1} parent=1 // pred_region
      _
    $region25: #{tpu_custom_call.1} parent=1 // pred_fallthru
      _
    // Predicated region
    $region26: #{tpu_custom_call.1} parent=1 // pred_check
      _
    $region27: #{tpu_custom_call.1} parent=1 // pred_check_branch
      %81 = sbr.rel (0) target = $region29
    $region28: #{tpu_custom_call.1} parent=1 // pred_region
      %83 = dma.done [#allocation5], 1024
    $region29: #{tpu_custom_call.1} parent=1 // pred_fallthru
      _
    // Predicated region
    $region30: #{tpu_custom_call.1} parent=1 // pred_check
      _
    $region31: #{tpu_custom_call.1} parent=1 // pred_check_branch
      %85 = sbr.rel (0) target = $region33
    $region32: #{tpu_custom_call.1} parent=1 // pred_region
      %87 = dma.done [#allocation8], 2048
    $region33: #{tpu_custom_call.1} parent=1 // pred_fallthru
      _
    // Predicated region
    $region34: #{tpu_custom_call.1} parent=1 // pred_check
      _
    $region35: #{tpu_custom_call.1} parent=1 // pred_check_branch
      %89 = sbr.rel (0) target = $region37
    $region36: #{tpu_custom_call.1} parent=1 // pred_region
      %91 = dma.done [#allocation8], 8192
    $region37: #{tpu_custom_call.1} parent=1 // pred_fallthru
      _
    // Predicated region
    $region38: #{tpu_custom_call.1} parent=1 // pred_check
      _
    $region39: #{tpu_custom_call.1} parent=1 // pred_check_branch
      %93 = sbr.rel (0) target = $region41
    $region40: #{tpu_custom_call.1} parent=1 // pred_region
      %95 = dma.done [#allocation11], 64
    $region41: #{tpu_custom_call.1} parent=1 // pred_fallthru
      _
    // Predicated region
    $region42: #{tpu_custom_call.1} parent=1 // pred_check
      _
    $region43: #{tpu_custom_call.1} parent=1 // pred_check_branch
      %97 = sbr.rel (0) target = $region45
    $region44: #{tpu_custom_call.1} parent=1 // pred_region
      %99 = dma.done [#allocation11], 2048
    $region45: #{tpu_custom_call.1} parent=1 // pred_fallthru
      _
    %p100 = scmp.eq.s32.totalorder 0, 0
    // Predicated region
    $region46: #{tpu_custom_call.1} parent=1 // pred_check
      %p101 = pneg %p100
    $region47: #{tpu_custom_call.1} parent=1 // pred_check_branch
      %103 = sbr.rel (%p101) target = $region49
    $region48: #{tpu_custom_call.1} parent=1 // pred_region
      %104 = vst [vmem:[#allocation2] sm:$0xff] 0.0
      %105 = vst [vmem:[#allocation3] sm:$0xff] 0.0
    $region49: #{tpu_custom_call.1} parent=1 // pred_fallthru
      _
    %v106 = vld [vmem:[#allocation4] sm:$0xff]
    %v107 = vld [vmem:[#allocation4 + $0x8] sm:$0xff]
    %v108 = vld [vmem:[#allocation4 + $0x10] sm:$0xff]
    %v109 = vld [vmem:[#allocation4 + $0x18] sm:$0xff]
    %v110 = vld [vmem:[#allocation4 + $0x20] sm:$0xff]
    %v111 = vld [vmem:[#allocation4 + $0x28] sm:$0xff]
    %v112 = vld [vmem:[#allocation4 + $0x30] sm:$0xff]
    %v113 = vld [vmem:[#allocation4 + $0x38] sm:$0xff]
    %v114 = vld [vmem:[#allocation7] sm:$0xff]
    %v115 = vld [vmem:[#allocation7 + $0x8] sm:$0xff]
    %v116 = vld [vmem:[#allocation7 + $0x10] sm:$0xff]
    %v117 = vld [vmem:[#allocation7 + $0x18] sm:$0xff]
    %v118 = vld [vmem:[#allocation7 + $0x20] sm:$0xff]
    %v119 = vld [vmem:[#allocation7 + $0x28] sm:$0xff]
    %v120 = vld [vmem:[#allocation7 + $0x30] sm:$0xff]
    %v121 = vld [vmem:[#allocation7 + $0x38] sm:$0xff]
    %v122 = vld [vmem:[#allocation7 + $0x40] sm:$0xff]
    %v123 = vld [vmem:[#allocation7 + $0x48] sm:$0xff]
    %v124 = vld [vmem:[#allocation7 + $0x50] sm:$0xff]
    %v125 = vld [vmem:[#allocation7 + $0x58] sm:$0xff]
    %v126 = vld [vmem:[#allocation7 + $0x60] sm:$0xff]
    %v127 = vld [vmem:[#allocation7 + $0x68] sm:$0xff]
    %v128 = vld [vmem:[#allocation7 + $0x70] sm:$0xff]
    %v129 = vld [vmem:[#allocation7 + $0x78] sm:$0xff]
    %v130 = vld [vmem:[#allocation10] sm:$0xf]
    %v132 = vperm.slane %v130, 0
    %v133 = vperm.slane %v130, 1
    %v134 = vperm.slane %v130, 2
    %v135 = vperm.slane %v130, 3
    %vm140 = vcmask 261120
    %v142 = vsel %vm140, %v106, 0
    %v145 = vsel %vm140, %v107, 0
    %v148 = vsel %vm140, %v108, 0
    %v151 = vsel %vm140, %v109, 0
    %v154 = vsel %vm140, %v110, 0
    %v157 = vsel %vm140, %v111, 0
    %v160 = vsel %vm140, %v112, 0
    %v163 = vsel %vm140, %v113, 0
    %165 = vmatpush.msra.mxu0 0.0
    %166 = vmatpush.msra.mxu0 0.0
    %167 = vmatpush.msra.mxu0 0.0
    %168 = vmatpush.msra.mxu0 0.0
    %169 = vmatpush.msra.mxu0 0.0
    %170 = vmatpush.msra.mxu0 0.0
    %171 = vmatpush.msra.mxu0 0.0
    %172 = vmatpush.msra.mxu0 0.0
    %173 = vmatpush.msra.mxu0 0.0
    %174 = vmatpush.msra.mxu0 0.0
    %175 = vmatpush.msra.mxu0 0.0
    %176 = vmatpush.msra.mxu0 0.0
    %177 = vmatpush.msra.mxu0 %v126
    %178 = vmatpush.msra.mxu0 %v122
    %179 = vmatpush.msra.mxu0 %v118
    %180 = vmatpush.msra.mxu0 %v114
    %181 = vmatmul.f32.gmra.mxu0 %v142
    %v182 = vpop.f32.mrf.mxu0
    %v183 = vadd.f32 %v132, %v182
    %184 = vmatmul.f32.gmra.mxu0 %v145
    %v185 = vpop.f32.mrf.mxu0
    %v186 = vadd.f32 %v132, %v185
    %187 = vmatmul.f32.gmra.mxu0 %v148
    %v188 = vpop.f32.mrf.mxu0
    %v189 = vadd.f32 %v132, %v188
    %190 = vmatmul.f32.gmra.mxu0 %v151
    %v191 = vpop.f32.mrf.mxu0
    %v192 = vadd.f32 %v132, %v191
    %193 = vmatmul.f32.gmra.mxu0 %v154
    %v194 = vpop.f32.mrf.mxu0
    %v195 = vadd.f32 %v132, %v194
    %196 = vmatmul.f32.gmra.mxu0 %v157
    %v197 = vpop.f32.mrf.mxu0
    %v198 = vadd.f32 %v132, %v197
    %199 = vmatmul.f32.gmra.mxu0 %v160
    %v200 = vpop.f32.mrf.mxu0
    %v201 = vadd.f32 %v132, %v200
    %202 = vmatmul.f32.gmra.mxu0 %v163
    %v203 = vpop.f32.mrf.mxu0
    %v204 = vadd.f32 %v132, %v203
    %205 = vdwg.mxu0
    %206 = vmatpush.msra.mxu0 0.0
    %207 = vmatpush.msra.mxu0 0.0
    %208 = vmatpush.msra.mxu0 0.0
    %209 = vmatpush.msra.mxu0 0.0
    %210 = vmatpush.msra.mxu0 0.0
    %211 = vmatpush.msra.mxu0 0.0
    %212 = vmatpush.msra.mxu0 0.0
    %213 = vmatpush.msra.mxu0 0.0
    %214 = vmatpush.msra.mxu0 0.0
    %215 = vmatpush.msra.mxu0 0.0
    %216 = vmatpush.msra.mxu0 0.0
    %217 = vmatpush.msra.mxu0 0.0
    %218 = vmatpush.msra.mxu0 %v127
    %219 = vmatpush.msra.mxu0 %v123
    %220 = vmatpush.msra.mxu0 %v119
    %221 = vmatpush.msra.mxu0 %v115
    %222 = vmatmul.f32.gmra.mxu0 %v142
    %v223 = vpop.f32.mrf.mxu0
    %v224 = vadd.f32 %v133, %v223
    %225 = vmatmul.f32.gmra.mxu0 %v145
    %v226 = vpop.f32.mrf.mxu0
    %v227 = vadd.f32 %v133, %v226
    %228 = vmatmul.f32.gmra.mxu0 %v148
    %v229 = vpop.f32.mrf.mxu0
    %v230 = vadd.f32 %v133, %v229
    %231 = vmatmul.f32.gmra.mxu0 %v151
    %v232 = vpop.f32.mrf.mxu0
    %v233 = vadd.f32 %v133, %v232
    %234 = vmatmul.f32.gmra.mxu0 %v154
    %v235 = vpop.f32.mrf.mxu0
    %v236 = vadd.f32 %v133, %v235
    %237 = vmatmul.f32.gmra.mxu0 %v157
    %v238 = vpop.f32.mrf.mxu0
    %v239 = vadd.f32 %v133, %v238
    %240 = vmatmul.f32.gmra.mxu0 %v160
    %v241 = vpop.f32.mrf.mxu0
    %v242 = vadd.f32 %v133, %v241
    %243 = vmatmul.f32.gmra.mxu0 %v163
    %v244 = vpop.f32.mrf.mxu0
    %v245 = vadd.f32 %v133, %v244
    %246 = vdwg.mxu0
    %247 = vmatpush.msra.mxu0 0.0
    %248 = vmatpush.msra.mxu0 0.0
    %249 = vmatpush.msra.mxu0 0.0
    %250 = vmatpush.msra.mxu0 0.0
    %251 = vmatpush.msra.mxu0 0.0
    %252 = vmatpush.msra.mxu0 0.0
    %253 = vmatpush.msra.mxu0 0.0
    %254 = vmatpush.msra.mxu0 0.0
    %255 = vmatpush.msra.mxu0 0.0
    %256 = vmatpush.msra.mxu0 0.0
    %257 = vmatpush.msra.mxu0 0.0
    %258 = vmatpush.msra.mxu0 0.0
    %259 = vmatpush.msra.mxu0 %v128
    %260 = vmatpush.msra.mxu0 %v124
    %261 = vmatpush.msra.mxu0 %v120
    %262 = vmatpush.msra.mxu0 %v116
    %263 = vmatmul.f32.gmra.mxu0 %v142
    %v264 = vpop.f32.mrf.mxu0
    %v265 = vadd.f32 %v134, %v264
    %266 = vmatmul.f32.gmra.mxu0 %v145
    %v267 = vpop.f32.mrf.mxu0
    %v268 = vadd.f32 %v134, %v267
    %269 = vmatmul.f32.gmra.mxu0 %v148
    %v270 = vpop.f32.mrf.mxu0
    %v271 = vadd.f32 %v134, %v270
    %272 = vmatmul.f32.gmra.mxu0 %v151
    %v273 = vpop.f32.mrf.mxu0
    %v274 = vadd.f32 %v134, %v273
    %275 = vmatmul.f32.gmra.mxu0 %v154
    %v276 = vpop.f32.mrf.mxu0
    %v277 = vadd.f32 %v134, %v276
    %278 = vmatmul.f32.gmra.mxu0 %v157
    %v279 = vpop.f32.mrf.mxu0
    %v280 = vadd.f32 %v134, %v279
    %281 = vmatmul.f32.gmra.mxu0 %v160
    %v282 = vpop.f32.mrf.mxu0
    %v283 = vadd.f32 %v134, %v282
    %284 = vmatmul.f32.gmra.mxu0 %v163
    %v285 = vpop.f32.mrf.mxu0
    %v286 = vadd.f32 %v134, %v285
    %287 = vdwg.mxu0
    %288 = vmatpush.msra.mxu0 0.0
    %289 = vmatpush.msra.mxu0 0.0
    %290 = vmatpush.msra.mxu0 0.0
    %291 = vmatpush.msra.mxu0 0.0
    %292 = vmatpush.msra.mxu0 0.0
    %293 = vmatpush.msra.mxu0 0.0
    %294 = vmatpush.msra.mxu0 0.0
    %295 = vmatpush.msra.mxu0 0.0
    %296 = vmatpush.msra.mxu0 0.0
    %297 = vmatpush.msra.mxu0 0.0
    %298 = vmatpush.msra.mxu0 0.0
    %299 = vmatpush.msra.mxu0 0.0
    %300 = vmatpush.msra.mxu0 %v129
    %301 = vmatpush.msra.mxu0 %v125
    %302 = vmatpush.msra.mxu0 %v121
    %303 = vmatpush.msra.mxu0 %v117
    %304 = vmatmul.f32.gmra.mxu0 %v142
    %v305 = vpop.f32.mrf.mxu0
    %v306 = vadd.f32 %v135, %v305
    %307 = vmatmul.f32.gmra.mxu0 %v145
    %v308 = vpop.f32.mrf.mxu0
    %v309 = vadd.f32 %v135, %v308
    %310 = vmatmul.f32.gmra.mxu0 %v148
    %v311 = vpop.f32.mrf.mxu0
    %v312 = vadd.f32 %v135, %v311
    %313 = vmatmul.f32.gmra.mxu0 %v151
    %v314 = vpop.f32.mrf.mxu0
    %v315 = vadd.f32 %v135, %v314
    %316 = vmatmul.f32.gmra.mxu0 %v154
    %v317 = vpop.f32.mrf.mxu0
    %v318 = vadd.f32 %v135, %v317
    %319 = vmatmul.f32.gmra.mxu0 %v157
    %v320 = vpop.f32.mrf.mxu0
    %v321 = vadd.f32 %v135, %v320
    %322 = vmatmul.f32.gmra.mxu0 %v160
    %v323 = vpop.f32.mrf.mxu0
    %v324 = vadd.f32 %v135, %v323
    %325 = vmatmul.f32.gmra.mxu0 %v163
    %v326 = vpop.f32.mrf.mxu0
    %v327 = vadd.f32 %v135, %v326
    %328 = vdwg.mxu0
    %v329 = vld [vmem:[#allocation9] sm:$0xff]
    %v330 = vld [vmem:[#allocation9 + $0x8] sm:$0xff]
    %v331 = vld [vmem:[#allocation9 + $0x10] sm:$0xff]
    %v332 = vld [vmem:[#allocation9 + $0x18] sm:$0xff]
    %v333 = vld [vmem:[#allocation9 + $0x20] sm:$0xff]
    %v334 = vld [vmem:[#allocation9 + $0x28] sm:$0xff]
    %v335 = vld [vmem:[#allocation9 + $0x30] sm:$0xff]
    %v336 = vld [vmem:[#allocation9 + $0x38] sm:$0xff]
    %v337 = vld [vmem:[#allocation9 + $0x40] sm:$0xff]
    %v338 = vld [vmem:[#allocation9 + $0x48] sm:$0xff]
    %v339 = vld [vmem:[#allocation9 + $0x50] sm:$0xff]
    %v340 = vld [vmem:[#allocation9 + $0x58] sm:$0xff]
    %v341 = vld [vmem:[#allocation9 + $0x60] sm:$0xff]
    %v342 = vld [vmem:[#allocation9 + $0x68] sm:$0xff]
    %v343 = vld [vmem:[#allocation9 + $0x70] sm:$0xff]
    %v344 = vld [vmem:[#allocation9 + $0x78] sm:$0xff]
    %v345 = vld [vmem:[#allocation9 + $0x80] sm:$0xff]
    %v346 = vld [vmem:[#allocation9 + $0x88] sm:$0xff]
    %v347 = vld [vmem:[#allocation9 + $0x90] sm:$0xff]
    %v348 = vld [vmem:[#allocation9 + $0x98] sm:$0xff]
    %v349 = vld [vmem:[#allocation9 + $0xa0] sm:$0xff]
    %v350 = vld [vmem:[#allocation9 + $0xa8] sm:$0xff]
    %v351 = vld [vmem:[#allocation9 + $0xb0] sm:$0xff]
    %v352 = vld [vmem:[#allocation9 + $0xb8] sm:$0xff]
    %v353 = vld [vmem:[#allocation9 + $0xc0] sm:$0xff]
    %v354 = vld [vmem:[#allocation9 + $0xc8] sm:$0xff]
    %v355 = vld [vmem:[#allocation9 + $0xd0] sm:$0xff]
    %v356 = vld [vmem:[#allocation9 + $0xd8] sm:$0xff]
    %v357 = vld [vmem:[#allocation9 + $0xe0] sm:$0xff]
    %v358 = vld [vmem:[#allocation9 + $0xe8] sm:$0xff]
    %v359 = vld [vmem:[#allocation9 + $0xf0] sm:$0xff]
    %v360 = vld [vmem:[#allocation9 + $0xf8] sm:$0xff]
    %v361 = vld [vmem:[#allocation9 + $0x100] sm:$0xff]
    %v362 = vld [vmem:[#allocation9 + $0x108] sm:$0xff]
    %v363 = vld [vmem:[#allocation9 + $0x110] sm:$0xff]
    %v364 = vld [vmem:[#allocation9 + $0x118] sm:$0xff]
    %v365 = vld [vmem:[#allocation9 + $0x120] sm:$0xff]
    %v366 = vld [vmem:[#allocation9 + $0x128] sm:$0xff]
    %v367 = vld [vmem:[#allocation9 + $0x130] sm:$0xff]
    %v368 = vld [vmem:[#allocation9 + $0x138] sm:$0xff]
    %v369 = vld [vmem:[#allocation9 + $0x140] sm:$0xff]
    %v370 = vld [vmem:[#allocation9 + $0x148] sm:$0xff]
    %v371 = vld [vmem:[#allocation9 + $0x150] sm:$0xff]
    %v372 = vld [vmem:[#allocation9 + $0x158] sm:$0xff]
    %v373 = vld [vmem:[#allocation9 + $0x160] sm:$0xff]
    %v374 = vld [vmem:[#allocation9 + $0x168] sm:$0xff]
    %v375 = vld [vmem:[#allocation9 + $0x170] sm:$0xff]
    %v376 = vld [vmem:[#allocation9 + $0x178] sm:$0xff]
    %v377 = vld [vmem:[#allocation9 + $0x180] sm:$0xff]
    %v378 = vld [vmem:[#allocation9 + $0x188] sm:$0xff]
    %v379 = vld [vmem:[#allocation9 + $0x190] sm:$0xff]
    %v380 = vld [vmem:[#allocation9 + $0x198] sm:$0xff]
    %v381 = vld [vmem:[#allocation9 + $0x1a0] sm:$0xff]
    %v382 = vld [vmem:[#allocation9 + $0x1a8] sm:$0xff]
    %v383 = vld [vmem:[#allocation9 + $0x1b0] sm:$0xff]
    %v384 = vld [vmem:[#allocation9 + $0x1b8] sm:$0xff]
    %v385 = vld [vmem:[#allocation9 + $0x1c0] sm:$0xff]
    %v386 = vld [vmem:[#allocation9 + $0x1c8] sm:$0xff]
    %v387 = vld [vmem:[#allocation9 + $0x1d0] sm:$0xff]
    %v388 = vld [vmem:[#allocation9 + $0x1d8] sm:$0xff]
    %v389 = vld [vmem:[#allocation9 + $0x1e0] sm:$0xff]
    %v390 = vld [vmem:[#allocation9 + $0x1e8] sm:$0xff]
    %v391 = vld [vmem:[#allocation9 + $0x1f0] sm:$0xff]
    %v392 = vld [vmem:[#allocation9 + $0x1f8] sm:$0xff]
    %v393 = vld [vmem:[#allocation2] sm:$0xff]
    %v394 = vld [vmem:[#allocation3] sm:$0xff]
    %395 = vmatpush.msra.mxu0 %v389
    %396 = vmatpush.msra.mxu0 %v385
    %397 = vmatpush.msra.mxu0 %v381
    %398 = vmatpush.msra.mxu0 %v377
    %399 = vmatpush.msra.mxu0 %v373
    %400 = vmatpush.msra.mxu0 %v369
    %401 = vmatpush.msra.mxu0 %v365
    %402 = vmatpush.msra.mxu0 %v361
    %403 = vmatpush.msra.mxu0 %v357
    %404 = vmatpush.msra.mxu0 %v353
    %405 = vmatpush.msra.mxu0 %v349
    %406 = vmatpush.msra.mxu0 %v345
    %407 = vmatpush.msra.mxu0 %v341
    %408 = vmatpush.msra.mxu0 %v337
    %409 = vmatpush.msra.mxu0 %v333
    %410 = vmatpush.msra.mxu0 %v329
    %411 = vmatmul.f32.gmra.mxu0 %v393
    %v412 = vpop.f32.mrf.mxu0
    %v413 = vadd.f32 0.0, %v412
    %414 = vdwg.mxu0
    %415 = vmatpush.msra.mxu0 %v390
    %416 = vmatpush.msra.mxu0 %v386
    %417 = vmatpush.msra.mxu0 %v382
    %418 = vmatpush.msra.mxu0 %v378
    %419 = vmatpush.msra.mxu0 %v374
    %420 = vmatpush.msra.mxu0 %v370
    %421 = vmatpush.msra.mxu0 %v366
    %422 = vmatpush.msra.mxu0 %v362
    %423 = vmatpush.msra.mxu0 %v358
    %424 = vmatpush.msra.mxu0 %v354
    %425 = vmatpush.msra.mxu0 %v350
    %426 = vmatpush.msra.mxu0 %v346
    %427 = vmatpush.msra.mxu0 %v342
    %428 = vmatpush.msra.mxu0 %v338
    %429 = vmatpush.msra.mxu0 %v334
    %430 = vmatpush.msra.mxu0 %v330
    %431 = vmatmul.f32.gmra.mxu0 %v393
    %v432 = vpop.f32.mrf.mxu0
    %v433 = vadd.f32 0.0, %v432
    %434 = vdwg.mxu0
    %435 = vmatpush.msra.mxu0 %v391
    %436 = vmatpush.msra.mxu0 %v387
    %437 = vmatpush.msra.mxu0 %v383
    %438 = vmatpush.msra.mxu0 %v379
    %439 = vmatpush.msra.mxu0 %v375
    %440 = vmatpush.msra.mxu0 %v371
    %441 = vmatpush.msra.mxu0 %v367
    %442 = vmatpush.msra.mxu0 %v363
    %443 = vmatpush.msra.mxu0 %v359
    %444 = vmatpush.msra.mxu0 %v355
    %445 = vmatpush.msra.mxu0 %v351
    %446 = vmatpush.msra.mxu0 %v347
    %447 = vmatpush.msra.mxu0 %v343
    %448 = vmatpush.msra.mxu0 %v339
    %449 = vmatpush.msra.mxu0 %v335
    %450 = vmatpush.msra.mxu0 %v331
    %451 = vmatmul.f32.gmra.mxu0 %v393
    %v452 = vpop.f32.mrf.mxu0
    %v453 = vadd.f32 0.0, %v452
    %454 = vdwg.mxu0
    %455 = vmatpush.msra.mxu0 %v392
    %456 = vmatpush.msra.mxu0 %v388
    %457 = vmatpush.msra.mxu0 %v384
    %458 = vmatpush.msra.mxu0 %v380
    %459 = vmatpush.msra.mxu0 %v376
    %460 = vmatpush.msra.mxu0 %v372
    %461 = vmatpush.msra.mxu0 %v368
    %462 = vmatpush.msra.mxu0 %v364
    %463 = vmatpush.msra.mxu0 %v360
    %464 = vmatpush.msra.mxu0 %v356
    %465 = vmatpush.msra.mxu0 %v352
    %466 = vmatpush.msra.mxu0 %v348
    %467 = vmatpush.msra.mxu0 %v344
    %468 = vmatpush.msra.mxu0 %v340
    %469 = vmatpush.msra.mxu0 %v336
    %470 = vmatpush.msra.mxu0 %v332
    %471 = vmatmul.f32.gmra.mxu0 %v393
    %v472 = vpop.f32.mrf.mxu0
    %v473 = vadd.f32 0.0, %v472
    %474 = vdwg.mxu0
    %v479 = vrot.slane %v413, 1
    %v480 = vrot.slane %v433, 1
    %v481 = vrot.slane %v453, 1
    %v482 = vrot.slane %v473, 1
    %v483 = vrot.slane %v413, 2
    %v484 = vrot.slane %v433, 2
    %v485 = vrot.slane %v453, 2
    %v486 = vrot.slane %v473, 2
    %v487 = vrot.slane %v413, 3
    %v488 = vrot.slane %v433, 3
    %v489 = vrot.slane %v453, 3
    %v490 = vrot.slane %v473, 3
    %v491 = vrot.slane %v413, 4
    %v492 = vrot.slane %v433, 4
    %v493 = vrot.slane %v453, 4
    %v494 = vrot.slane %v473, 4
    %v495 = vrot.slane %v413, 5
    %v496 = vrot.slane %v433, 5
    %v497 = vrot.slane %v453, 5
    %v498 = vrot.slane %v473, 5
    %v499 = vrot.slane %v413, 6
    %v500 = vrot.slane %v433, 6
    %v501 = vrot.slane %v453, 6
    %v502 = vrot.slane %v473, 6
    %v503 = vrot.slane %v413, 7
    %v504 = vrot.slane %v433, 7
    %v505 = vrot.slane %v453, 7
    %v506 = vrot.slane %v473, 7
    %v539 = vadd.f32 %v183, %v413
    %v540 = vadd.f32 %v224, %v433
    %v541 = vadd.f32 %v265, %v453
    %v542 = vadd.f32 %v306, %v473
    %v543 = vadd.f32 %v186, %v479
    %v544 = vadd.f32 %v227, %v480
    %v545 = vadd.f32 %v268, %v481
    %v546 = vadd.f32 %v309, %v482
    %v547 = vadd.f32 %v189, %v483
    %v548 = vadd.f32 %v230, %v484
    %v549 = vadd.f32 %v271, %v485
    %v550 = vadd.f32 %v312, %v486
    %v551 = vadd.f32 %v192, %v487
    %v552 = vadd.f32 %v233, %v488
    %v553 = vadd.f32 %v274, %v489
    %v554 = vadd.f32 %v315, %v490
    %v555 = vadd.f32 %v195, %v491
    %v556 = vadd.f32 %v236, %v492
    %v557 = vadd.f32 %v277, %v493
    %v558 = vadd.f32 %v318, %v494
    %v559 = vadd.f32 %v198, %v495
    %v560 = vadd.f32 %v239, %v496
    %v561 = vadd.f32 %v280, %v497
    %v562 = vadd.f32 %v321, %v498
    %v563 = vadd.f32 %v201, %v499
    %v564 = vadd.f32 %v242, %v500
    %v565 = vadd.f32 %v283, %v501
    %v566 = vadd.f32 %v324, %v502
    %v567 = vadd.f32 %v204, %v503
    %v568 = vadd.f32 %v245, %v504
    %v569 = vadd.f32 %v286, %v505
    %v570 = vadd.f32 %v327, %v506
    %v571 = vxor.u32 %v539, 2147483648
    %v572 = vxor.u32 %v543, 2147483648
    %v573 = vxor.u32 %v547, 2147483648
    %v574 = vxor.u32 %v551, 2147483648
    %v575 = vxor.u32 %v555, 2147483648
    %v576 = vxor.u32 %v559, 2147483648
    %v577 = vxor.u32 %v563, 2147483648
    %v578 = vxor.u32 %v567, 2147483648
    %v579 = vmul.f32 %v571, 1.442695
    %v580 = vpow.pop %v579
    %v581 = vmul.f32 %v572, 1.442695
    %v582 = vpow.pop %v581
    %v583 = vmul.f32 %v573, 1.442695
    %v584 = vpow.pop %v583
    %v585 = vmul.f32 %v574, 1.442695
    %v586 = vpow.pop %v585
    %v587 = vmul.f32 %v575, 1.442695
    %v588 = vpow.pop %v587
    %v589 = vmul.f32 %v576, 1.442695
    %v590 = vpow.pop %v589
    %v591 = vmul.f32 %v577, 1.442695
    %v592 = vpow.pop %v591
    %v593 = vmul.f32 %v578, 1.442695
    %v594 = vpow.pop %v593
    %v595 = vadd.f32 %v580, 1.0
    %v596 = vadd.f32 %v582, 1.0
    %v597 = vadd.f32 %v584, 1.0
    %v598 = vadd.f32 %v586, 1.0
    %v599 = vadd.f32 %v588, 1.0
    %v600 = vadd.f32 %v590, 1.0
    %v601 = vadd.f32 %v592, 1.0
    %v602 = vadd.f32 %v594, 1.0
    %v603 = vrcp.pop %v595
    %v604 = vmul.f32 %v595, %v603
    %v605 = vsub.f32 1.0, %v604
    %v606 = vmul.f32 %v603, %v605
    %v607 = vadd.f32 %v603, %v606
    %vm608 = vweird.f32 %v595
    %vm609 = vweird.f32 %v603
    %vm610 = vmor %vm608, %vm609
    %v611 = vsel %vm610, %v603, %v607
    %v612 = vand.u32 2147483647, %v595
    %vm613 = vcmp.eq.f32.partialorder %v612, 8.507059e+37
    %v614 = vand.u32 %v595, 2147483648
    %v615 = vor.u32 1.1754944e-38, %v614
    %v616 = vsel %vm613, %v615, %v611
    %v617 = vmul.f32 1.0, %v616
    %v618 = vrcp.pop %v596
    %v619 = vmul.f32 %v596, %v618
    %v620 = vsub.f32 1.0, %v619
    %v621 = vmul.f32 %v618, %v620
    %v622 = vadd.f32 %v618, %v621
    %vm623 = vweird.f32 %v596
    %vm624 = vweird.f32 %v618
    %vm625 = vmor %vm623, %vm624
    %v626 = vsel %vm625, %v618, %v622
    %v627 = vand.u32 2147483647, %v596
    %vm628 = vcmp.eq.f32.partialorder %v627, 8.507059e+37
    %v629 = vand.u32 %v596, 2147483648
    %v630 = vor.u32 1.1754944e-38, %v629
    %v631 = vsel %vm628, %v630, %v626
    %v632 = vmul.f32 1.0, %v631
    %v633 = vrcp.pop %v597
    %v634 = vmul.f32 %v597, %v633
    %v635 = vsub.f32 1.0, %v634
    %v636 = vmul.f32 %v633, %v635
    %v637 = vadd.f32 %v633, %v636
    %vm638 = vweird.f32 %v597
    %vm639 = vweird.f32 %v633
    %vm640 = vmor %vm638, %vm639
    %v641 = vsel %vm640, %v633, %v637
    %v642 = vand.u32 2147483647, %v597
    %vm643 = vcmp.eq.f32.partialorder %v642, 8.507059e+37
    %v644 = vand.u32 %v597, 2147483648
    %v645 = vor.u32 1.1754944e-38, %v644
    %v646 = vsel %vm643, %v645, %v641
    %v647 = vmul.f32 1.0, %v646
    %v648 = vrcp.pop %v598
    %v649 = vmul.f32 %v598, %v648
    %v650 = vsub.f32 1.0, %v649
    %v651 = vmul.f32 %v648, %v650
    %v652 = vadd.f32 %v648, %v651
    %vm653 = vweird.f32 %v598
    %vm654 = vweird.f32 %v648
    %vm655 = vmor %vm653, %vm654
    %v656 = vsel %vm655, %v648, %v652
    %v657 = vand.u32 2147483647, %v598
    %vm658 = vcmp.eq.f32.partialorder %v657, 8.507059e+37
    %v659 = vand.u32 %v598, 2147483648
    %v660 = vor.u32 1.1754944e-38, %v659
    %v661 = vsel %vm658, %v660, %v656
    %v662 = vmul.f32 1.0, %v661
    %v663 = vrcp.pop %v599
    %v664 = vmul.f32 %v599, %v663
    %v665 = vsub.f32 1.0, %v664
    %v666 = vmul.f32 %v663, %v665
    %v667 = vadd.f32 %v663, %v666
    %vm668 = vweird.f32 %v599
    %vm669 = vweird.f32 %v663
    %vm670 = vmor %vm668, %vm669
    %v671 = vsel %vm670, %v663, %v667
    %v672 = vand.u32 2147483647, %v599
    %vm673 = vcmp.eq.f32.partialorder %v672, 8.507059e+37
    %v674 = vand.u32 %v599, 2147483648
    %v675 = vor.u32 1.1754944e-38, %v674
    %v676 = vsel %vm673, %v675, %v671
    %v677 = vmul.f32 1.0, %v676
    %v678 = vrcp.pop %v600
    %v679 = vmul.f32 %v600, %v678
    %v680 = vsub.f32 1.0, %v679
    %v681 = vmul.f32 %v678, %v680
    %v682 = vadd.f32 %v678, %v681
    %vm683 = vweird.f32 %v600
    %vm684 = vweird.f32 %v678
    %vm685 = vmor %vm683, %vm684
    %v686 = vsel %vm685, %v678, %v682
    %v687 = vand.u32 2147483647, %v600
    %vm688 = vcmp.eq.f32.partialorder %v687, 8.507059e+37
    %v689 = vand.u32 %v600, 2147483648
    %v690 = vor.u32 1.1754944e-38, %v689
    %v691 = vsel %vm688, %v690, %v686
    %v692 = vmul.f32 1.0, %v691
    %v693 = vrcp.pop %v601
    %v694 = vmul.f32 %v601, %v693
    %v695 = vsub.f32 1.0, %v694
    %v696 = vmul.f32 %v693, %v695
    %v697 = vadd.f32 %v693, %v696
    %vm698 = vweird.f32 %v601
    %vm699 = vweird.f32 %v693
    %vm700 = vmor %vm698, %vm699
    %v701 = vsel %vm700, %v693, %v697
    %v702 = vand.u32 2147483647, %v601
    %vm703 = vcmp.eq.f32.partialorder %v702, 8.507059e+37
    %v704 = vand.u32 %v601, 2147483648
    %v705 = vor.u32 1.1754944e-38, %v704
    %v706 = vsel %vm703, %v705, %v701
    %v707 = vmul.f32 1.0, %v706
    %v708 = vrcp.pop %v602
    %v709 = vmul.f32 %v602, %v708
    %v710 = vsub.f32 1.0, %v709
    %v711 = vmul.f32 %v708, %v710
    %v712 = vadd.f32 %v708, %v711
    %vm713 = vweird.f32 %v602
    %vm714 = vweird.f32 %v708
    %vm715 = vmor %vm713, %vm714
    %v716 = vsel %vm715, %v708, %v712
    %v717 = vand.u32 2147483647, %v602
    %vm718 = vcmp.eq.f32.partialorder %v717, 8.507059e+37
    %v719 = vand.u32 %v602, 2147483648
    %v720 = vor.u32 1.1754944e-38, %v719
    %v721 = vsel %vm718, %v720, %v716
    %v722 = vmul.f32 1.0, %v721
    %v723 = vxor.u32 %v540, 2147483648
    %v724 = vxor.u32 %v544, 2147483648
    %v725 = vxor.u32 %v548, 2147483648
    %v726 = vxor.u32 %v552, 2147483648
    %v727 = vxor.u32 %v556, 2147483648
    %v728 = vxor.u32 %v560, 2147483648
    %v729 = vxor.u32 %v564, 2147483648
    %v730 = vxor.u32 %v568, 2147483648
    %v731 = vmul.f32 %v723, 1.442695
    %v732 = vpow.pop %v731
    %v733 = vmul.f32 %v724, 1.442695
    %v734 = vpow.pop %v733
    %v735 = vmul.f32 %v725, 1.442695
    %v736 = vpow.pop %v735
    %v737 = vmul.f32 %v726, 1.442695
    %v738 = vpow.pop %v737
    %v739 = vmul.f32 %v727, 1.442695
    %v740 = vpow.pop %v739
    %v741 = vmul.f32 %v728, 1.442695
    %v742 = vpow.pop %v741
    %v743 = vmul.f32 %v729, 1.442695
    %v744 = vpow.pop %v743
    %v745 = vmul.f32 %v730, 1.442695
    %v746 = vpow.pop %v745
    %v747 = vadd.f32 %v732, 1.0
    %v748 = vadd.f32 %v734, 1.0
    %v749 = vadd.f32 %v736, 1.0
    %v750 = vadd.f32 %v738, 1.0
    %v751 = vadd.f32 %v740, 1.0
    %v752 = vadd.f32 %v742, 1.0
    %v753 = vadd.f32 %v744, 1.0
    %v754 = vadd.f32 %v746, 1.0
    %v755 = vrcp.pop %v747
    %v756 = vmul.f32 %v747, %v755
    %v757 = vsub.f32 1.0, %v756
    %v758 = vmul.f32 %v755, %v757
    %v759 = vadd.f32 %v755, %v758
    %vm760 = vweird.f32 %v747
    %vm761 = vweird.f32 %v755
    %vm762 = vmor %vm760, %vm761
    %v763 = vsel %vm762, %v755, %v759
    %v764 = vand.u32 2147483647, %v747
    %vm765 = vcmp.eq.f32.partialorder %v764, 8.507059e+37
    %v766 = vand.u32 %v747, 2147483648
    %v767 = vor.u32 1.1754944e-38, %v766
    %v768 = vsel %vm765, %v767, %v763
    %v769 = vmul.f32 1.0, %v768
    %v770 = vrcp.pop %v748
    %v771 = vmul.f32 %v748, %v770
    %v772 = vsub.f32 1.0, %v771
    %v773 = vmul.f32 %v770, %v772
    %v774 = vadd.f32 %v770, %v773
    %vm775 = vweird.f32 %v748
    %vm776 = vweird.f32 %v770
    %vm777 = vmor %vm775, %vm776
    %v778 = vsel %vm777, %v770, %v774
    %v779 = vand.u32 2147483647, %v748
    %vm780 = vcmp.eq.f32.partialorder %v779, 8.507059e+37
    %v781 = vand.u32 %v748, 2147483648
    %v782 = vor.u32 1.1754944e-38, %v781
    %v783 = vsel %vm780, %v782, %v778
    %v784 = vmul.f32 1.0, %v783
    %v785 = vrcp.pop %v749
    %v786 = vmul.f32 %v749, %v785
    %v787 = vsub.f32 1.0, %v786
    %v788 = vmul.f32 %v785, %v787
    %v789 = vadd.f32 %v785, %v788
    %vm790 = vweird.f32 %v749
    %vm791 = vweird.f32 %v785
    %vm792 = vmor %vm790, %vm791
    %v793 = vsel %vm792, %v785, %v789
    %v794 = vand.u32 2147483647, %v749
    %vm795 = vcmp.eq.f32.partialorder %v794, 8.507059e+37
    %v796 = vand.u32 %v749, 2147483648
    %v797 = vor.u32 1.1754944e-38, %v796
    %v798 = vsel %vm795, %v797, %v793
    %v799 = vmul.f32 1.0, %v798
    %v800 = vrcp.pop %v750
    %v801 = vmul.f32 %v750, %v800
    %v802 = vsub.f32 1.0, %v801
    %v803 = vmul.f32 %v800, %v802
    %v804 = vadd.f32 %v800, %v803
    %vm805 = vweird.f32 %v750
    %vm806 = vweird.f32 %v800
    %vm807 = vmor %vm805, %vm806
    %v808 = vsel %vm807, %v800, %v804
    %v809 = vand.u32 2147483647, %v750
    %vm810 = vcmp.eq.f32.partialorder %v809, 8.507059e+37
    %v811 = vand.u32 %v750, 2147483648
    %v812 = vor.u32 1.1754944e-38, %v811
    %v813 = vsel %vm810, %v812, %v808
    %v814 = vmul.f32 1.0, %v813
    %v815 = vrcp.pop %v751
    %v816 = vmul.f32 %v751, %v815
    %v817 = vsub.f32 1.0, %v816
    %v818 = vmul.f32 %v815, %v817
    %v819 = vadd.f32 %v815, %v818
    %vm820 = vweird.f32 %v751
    %vm821 = vweird.f32 %v815
    %vm822 = vmor %vm820, %vm821
    %v823 = vsel %vm822, %v815, %v819
    %v824 = vand.u32 2147483647, %v751
    %vm825 = vcmp.eq.f32.partialorder %v824, 8.507059e+37
    %v826 = vand.u32 %v751, 2147483648
    %v827 = vor.u32 1.1754944e-38, %v826
    %v828 = vsel %vm825, %v827, %v823
    %v829 = vmul.f32 1.0, %v828
    %v830 = vrcp.pop %v752
    %v831 = vmul.f32 %v752, %v830
    %v832 = vsub.f32 1.0, %v831
    %v833 = vmul.f32 %v830, %v832
    %v834 = vadd.f32 %v830, %v833
    %vm835 = vweird.f32 %v752
    %vm836 = vweird.f32 %v830
    %vm837 = vmor %vm835, %vm836
    %v838 = vsel %vm837, %v830, %v834
    %v839 = vand.u32 2147483647, %v752
    %vm840 = vcmp.eq.f32.partialorder %v839, 8.507059e+37
    %v841 = vand.u32 %v752, 2147483648
    %v842 = vor.u32 1.1754944e-38, %v841
    %v843 = vsel %vm840, %v842, %v838
    %v844 = vmul.f32 1.0, %v843
    %v845 = vrcp.pop %v753
    %v846 = vmul.f32 %v753, %v845
    %v847 = vsub.f32 1.0, %v846
    %v848 = vmul.f32 %v845, %v847
    %v849 = vadd.f32 %v845, %v848
    %vm850 = vweird.f32 %v753
    %vm851 = vweird.f32 %v845
    %vm852 = vmor %vm850, %vm851
    %v853 = vsel %vm852, %v845, %v849
    %v854 = vand.u32 2147483647, %v753
    %vm855 = vcmp.eq.f32.partialorder %v854, 8.507059e+37
    %v856 = vand.u32 %v753, 2147483648
    %v857 = vor.u32 1.1754944e-38, %v856
    %v858 = vsel %vm855, %v857, %v853
    %v859 = vmul.f32 1.0, %v858
    %v860 = vrcp.pop %v754
    %v861 = vmul.f32 %v754, %v860
    %v862 = vsub.f32 1.0, %v861
    %v863 = vmul.f32 %v860, %v862
    %v864 = vadd.f32 %v860, %v863
    %vm865 = vweird.f32 %v754
    %vm866 = vweird.f32 %v860
    %vm867 = vmor %vm865, %vm866
    %v868 = vsel %vm867, %v860, %v864
    %v869 = vand.u32 2147483647, %v754
    %vm870 = vcmp.eq.f32.partialorder %v869, 8.507059e+37
    %v871 = vand.u32 %v754, 2147483648
    %v872 = vor.u32 1.1754944e-38, %v871
    %v873 = vsel %vm870, %v872, %v868
    %v874 = vmul.f32 1.0, %v873
    %v875 = vtanh.pop %v541
    %v876 = vtanh.pop %v545
    %v877 = vtanh.pop %v549
    %v878 = vtanh.pop %v553
    %v879 = vtanh.pop %v557
    %v880 = vtanh.pop %v561
    %v881 = vtanh.pop %v565
    %v882 = vtanh.pop %v569
    %v883 = vxor.u32 %v542, 2147483648
    %v884 = vxor.u32 %v546, 2147483648
    %v885 = vxor.u32 %v550, 2147483648
    %v886 = vxor.u32 %v554, 2147483648
    %v887 = vxor.u32 %v558, 2147483648
    %v888 = vxor.u32 %v562, 2147483648
    %v889 = vxor.u32 %v566, 2147483648
    %v890 = vxor.u32 %v570, 2147483648
    %v891 = vmul.f32 %v883, 1.442695
    %v892 = vpow.pop %v891
    %v893 = vmul.f32 %v884, 1.442695
    %v894 = vpow.pop %v893
    %v895 = vmul.f32 %v885, 1.442695
    %v896 = vpow.pop %v895
    %v897 = vmul.f32 %v886, 1.442695
    %v898 = vpow.pop %v897
    %v899 = vmul.f32 %v887, 1.442695
    %v900 = vpow.pop %v899
    %v901 = vmul.f32 %v888, 1.442695
    %v902 = vpow.pop %v901
    %v903 = vmul.f32 %v889, 1.442695
    %v904 = vpow.pop %v903
    %v905 = vmul.f32 %v890, 1.442695
    %v906 = vpow.pop %v905
    %v907 = vadd.f32 %v892, 1.0
    %v908 = vadd.f32 %v894, 1.0
    %v909 = vadd.f32 %v896, 1.0
    %v910 = vadd.f32 %v898, 1.0
    %v911 = vadd.f32 %v900, 1.0
    %v912 = vadd.f32 %v902, 1.0
    %v913 = vadd.f32 %v904, 1.0
    %v914 = vadd.f32 %v906, 1.0
    %v915 = vrcp.pop %v907
    %v916 = vmul.f32 %v907, %v915
    %v917 = vsub.f32 1.0, %v916
    %v918 = vmul.f32 %v915, %v917
    %v919 = vadd.f32 %v915, %v918
    %vm920 = vweird.f32 %v907
    %vm921 = vweird.f32 %v915
    %vm922 = vmor %vm920, %vm921
    %v923 = vsel %vm922, %v915, %v919
    %v924 = vand.u32 2147483647, %v907
    %vm925 = vcmp.eq.f32.partialorder %v924, 8.507059e+37
    %v926 = vand.u32 %v907, 2147483648
    %v927 = vor.u32 1.1754944e-38, %v926
    %v928 = vsel %vm925, %v927, %v923
    %v929 = vmul.f32 1.0, %v928
    %v930 = vrcp.pop %v908
    %v931 = vmul.f32 %v908, %v930
    %v932 = vsub.f32 1.0, %v931
    %v933 = vmul.f32 %v930, %v932
    %v934 = vadd.f32 %v930, %v933
    %vm935 = vweird.f32 %v908
    %vm936 = vweird.f32 %v930
    %vm937 = vmor %vm935, %vm936
    %v938 = vsel %vm937, %v930, %v934
    %v939 = vand.u32 2147483647, %v908
    %vm940 = vcmp.eq.f32.partialorder %v939, 8.507059e+37
    %v941 = vand.u32 %v908, 2147483648
    %v942 = vor.u32 1.1754944e-38, %v941
    %v943 = vsel %vm940, %v942, %v938
    %v944 = vmul.f32 1.0, %v943
    %v945 = vrcp.pop %v909
    %v946 = vmul.f32 %v909, %v945
    %v947 = vsub.f32 1.0, %v946
    %v948 = vmul.f32 %v945, %v947
    %v949 = vadd.f32 %v945, %v948
    %vm950 = vweird.f32 %v909
    %vm951 = vweird.f32 %v945
    %vm952 = vmor %vm950, %vm951
    %v953 = vsel %vm952, %v945, %v949
    %v954 = vand.u32 2147483647, %v909
    %vm955 = vcmp.eq.f32.partialorder %v954, 8.507059e+37
    %v956 = vand.u32 %v909, 2147483648
    %v957 = vor.u32 1.1754944e-38, %v956
    %v958 = vsel %vm955, %v957, %v953
    %v959 = vmul.f32 1.0, %v958
    %v960 = vrcp.pop %v910
    %v961 = vmul.f32 %v910, %v960
    %v962 = vsub.f32 1.0, %v961
    %v963 = vmul.f32 %v960, %v962
    %v964 = vadd.f32 %v960, %v963
    %vm965 = vweird.f32 %v910
    %vm966 = vweird.f32 %v960
    %vm967 = vmor %vm965, %vm966
    %v968 = vsel %vm967, %v960, %v964
    %v969 = vand.u32 2147483647, %v910
    %vm970 = vcmp.eq.f32.partialorder %v969, 8.507059e+37
    %v971 = vand.u32 %v910, 2147483648
    %v972 = vor.u32 1.1754944e-38, %v971
    %v973 = vsel %vm970, %v972, %v968
    %v974 = vmul.f32 1.0, %v973
    %v975 = vrcp.pop %v911
    %v976 = vmul.f32 %v911, %v975
    %v977 = vsub.f32 1.0, %v976
    %v978 = vmul.f32 %v975, %v977
    %v979 = vadd.f32 %v975, %v978
    %vm980 = vweird.f32 %v911
    %vm981 = vweird.f32 %v975
    %vm982 = vmor %vm980, %vm981
    %v983 = vsel %vm982, %v975, %v979
    %v984 = vand.u32 2147483647, %v911
    %vm985 = vcmp.eq.f32.partialorder %v984, 8.507059e+37
    %v986 = vand.u32 %v911, 2147483648
    %v987 = vor.u32 1.1754944e-38, %v986
    %v988 = vsel %vm985, %v987, %v983
    %v989 = vmul.f32 1.0, %v988
    %v990 = vrcp.pop %v912
    %v991 = vmul.f32 %v912, %v990
    %v992 = vsub.f32 1.0, %v991
    %v993 = vmul.f32 %v990, %v992
    %v994 = vadd.f32 %v990, %v993
    %vm995 = vweird.f32 %v912
    %vm996 = vweird.f32 %v990
    %vm997 = vmor %vm995, %vm996
    %v998 = vsel %vm997, %v990, %v994
    %v999 = vand.u32 2147483647, %v912
    %vm1000 = vcmp.eq.f32.partialorder %v999, 8.507059e+37
    %v1001 = vand.u32 %v912, 2147483648
    %v1002 = vor.u32 1.1754944e-38, %v1001
    %v1003 = vsel %vm1000, %v1002, %v998
    %v1004 = vmul.f32 1.0, %v1003
    %v1005 = vrcp.pop %v913
    %v1006 = vmul.f32 %v913, %v1005
    %v1007 = vsub.f32 1.0, %v1006
    %v1008 = vmul.f32 %v1005, %v1007
    %v1009 = vadd.f32 %v1005, %v1008
    %vm1010 = vweird.f32 %v913
    %vm1011 = vweird.f32 %v1005
    %vm1012 = vmor %vm1010, %vm1011
    %v1013 = vsel %vm1012, %v1005, %v1009
    %v1014 = vand.u32 2147483647, %v913
    %vm1015 = vcmp.eq.f32.partialorder %v1014, 8.507059e+37
    %v1016 = vand.u32 %v913, 2147483648
    %v1017 = vor.u32 1.1754944e-38, %v1016
    %v1018 = vsel %vm1015, %v1017, %v1013
    %v1019 = vmul.f32 1.0, %v1018
    %v1020 = vrcp.pop %v914
    %v1021 = vmul.f32 %v914, %v1020
    %v1022 = vsub.f32 1.0, %v1021
    %v1023 = vmul.f32 %v1020, %v1022
    %v1024 = vadd.f32 %v1020, %v1023
    %vm1025 = vweird.f32 %v914
    %vm1026 = vweird.f32 %v1020
    %vm1027 = vmor %vm1025, %vm1026
    %v1028 = vsel %vm1027, %v1020, %v1024
    %v1029 = vand.u32 2147483647, %v914
    %vm1030 = vcmp.eq.f32.partialorder %v1029, 8.507059e+37
    %v1031 = vand.u32 %v914, 2147483648
    %v1032 = vor.u32 1.1754944e-38, %v1031
    %v1033 = vsel %vm1030, %v1032, %v1028
    %v1034 = vmul.f32 1.0, %v1033
    %v1036 = vrot.slane %v394, 1
    %v1037 = vrot.slane %v394, 2
    %v1038 = vrot.slane %v394, 3
    %v1039 = vrot.slane %v394, 4
    %v1040 = vrot.slane %v394, 5
    %v1041 = vrot.slane %v394, 6
    %v1042 = vrot.slane %v394, 7
    %v1051 = vmul.f32 %v769, %v394
    %v1052 = vmul.f32 %v784, %v1036
    %v1053 = vmul.f32 %v799, %v1037
    %v1054 = vmul.f32 %v814, %v1038
    %v1055 = vmul.f32 %v829, %v1039
    %v1056 = vmul.f32 %v844, %v1040
    %v1057 = vmul.f32 %v859, %v1041
    %v1058 = vmul.f32 %v874, %v1042
    %v1059 = vmul.f32 %v617, %v875
    %v1060 = vmul.f32 %v632, %v876
    %v1061 = vmul.f32 %v647, %v877
    %v1062 = vmul.f32 %v662, %v878
    %v1063 = vmul.f32 %v677, %v879
    %v1064 = vmul.f32 %v692, %v880
    %v1065 = vmul.f32 %v707, %v881
    %v1066 = vmul.f32 %v722, %v882
    %v1067 = vadd.f32 %v1051, %v1059
    %v1068 = vadd.f32 %v1052, %v1060
    %v1069 = vadd.f32 %v1053, %v1061
    %v1070 = vadd.f32 %v1054, %v1062
    %v1071 = vadd.f32 %v1055, %v1063
    %v1072 = vadd.f32 %v1056, %v1064
    %v1073 = vadd.f32 %v1057, %v1065
    %v1074 = vadd.f32 %v1058, %v1066
    %v1075 = vtanh.pop %v1067
    %v1076 = vtanh.pop %v1068
    %v1077 = vtanh.pop %v1069
    %v1078 = vtanh.pop %v1070
    %v1079 = vtanh.pop %v1071
    %v1080 = vtanh.pop %v1072
    %v1081 = vtanh.pop %v1073
    %v1082 = vtanh.pop %v1074
    %v1083 = vmul.f32 %v929, %v1075
    %v1084 = vmul.f32 %v944, %v1076
    %v1085 = vmul.f32 %v959, %v1077
    %v1086 = vmul.f32 %v974, %v1078
    %v1087 = vmul.f32 %v989, %v1079
    %v1088 = vmul.f32 %v1004, %v1080
    %v1089 = vmul.f32 %v1019, %v1081
    %v1090 = vmul.f32 %v1034, %v1082
    %v1099 = vrot.slane %v1084, 7
    %vm1100 = vcmask 1041409
    %v1101 = vsel %vm1100, %v1099, %v1083
    %v1102 = vrot.slane %v1085, 6
    %vm1103 = vcmask 1042434
    %v1104 = vsel %vm1103, %v1102, %v1101
    %v1105 = vrot.slane %v1086, 5
    %vm1106 = vcmask 1043459
    %v1107 = vsel %vm1106, %v1105, %v1104
    %v1108 = vrot.slane %v1087, 4
    %vm1109 = vcmask 1044484
    %v1110 = vsel %vm1109, %v1108, %v1107
    %v1111 = vrot.slane %v1088, 3
    %vm1112 = vcmask 1045509
    %v1113 = vsel %vm1112, %v1111, %v1110
    %v1114 = vrot.slane %v1089, 2
    %vm1115 = vcmask 1046534
    %v1116 = vsel %vm1115, %v1114, %v1113
    %v1117 = vrot.slane %v1090, 1
    %vm1118 = vcmask 1047559
    %v1119 = vsel %vm1118, %v1117, %v1116
    %1121 = vmatpush.msra.mxu0 %v389
    %1122 = vmatpush.msra.mxu0 %v385
    %1123 = vmatpush.msra.mxu0 %v381
    %1124 = vmatpush.msra.mxu0 %v377
    %1125 = vmatpush.msra.mxu0 %v373
    %1126 = vmatpush.msra.mxu0 %v369
    %1127 = vmatpush.msra.mxu0 %v365
    %1128 = vmatpush.msra.mxu0 %v361
    %1129 = vmatpush.msra.mxu0 %v357
    %1130 = vmatpush.msra.mxu0 %v353
    %1131 = vmatpush.msra.mxu0 %v349
    %1132 = vmatpush.msra.mxu0 %v345
    %1133 = vmatpush.msra.mxu0 %v341
    %1134 = vmatpush.msra.mxu0 %v337
    %1135 = vmatpush.msra.mxu0 %v333
    %1136 = vmatpush.msra.mxu0 %v329
    %1137 = vmatmul.f32.gmra.mxu0 %v1119
    %v1138 = vpop.f32.mrf.mxu0
    %v1139 = vadd.f32 0.0, %v1138
    %1140 = vdwg.mxu0
    %1141 = vmatpush.msra.mxu0 %v390
    %1142 = vmatpush.msra.mxu0 %v386
    %1143 = vmatpush.msra.mxu0 %v382
    %1144 = vmatpush.msra.mxu0 %v378
    %1145 = vmatpush.msra.mxu0 %v374
    %1146 = vmatpush.msra.mxu0 %v370
    %1147 = vmatpush.msra.mxu0 %v366
    %1148 = vmatpush.msra.mxu0 %v362
    %1149 = vmatpush.msra.mxu0 %v358
    %1150 = vmatpush.msra.mxu0 %v354
    %1151 = vmatpush.msra.mxu0 %v350
    %1152 = vmatpush.msra.mxu0 %v346
    %1153 = vmatpush.msra.mxu0 %v342
    %1154 = vmatpush.msra.mxu0 %v338
    %1155 = vmatpush.msra.mxu0 %v334
    %1156 = vmatpush.msra.mxu0 %v330
    %1157 = vmatmul.f32.gmra.mxu0 %v1119
    %v1158 = vpop.f32.mrf.mxu0
    %v1159 = vadd.f32 0.0, %v1158
    %1160 = vdwg.mxu0
    %1161 = vmatpush.msra.mxu0 %v391
    %1162 = vmatpush.msra.mxu0 %v387
    %1163 = vmatpush.msra.mxu0 %v383
    %1164 = vmatpush.msra.mxu0 %v379
    %1165 = vmatpush.msra.mxu0 %v375
    %1166 = vmatpush.msra.mxu0 %v371
    %1167 = vmatpush.msra.mxu0 %v367
    %1168 = vmatpush.msra.mxu0 %v363
    %1169 = vmatpush.msra.mxu0 %v359
    %1170 = vmatpush.msra.mxu0 %v355
    %1171 = vmatpush.msra.mxu0 %v351
    %1172 = vmatpush.msra.mxu0 %v347
    %1173 = vmatpush.msra.mxu0 %v343
    %1174 = vmatpush.msra.mxu0 %v339
    %1175 = vmatpush.msra.mxu0 %v335
    %1176 = vmatpush.msra.mxu0 %v331
    %1177 = vmatmul.f32.gmra.mxu0 %v1119
    %v1178 = vpop.f32.mrf.mxu0
    %v1179 = vadd.f32 0.0, %v1178
    %1180 = vdwg.mxu0
    %1181 = vmatpush.msra.mxu0 %v392
    %1182 = vmatpush.msra.mxu0 %v388
    %1183 = vmatpush.msra.mxu0 %v384
    %1184 = vmatpush.msra.mxu0 %v380
    %1185 = vmatpush.msra.mxu0 %v376
    %1186 = vmatpush.msra.mxu0 %v372
    %1187 = vmatpush.msra.mxu0 %v368
    %1188 = vmatpush.msra.mxu0 %v364
    %1189 = vmatpush.msra.mxu0 %v360
    %1190 = vmatpush.msra.mxu0 %v356
    %1191 = vmatpush.msra.mxu0 %v352
    %1192 = vmatpush.msra.mxu0 %v348
    %1193 = vmatpush.msra.mxu0 %v344
    %1194 = vmatpush.msra.mxu0 %v340
    %1195 = vmatpush.msra.mxu0 %v336
    %1196 = vmatpush.msra.mxu0 %v332
    %1197 = vmatmul.f32.gmra.mxu0 %v1119
    %v1198 = vpop.f32.mrf.mxu0
    %v1199 = vadd.f32 0.0, %v1198
    %1200 = vdwg.mxu0
    %v1205 = vrot.slane %v1139, 7
    %v1206 = vrot.slane %v1159, 7
    %v1207 = vrot.slane %v1179, 7
    %v1208 = vrot.slane %v1199, 7
    %v1209 = vrot.slane %v1139, 1
    %v1210 = vrot.slane %v1159, 1
    %v1211 = vrot.slane %v1179, 1
    %v1212 = vrot.slane %v1199, 1
    %v1213 = vrot.slane %v1139, 2
    %v1214 = vrot.slane %v1159, 2
    %v1215 = vrot.slane %v1179, 2
    %v1216 = vrot.slane %v1199, 2
    %v1217 = vrot.slane %v1139, 3
    %v1218 = vrot.slane %v1159, 3
    %v1219 = vrot.slane %v1179, 3
    %v1220 = vrot.slane %v1199, 3
    %v1221 = vrot.slane %v1139, 4
    %v1222 = vrot.slane %v1159, 4
    %v1223 = vrot.slane %v1179, 4
    %v1224 = vrot.slane %v1199, 4
    %v1225 = vrot.slane %v1139, 5
    %v1226 = vrot.slane %v1159, 5
    %v1227 = vrot.slane %v1179, 5
    %v1228 = vrot.slane %v1199, 5
    %v1229 = vrot.slane %v1139, 6
    %v1230 = vrot.slane %v1159, 6
    %v1231 = vrot.slane %v1179, 6
    %v1232 = vrot.slane %v1199, 6
    %v1265 = vadd.f32 %v183, %v1205
    %v1266 = vadd.f32 %v224, %v1206
    %v1267 = vadd.f32 %v265, %v1207
    %v1268 = vadd.f32 %v306, %v1208
    %v1269 = vadd.f32 %v186, %v1139
    %v1270 = vadd.f32 %v227, %v1159
    %v1271 = vadd.f32 %v268, %v1179
    %v1272 = vadd.f32 %v309, %v1199
    %v1273 = vadd.f32 %v189, %v1209
    %v1274 = vadd.f32 %v230, %v1210
    %v1275 = vadd.f32 %v271, %v1211
    %v1276 = vadd.f32 %v312, %v1212
    %v1277 = vadd.f32 %v192, %v1213
    %v1278 = vadd.f32 %v233, %v1214
    %v1279 = vadd.f32 %v274, %v1215
    %v1280 = vadd.f32 %v315, %v1216
    %v1281 = vadd.f32 %v195, %v1217
    %v1282 = vadd.f32 %v236, %v1218
    %v1283 = vadd.f32 %v277, %v1219
    %v1284 = vadd.f32 %v318, %v1220
    %v1285 = vadd.f32 %v198, %v1221
    %v1286 = vadd.f32 %v239, %v1222
    %v1287 = vadd.f32 %v280, %v1223
    %v1288 = vadd.f32 %v321, %v1224
    %v1289 = vadd.f32 %v201, %v1225
    %v1290 = vadd.f32 %v242, %v1226
    %v1291 = vadd.f32 %v283, %v1227
    %v1292 = vadd.f32 %v324, %v1228
    %v1293 = vadd.f32 %v204, %v1229
    %v1294 = vadd.f32 %v245, %v1230
    %v1295 = vadd.f32 %v286, %v1231
    %v1296 = vadd.f32 %v327, %v1232
    %v1297 = vxor.u32 %v1265, 2147483648
    %v1298 = vxor.u32 %v1269, 2147483648
    %v1299 = vxor.u32 %v1273, 2147483648
    %v1300 = vxor.u32 %v1277, 2147483648
    %v1301 = vxor.u32 %v1281, 2147483648
    %v1302 = vxor.u32 %v1285, 2147483648
    %v1303 = vxor.u32 %v1289, 2147483648
    %v1304 = vxor.u32 %v1293, 2147483648
    %v1305 = vmul.f32 %v1297, 1.442695
    %v1306 = vpow.pop %v1305
    %v1307 = vmul.f32 %v1298, 1.442695
    %v1308 = vpow.pop %v1307
    %v1309 = vmul.f32 %v1299, 1.442695
    %v1310 = vpow.pop %v1309
    %v1311 = vmul.f32 %v1300, 1.442695
    %v1312 = vpow.pop %v1311
    %v1313 = vmul.f32 %v1301, 1.442695
    %v1314 = vpow.pop %v1313
    %v1315 = vmul.f32 %v1302, 1.442695
    %v1316 = vpow.pop %v1315
    %v1317 = vmul.f32 %v1303, 1.442695
    %v1318 = vpow.pop %v1317
    %v1319 = vmul.f32 %v1304, 1.442695
    %v1320 = vpow.pop %v1319
    %v1321 = vadd.f32 %v1306, 1.0
    %v1322 = vadd.f32 %v1308, 1.0
    %v1323 = vadd.f32 %v1310, 1.0
    %v1324 = vadd.f32 %v1312, 1.0
    %v1325 = vadd.f32 %v1314, 1.0
    %v1326 = vadd.f32 %v1316, 1.0
    %v1327 = vadd.f32 %v1318, 1.0
    %v1328 = vadd.f32 %v1320, 1.0
    %v1329 = vrcp.pop %v1321
    %v1330 = vmul.f32 %v1321, %v1329
    %v1331 = vsub.f32 1.0, %v1330
    %v1332 = vmul.f32 %v1329, %v1331
    %v1333 = vadd.f32 %v1329, %v1332
    %vm1334 = vweird.f32 %v1321
    %vm1335 = vweird.f32 %v1329
    %vm1336 = vmor %vm1334, %vm1335
    %v1337 = vsel %vm1336, %v1329, %v1333
    %v1338 = vand.u32 2147483647, %v1321
    %vm1339 = vcmp.eq.f32.partialorder %v1338, 8.507059e+37
    %v1340 = vand.u32 %v1321, 2147483648
    %v1341 = vor.u32 1.1754944e-38, %v1340
    %v1342 = vsel %vm1339, %v1341, %v1337
    %v1343 = vmul.f32 1.0, %v1342
    %v1344 = vrcp.pop %v1322
    %v1345 = vmul.f32 %v1322, %v1344
    %v1346 = vsub.f32 1.0, %v1345
    %v1347 = vmul.f32 %v1344, %v1346
    %v1348 = vadd.f32 %v1344, %v1347
    %vm1349 = vweird.f32 %v1322
    %vm1350 = vweird.f32 %v1344
    %vm1351 = vmor %vm1349, %vm1350
    %v1352 = vsel %vm1351, %v1344, %v1348
    %v1353 = vand.u32 2147483647, %v1322
    %vm1354 = vcmp.eq.f32.partialorder %v1353, 8.507059e+37
    %v1355 = vand.u32 %v1322, 2147483648
    %v1356 = vor.u32 1.1754944e-38, %v1355
    %v1357 = vsel %vm1354, %v1356, %v1352
    %v1358 = vmul.f32 1.0, %v1357
    %v1359 = vrcp.pop %v1323
    %v1360 = vmul.f32 %v1323, %v1359
    %v1361 = vsub.f32 1.0, %v1360
    %v1362 = vmul.f32 %v1359, %v1361
    %v1363 = vadd.f32 %v1359, %v1362
    %vm1364 = vweird.f32 %v1323
    %vm1365 = vweird.f32 %v1359
    %vm1366 = vmor %vm1364, %vm1365
    %v1367 = vsel %vm1366, %v1359, %v1363
    %v1368 = vand.u32 2147483647, %v1323
    %vm1369 = vcmp.eq.f32.partialorder %v1368, 8.507059e+37
    %v1370 = vand.u32 %v1323, 2147483648
    %v1371 = vor.u32 1.1754944e-38, %v1370
    %v1372 = vsel %vm1369, %v1371, %v1367
    %v1373 = vmul.f32 1.0, %v1372
    %v1374 = vrcp.pop %v1324
    %v1375 = vmul.f32 %v1324, %v1374
    %v1376 = vsub.f32 1.0, %v1375
    %v1377 = vmul.f32 %v1374, %v1376
    %v1378 = vadd.f32 %v1374, %v1377
    %vm1379 = vweird.f32 %v1324
    %vm1380 = vweird.f32 %v1374
    %vm1381 = vmor %vm1379, %vm1380
    %v1382 = vsel %vm1381, %v1374, %v1378
    %v1383 = vand.u32 2147483647, %v1324
    %vm1384 = vcmp.eq.f32.partialorder %v1383, 8.507059e+37
    %v1385 = vand.u32 %v1324, 2147483648
    %v1386 = vor.u32 1.1754944e-38, %v1385
    %v1387 = vsel %vm1384, %v1386, %v1382
    %v1388 = vmul.f32 1.0, %v1387
    %v1389 = vrcp.pop %v1325
    %v1390 = vmul.f32 %v1325, %v1389
    %v1391 = vsub.f32 1.0, %v1390
    %v1392 = vmul.f32 %v1389, %v1391
    %v1393 = vadd.f32 %v1389, %v1392
    %vm1394 = vweird.f32 %v1325
    %vm1395 = vweird.f32 %v1389
    %vm1396 = vmor %vm1394, %vm1395
    %v1397 = vsel %vm1396, %v1389, %v1393
    %v1398 = vand.u32 2147483647, %v1325
    %vm1399 = vcmp.eq.f32.partialorder %v1398, 8.507059e+37
    %v1400 = vand.u32 %v1325, 2147483648
    %v1401 = vor.u32 1.1754944e-38, %v1400
    %v1402 = vsel %vm1399, %v1401, %v1397
    %v1403 = vmul.f32 1.0, %v1402
    %v1404 = vrcp.pop %v1326
    %v1405 = vmul.f32 %v1326, %v1404
    %v1406 = vsub.f32 1.0, %v1405
    %v1407 = vmul.f32 %v1404, %v1406
    %v1408 = vadd.f32 %v1404, %v1407
    %vm1409 = vweird.f32 %v1326
    %vm1410 = vweird.f32 %v1404
    %vm1411 = vmor %vm1409, %vm1410
    %v1412 = vsel %vm1411, %v1404, %v1408
    %v1413 = vand.u32 2147483647, %v1326
    %vm1414 = vcmp.eq.f32.partialorder %v1413, 8.507059e+37
    %v1415 = vand.u32 %v1326, 2147483648
    %v1416 = vor.u32 1.1754944e-38, %v1415
    %v1417 = vsel %vm1414, %v1416, %v1412
    %v1418 = vmul.f32 1.0, %v1417
    %v1419 = vrcp.pop %v1327
    %v1420 = vmul.f32 %v1327, %v1419
    %v1421 = vsub.f32 1.0, %v1420
    %v1422 = vmul.f32 %v1419, %v1421
    %v1423 = vadd.f32 %v1419, %v1422
    %vm1424 = vweird.f32 %v1327
    %vm1425 = vweird.f32 %v1419
    %vm1426 = vmor %vm1424, %vm1425
    %v1427 = vsel %vm1426, %v1419, %v1423
    %v1428 = vand.u32 2147483647, %v1327
    %vm1429 = vcmp.eq.f32.partialorder %v1428, 8.507059e+37
    %v1430 = vand.u32 %v1327, 2147483648
    %v1431 = vor.u32 1.1754944e-38, %v1430
    %v1432 = vsel %vm1429, %v1431, %v1427
    %v1433 = vmul.f32 1.0, %v1432
    %v1434 = vrcp.pop %v1328
    %v1435 = vmul.f32 %v1328, %v1434
    %v1436 = vsub.f32 1.0, %v1435
    %v1437 = vmul.f32 %v1434, %v1436
    %v1438 = vadd.f32 %v1434, %v1437
    %vm1439 = vweird.f32 %v1328
    %vm1440 = vweird.f32 %v1434
    %vm1441 = vmor %vm1439, %vm1440
    %v1442 = vsel %vm1441, %v1434, %v1438
    %v1443 = vand.u32 2147483647, %v1328
    %vm1444 = vcmp.eq.f32.partialorder %v1443, 8.507059e+37
    %v1445 = vand.u32 %v1328, 2147483648
    %v1446 = vor.u32 1.1754944e-38, %v1445
    %v1447 = vsel %vm1444, %v1446, %v1442
    %v1448 = vmul.f32 1.0, %v1447
    %v1449 = vxor.u32 %v1266, 2147483648
    %v1450 = vxor.u32 %v1270, 2147483648
    %v1451 = vxor.u32 %v1274, 2147483648
    %v1452 = vxor.u32 %v1278, 2147483648
    %v1453 = vxor.u32 %v1282, 2147483648
    %v1454 = vxor.u32 %v1286, 2147483648
    %v1455 = vxor.u32 %v1290, 2147483648
    %v1456 = vxor.u32 %v1294, 2147483648
    %v1457 = vmul.f32 %v1449, 1.442695
    %v1458 = vpow.pop %v1457
    %v1459 = vmul.f32 %v1450, 1.442695
    %v1460 = vpow.pop %v1459
    %v1461 = vmul.f32 %v1451, 1.442695
    %v1462 = vpow.pop %v1461
    %v1463 = vmul.f32 %v1452, 1.442695
    %v1464 = vpow.pop %v1463
    %v1465 = vmul.f32 %v1453, 1.442695
    %v1466 = vpow.pop %v1465
    %v1467 = vmul.f32 %v1454, 1.442695
    %v1468 = vpow.pop %v1467
    %v1469 = vmul.f32 %v1455, 1.442695
    %v1470 = vpow.pop %v1469
    %v1471 = vmul.f32 %v1456, 1.442695
    %v1472 = vpow.pop %v1471
    %v1473 = vadd.f32 %v1458, 1.0
    %v1474 = vadd.f32 %v1460, 1.0
    %v1475 = vadd.f32 %v1462, 1.0
    %v1476 = vadd.f32 %v1464, 1.0
    %v1477 = vadd.f32 %v1466, 1.0
    %v1478 = vadd.f32 %v1468, 1.0
    %v1479 = vadd.f32 %v1470, 1.0
    %v1480 = vadd.f32 %v1472, 1.0
    %v1481 = vrcp.pop %v1473
    %v1482 = vmul.f32 %v1473, %v1481
    %v1483 = vsub.f32 1.0, %v1482
    %v1484 = vmul.f32 %v1481, %v1483
    %v1485 = vadd.f32 %v1481, %v1484
    %vm1486 = vweird.f32 %v1473
    %vm1487 = vweird.f32 %v1481
    %vm1488 = vmor %vm1486, %vm1487
    %v1489 = vsel %vm1488, %v1481, %v1485
    %v1490 = vand.u32 2147483647, %v1473
    %vm1491 = vcmp.eq.f32.partialorder %v1490, 8.507059e+37
    %v1492 = vand.u32 %v1473, 2147483648
    %v1493 = vor.u32 1.1754944e-38, %v1492
    %v1494 = vsel %vm1491, %v1493, %v1489
    %v1495 = vmul.f32 1.0, %v1494
    %v1496 = vrcp.pop %v1474
    %v1497 = vmul.f32 %v1474, %v1496
    %v1498 = vsub.f32 1.0, %v1497
    %v1499 = vmul.f32 %v1496, %v1498
    %v1500 = vadd.f32 %v1496, %v1499
    %vm1501 = vweird.f32 %v1474
    %vm1502 = vweird.f32 %v1496
    %vm1503 = vmor %vm1501, %vm1502
    %v1504 = vsel %vm1503, %v1496, %v1500
    %v1505 = vand.u32 2147483647, %v1474
    %vm1506 = vcmp.eq.f32.partialorder %v1505, 8.507059e+37
    %v1507 = vand.u32 %v1474, 2147483648
    %v1508 = vor.u32 1.1754944e-38, %v1507
    %v1509 = vsel %vm1506, %v1508, %v1504
    %v1510 = vmul.f32 1.0, %v1509
    %v1511 = vrcp.pop %v1475
    %v1512 = vmul.f32 %v1475, %v1511
    %v1513 = vsub.f32 1.0, %v1512
    %v1514 = vmul.f32 %v1511, %v1513
    %v1515 = vadd.f32 %v1511, %v1514
    %vm1516 = vweird.f32 %v1475
    %vm1517 = vweird.f32 %v1511
    %vm1518 = vmor %vm1516, %vm1517
    %v1519 = vsel %vm1518, %v1511, %v1515
    %v1520 = vand.u32 2147483647, %v1475
    %vm1521 = vcmp.eq.f32.partialorder %v1520, 8.507059e+37
    %v1522 = vand.u32 %v1475, 2147483648
    %v1523 = vor.u32 1.1754944e-38, %v1522
    %v1524 = vsel %vm1521, %v1523, %v1519
    %v1525 = vmul.f32 1.0, %v1524
    %v1526 = vrcp.pop %v1476
    %v1527 = vmul.f32 %v1476, %v1526
    %v1528 = vsub.f32 1.0, %v1527
    %v1529 = vmul.f32 %v1526, %v1528
    %v1530 = vadd.f32 %v1526, %v1529
    %vm1531 = vweird.f32 %v1476
    %vm1532 = vweird.f32 %v1526
    %vm1533 = vmor %vm1531, %vm1532
    %v1534 = vsel %vm1533, %v1526, %v1530
    %v1535 = vand.u32 2147483647, %v1476
    %vm1536 = vcmp.eq.f32.partialorder %v1535, 8.507059e+37
    %v1537 = vand.u32 %v1476, 2147483648
    %v1538 = vor.u32 1.1754944e-38, %v1537
    %v1539 = vsel %vm1536, %v1538, %v1534
    %v1540 = vmul.f32 1.0, %v1539
    %v1541 = vrcp.pop %v1477
    %v1542 = vmul.f32 %v1477, %v1541
    %v1543 = vsub.f32 1.0, %v1542
    %v1544 = vmul.f32 %v1541, %v1543
    %v1545 = vadd.f32 %v1541, %v1544
    %vm1546 = vweird.f32 %v1477
    %vm1547 = vweird.f32 %v1541
    %vm1548 = vmor %vm1546, %vm1547
    %v1549 = vsel %vm1548, %v1541, %v1545
    %v1550 = vand.u32 2147483647, %v1477
    %vm1551 = vcmp.eq.f32.partialorder %v1550, 8.507059e+37
    %v1552 = vand.u32 %v1477, 2147483648
    %v1553 = vor.u32 1.1754944e-38, %v1552
    %v1554 = vsel %vm1551, %v1553, %v1549
    %v1555 = vmul.f32 1.0, %v1554
    %v1556 = vrcp.pop %v1478
    %v1557 = vmul.f32 %v1478, %v1556
    %v1558 = vsub.f32 1.0, %v1557
    %v1559 = vmul.f32 %v1556, %v1558
    %v1560 = vadd.f32 %v1556, %v1559
    %vm1561 = vweird.f32 %v1478
    %vm1562 = vweird.f32 %v1556
    %vm1563 = vmor %vm1561, %vm1562
    %v1564 = vsel %vm1563, %v1556, %v1560
    %v1565 = vand.u32 2147483647, %v1478
    %vm1566 = vcmp.eq.f32.partialorder %v1565, 8.507059e+37
    %v1567 = vand.u32 %v1478, 2147483648
    %v1568 = vor.u32 1.1754944e-38, %v1567
    %v1569 = vsel %vm1566, %v1568, %v1564
    %v1570 = vmul.f32 1.0, %v1569
    %v1571 = vrcp.pop %v1479
    %v1572 = vmul.f32 %v1479, %v1571
    %v1573 = vsub.f32 1.0, %v1572
    %v1574 = vmul.f32 %v1571, %v1573
    %v1575 = vadd.f32 %v1571, %v1574
    %vm1576 = vweird.f32 %v1479
    %vm1577 = vweird.f32 %v1571
    %vm1578 = vmor %vm1576, %vm1577
    %v1579 = vsel %vm1578, %v1571, %v1575
    %v1580 = vand.u32 2147483647, %v1479
    %vm1581 = vcmp.eq.f32.partialorder %v1580, 8.507059e+37
    %v1582 = vand.u32 %v1479, 2147483648
    %v1583 = vor.u32 1.1754944e-38, %v1582
    %v1584 = vsel %vm1581, %v1583, %v1579
    %v1585 = vmul.f32 1.0, %v1584
    %v1586 = vrcp.pop %v1480
    %v1587 = vmul.f32 %v1480, %v1586
    %v1588 = vsub.f32 1.0, %v1587
    %v1589 = vmul.f32 %v1586, %v1588
    %v1590 = vadd.f32 %v1586, %v1589
    %vm1591 = vweird.f32 %v1480
    %vm1592 = vweird.f32 %v1586
    %vm1593 = vmor %vm1591, %vm1592
    %v1594 = vsel %vm1593, %v1586, %v1590
    %v1595 = vand.u32 2147483647, %v1480
    %vm1596 = vcmp.eq.f32.partialorder %v1595, 8.507059e+37
    %v1597 = vand.u32 %v1480, 2147483648
    %v1598 = vor.u32 1.1754944e-38, %v1597
    %v1599 = vsel %vm1596, %v1598, %v1594
    %v1600 = vmul.f32 1.0, %v1599
    %v1601 = vtanh.pop %v1267
    %v1602 = vtanh.pop %v1271
    %v1603 = vtanh.pop %v1275
    %v1604 = vtanh.pop %v1279
    %v1605 = vtanh.pop %v1283
    %v1606 = vtanh.pop %v1287
    %v1607 = vtanh.pop %v1291
    %v1608 = vtanh.pop %v1295
    %v1609 = vxor.u32 %v1268, 2147483648
    %v1610 = vxor.u32 %v1272, 2147483648
    %v1611 = vxor.u32 %v1276, 2147483648
    %v1612 = vxor.u32 %v1280, 2147483648
    %v1613 = vxor.u32 %v1284, 2147483648
    %v1614 = vxor.u32 %v1288, 2147483648
    %v1615 = vxor.u32 %v1292, 2147483648
    %v1616 = vxor.u32 %v1296, 2147483648
    %v1617 = vmul.f32 %v1609, 1.442695
    %v1618 = vpow.pop %v1617
    %v1619 = vmul.f32 %v1610, 1.442695
    %v1620 = vpow.pop %v1619
    %v1621 = vmul.f32 %v1611, 1.442695
    %v1622 = vpow.pop %v1621
    %v1623 = vmul.f32 %v1612, 1.442695
    %v1624 = vpow.pop %v1623
    %v1625 = vmul.f32 %v1613, 1.442695
    %v1626 = vpow.pop %v1625
    %v1627 = vmul.f32 %v1614, 1.442695
    %v1628 = vpow.pop %v1627
    %v1629 = vmul.f32 %v1615, 1.442695
    %v1630 = vpow.pop %v1629
    %v1631 = vmul.f32 %v1616, 1.442695
    %v1632 = vpow.pop %v1631
    %v1633 = vadd.f32 %v1618, 1.0
    %v1634 = vadd.f32 %v1620, 1.0
    %v1635 = vadd.f32 %v1622, 1.0
    %v1636 = vadd.f32 %v1624, 1.0
    %v1637 = vadd.f32 %v1626, 1.0
    %v1638 = vadd.f32 %v1628, 1.0
    %v1639 = vadd.f32 %v1630, 1.0
    %v1640 = vadd.f32 %v1632, 1.0
    %v1641 = vrcp.pop %v1633
    %v1642 = vmul.f32 %v1633, %v1641
    %v1643 = vsub.f32 1.0, %v1642
    %v1644 = vmul.f32 %v1641, %v1643
    %v1645 = vadd.f32 %v1641, %v1644
    %vm1646 = vweird.f32 %v1633
    %vm1647 = vweird.f32 %v1641
    %vm1648 = vmor %vm1646, %vm1647
    %v1649 = vsel %vm1648, %v1641, %v1645
    %v1650 = vand.u32 2147483647, %v1633
    %vm1651 = vcmp.eq.f32.partialorder %v1650, 8.507059e+37
    %v1652 = vand.u32 %v1633, 2147483648
    %v1653 = vor.u32 1.1754944e-38, %v1652
    %v1654 = vsel %vm1651, %v1653, %v1649
    %v1655 = vmul.f32 1.0, %v1654
    %v1656 = vrcp.pop %v1634
    %v1657 = vmul.f32 %v1634, %v1656
    %v1658 = vsub.f32 1.0, %v1657
    %v1659 = vmul.f32 %v1656, %v1658
    %v1660 = vadd.f32 %v1656, %v1659
    %vm1661 = vweird.f32 %v1634
    %vm1662 = vweird.f32 %v1656
    %vm1663 = vmor %vm1661, %vm1662
    %v1664 = vsel %vm1663, %v1656, %v1660
    %v1665 = vand.u32 2147483647, %v1634
    %vm1666 = vcmp.eq.f32.partialorder %v1665, 8.507059e+37
    %v1667 = vand.u32 %v1634, 2147483648
    %v1668 = vor.u32 1.1754944e-38, %v1667
    %v1669 = vsel %vm1666, %v1668, %v1664
    %v1670 = vmul.f32 1.0, %v1669
    %v1671 = vrcp.pop %v1635
    %v1672 = vmul.f32 %v1635, %v1671
    %v1673 = vsub.f32 1.0, %v1672
    %v1674 = vmul.f32 %v1671, %v1673
    %v1675 = vadd.f32 %v1671, %v1674
    %vm1676 = vweird.f32 %v1635
    %vm1677 = vweird.f32 %v1671
    %vm1678 = vmor %vm1676, %vm1677
    %v1679 = vsel %vm1678, %v1671, %v1675
    %v1680 = vand.u32 2147483647, %v1635
    %vm1681 = vcmp.eq.f32.partialorder %v1680, 8.507059e+37
    %v1682 = vand.u32 %v1635, 2147483648
    %v1683 = vor.u32 1.1754944e-38, %v1682
    %v1684 = vsel %vm1681, %v1683, %v1679
    %v1685 = vmul.f32 1.0, %v1684
    %v1686 = vrcp.pop %v1636
    %v1687 = vmul.f32 %v1636, %v1686
    %v1688 = vsub.f32 1.0, %v1687
    %v1689 = vmul.f32 %v1686, %v1688
    %v1690 = vadd.f32 %v1686, %v1689
    %vm1691 = vweird.f32 %v1636
    %vm1692 = vweird.f32 %v1686
    %vm1693 = vmor %vm1691, %vm1692
    %v1694 = vsel %vm1693, %v1686, %v1690
    %v1695 = vand.u32 2147483647, %v1636
    %vm1696 = vcmp.eq.f32.partialorder %v1695, 8.507059e+37
    %v1697 = vand.u32 %v1636, 2147483648
    %v1698 = vor.u32 1.1754944e-38, %v1697
    %v1699 = vsel %vm1696, %v1698, %v1694
    %v1700 = vmul.f32 1.0, %v1699
    %v1701 = vrcp.pop %v1637
    %v1702 = vmul.f32 %v1637, %v1701
    %v1703 = vsub.f32 1.0, %v1702
    %v1704 = vmul.f32 %v1701, %v1703
    %v1705 = vadd.f32 %v1701, %v1704
    %vm1706 = vweird.f32 %v1637
    %vm1707 = vweird.f32 %v1701
    %vm1708 = vmor %vm1706, %vm1707
    %v1709 = vsel %vm1708, %v1701, %v1705
    %v1710 = vand.u32 2147483647, %v1637
    %vm1711 = vcmp.eq.f32.partialorder %v1710, 8.507059e+37
    %v1712 = vand.u32 %v1637, 2147483648
    %v1713 = vor.u32 1.1754944e-38, %v1712
    %v1714 = vsel %vm1711, %v1713, %v1709
    %v1715 = vmul.f32 1.0, %v1714
    %v1716 = vrcp.pop %v1638
    %v1717 = vmul.f32 %v1638, %v1716
    %v1718 = vsub.f32 1.0, %v1717
    %v1719 = vmul.f32 %v1716, %v1718
    %v1720 = vadd.f32 %v1716, %v1719
    %vm1721 = vweird.f32 %v1638
    %vm1722 = vweird.f32 %v1716
    %vm1723 = vmor %vm1721, %vm1722
    %v1724 = vsel %vm1723, %v1716, %v1720
    %v1725 = vand.u32 2147483647, %v1638
    %vm1726 = vcmp.eq.f32.partialorder %v1725, 8.507059e+37
    %v1727 = vand.u32 %v1638, 2147483648
    %v1728 = vor.u32 1.1754944e-38, %v1727
    %v1729 = vsel %vm1726, %v1728, %v1724
    %v1730 = vmul.f32 1.0, %v1729
    %v1731 = vrcp.pop %v1639
    %v1732 = vmul.f32 %v1639, %v1731
    %v1733 = vsub.f32 1.0, %v1732
    %v1734 = vmul.f32 %v1731, %v1733
    %v1735 = vadd.f32 %v1731, %v1734
    %vm1736 = vweird.f32 %v1639
    %vm1737 = vweird.f32 %v1731
    %vm1738 = vmor %vm1736, %vm1737
    %v1739 = vsel %vm1738, %v1731, %v1735
    %v1740 = vand.u32 2147483647, %v1639
    %vm1741 = vcmp.eq.f32.partialorder %v1740, 8.507059e+37
    %v1742 = vand.u32 %v1639, 2147483648
    %v1743 = vor.u32 1.1754944e-38, %v1742
    %v1744 = vsel %vm1741, %v1743, %v1739
    %v1745 = vmul.f32 1.0, %v1744
    %v1746 = vrcp.pop %v1640
    %v1747 = vmul.f32 %v1640, %v1746
    %v1748 = vsub.f32 1.0, %v1747
    %v1749 = vmul.f32 %v1746, %v1748
    %v1750 = vadd.f32 %v1746, %v1749
    %vm1751 = vweird.f32 %v1640
    %vm1752 = vweird.f32 %v1746
    %vm1753 = vmor %vm1751, %vm1752
    %v1754 = vsel %vm1753, %v1746, %v1750
    %v1755 = vand.u32 2147483647, %v1640
    %vm1756 = vcmp.eq.f32.partialorder %v1755, 8.507059e+37
    %v1757 = vand.u32 %v1640, 2147483648
    %v1758 = vor.u32 1.1754944e-38, %v1757
    %v1759 = vsel %vm1756, %v1758, %v1754
    %v1760 = vmul.f32 1.0, %v1759
    %v1769 = vrot.slane %v1067, 7
    %v1770 = vrot.slane %v1068, 7
    %v1771 = vrot.slane %v1069, 7
    %v1772 = vrot.slane %v1070, 7
    %v1773 = vrot.slane %v1071, 7
    %v1774 = vrot.slane %v1072, 7
    %v1775 = vrot.slane %v1073, 7
    %v1776 = vrot.slane %v1074, 7
    %v1785 = vmul.f32 %v1495, %v1769
    %v1786 = vmul.f32 %v1510, %v1770
    %v1787 = vmul.f32 %v1525, %v1771
    %v1788 = vmul.f32 %v1540, %v1772
    %v1789 = vmul.f32 %v1555, %v1773
    %v1790 = vmul.f32 %v1570, %v1774
    %v1791 = vmul.f32 %v1585, %v1775
    %v1792 = vmul.f32 %v1600, %v1776
    %v1793 = vmul.f32 %v1343, %v1601
    %v1794 = vmul.f32 %v1358, %v1602
    %v1795 = vmul.f32 %v1373, %v1603
    %v1796 = vmul.f32 %v1388, %v1604
    %v1797 = vmul.f32 %v1403, %v1605
    %v1798 = vmul.f32 %v1418, %v1606
    %v1799 = vmul.f32 %v1433, %v1607
    %v1800 = vmul.f32 %v1448, %v1608
    %v1801 = vadd.f32 %v1785, %v1793
    %v1802 = vadd.f32 %v1786, %v1794
    %v1803 = vadd.f32 %v1787, %v1795
    %v1804 = vadd.f32 %v1788, %v1796
    %v1805 = vadd.f32 %v1789, %v1797
    %v1806 = vadd.f32 %v1790, %v1798
    %v1807 = vadd.f32 %v1791, %v1799
    %v1808 = vadd.f32 %v1792, %v1800
    %v1809 = vtanh.pop %v1801
    %v1810 = vtanh.pop %v1802
    %v1811 = vtanh.pop %v1803
    %v1812 = vtanh.pop %v1804
    %v1813 = vtanh.pop %v1805
    %v1814 = vtanh.pop %v1806
    %v1815 = vtanh.pop %v1807
    %v1816 = vtanh.pop %v1808
    %v1817 = vmul.f32 %v1655, %v1809
    %v1818 = vmul.f32 %v1670, %v1810
    %v1819 = vmul.f32 %v1685, %v1811
    %v1820 = vmul.f32 %v1700, %v1812
    %v1821 = vmul.f32 %v1715, %v1813
    %v1822 = vmul.f32 %v1730, %v1814
    %v1823 = vmul.f32 %v1745, %v1815
    %v1824 = vmul.f32 %v1760, %v1816
    %v1833 = vrot.slane %v1817, 1
    %v1834 = vsel %vm1100, %v1818, %v1833
    %v1835 = vrot.slane %v1819, 7
    %v1836 = vsel %vm1103, %v1835, %v1834
    %v1837 = vrot.slane %v1820, 6
    %v1838 = vsel %vm1106, %v1837, %v1836
    %v1839 = vrot.slane %v1821, 5
    %v1840 = vsel %vm1109, %v1839, %v1838
    %v1841 = vrot.slane %v1822, 4
    %v1842 = vsel %vm1112, %v1841, %v1840
    %v1843 = vrot.slane %v1823, 3
    %v1844 = vsel %vm1115, %v1843, %v1842
    %v1845 = vrot.slane %v1824, 2
    %v1846 = vsel %vm1118, %v1845, %v1844
    %1848 = vmatpush.msra.mxu0 %v389
    %1849 = vmatpush.msra.mxu0 %v385
    %1850 = vmatpush.msra.mxu0 %v381
    %1851 = vmatpush.msra.mxu0 %v377
    %1852 = vmatpush.msra.mxu0 %v373
    %1853 = vmatpush.msra.mxu0 %v369
    %1854 = vmatpush.msra.mxu0 %v365
    %1855 = vmatpush.msra.mxu0 %v361
    %1856 = vmatpush.msra.mxu0 %v357
    %1857 = vmatpush.msra.mxu0 %v353
    %1858 = vmatpush.msra.mxu0 %v349
    %1859 = vmatpush.msra.mxu0 %v345
    %1860 = vmatpush.msra.mxu0 %v341
    %1861 = vmatpush.msra.mxu0 %v337
    %1862 = vmatpush.msra.mxu0 %v333
    %1863 = vmatpush.msra.mxu0 %v329
    %1864 = vmatmul.f32.gmra.mxu0 %v1846
    %v1865 = vpop.f32.mrf.mxu0
    %v1866 = vadd.f32 0.0, %v1865
    %1867 = vdwg.mxu0
    %1868 = vmatpush.msra.mxu0 %v390
    %1869 = vmatpush.msra.mxu0 %v386
    %1870 = vmatpush.msra.mxu0 %v382
    %1871 = vmatpush.msra.mxu0 %v378
    %1872 = vmatpush.msra.mxu0 %v374
    %1873 = vmatpush.msra.mxu0 %v370
    %1874 = vmatpush.msra.mxu0 %v366
    %1875 = vmatpush.msra.mxu0 %v362
    %1876 = vmatpush.msra.mxu0 %v358
    %1877 = vmatpush.msra.mxu0 %v354
    %1878 = vmatpush.msra.mxu0 %v350
    %1879 = vmatpush.msra.mxu0 %v346
    %1880 = vmatpush.msra.mxu0 %v342
    %1881 = vmatpush.msra.mxu0 %v338
    %1882 = vmatpush.msra.mxu0 %v334
    %1883 = vmatpush.msra.mxu0 %v330
    %1884 = vmatmul.f32.gmra.mxu0 %v1846
    %v1885 = vpop.f32.mrf.mxu0
    %v1886 = vadd.f32 0.0, %v1885
    %1887 = vdwg.mxu0
    %1888 = vmatpush.msra.mxu0 %v391
    %1889 = vmatpush.msra.mxu0 %v387
    %1890 = vmatpush.msra.mxu0 %v383
    %1891 = vmatpush.msra.mxu0 %v379
    %1892 = vmatpush.msra.mxu0 %v375
    %1893 = vmatpush.msra.mxu0 %v371
    %1894 = vmatpush.msra.mxu0 %v367
    %1895 = vmatpush.msra.mxu0 %v363
    %1896 = vmatpush.msra.mxu0 %v359
    %1897 = vmatpush.msra.mxu0 %v355
    %1898 = vmatpush.msra.mxu0 %v351
    %1899 = vmatpush.msra.mxu0 %v347
    %1900 = vmatpush.msra.mxu0 %v343
    %1901 = vmatpush.msra.mxu0 %v339
    %1902 = vmatpush.msra.mxu0 %v335
    %1903 = vmatpush.msra.mxu0 %v331
    %1904 = vmatmul.f32.gmra.mxu0 %v1846
    %v1905 = vpop.f32.mrf.mxu0
    %v1906 = vadd.f32 0.0, %v1905
    %1907 = vdwg.mxu0
    %1908 = vmatpush.msra.mxu0 %v392
    %1909 = vmatpush.msra.mxu0 %v388
    %1910 = vmatpush.msra.mxu0 %v384
    %1911 = vmatpush.msra.mxu0 %v380
    %1912 = vmatpush.msra.mxu0 %v376
    %1913 = vmatpush.msra.mxu0 %v372
    %1914 = vmatpush.msra.mxu0 %v368
    %1915 = vmatpush.msra.mxu0 %v364
    %1916 = vmatpush.msra.mxu0 %v360
    %1917 = vmatpush.msra.mxu0 %v356
    %1918 = vmatpush.msra.mxu0 %v352
    %1919 = vmatpush.msra.mxu0 %v348
    %1920 = vmatpush.msra.mxu0 %v344
    %1921 = vmatpush.msra.mxu0 %v340
    %1922 = vmatpush.msra.mxu0 %v336
    %1923 = vmatpush.msra.mxu0 %v332
    %1924 = vmatmul.f32.gmra.mxu0 %v1846
    %v1925 = vpop.f32.mrf.mxu0
    %v1926 = vadd.f32 0.0, %v1925
    %1927 = vdwg.mxu0
    %v1932 = vrot.slane %v1866, 6
    %v1933 = vrot.slane %v1886, 6
    %v1934 = vrot.slane %v1906, 6
    %v1935 = vrot.slane %v1926, 6
    %v1936 = vrot.slane %v1866, 7
    %v1937 = vrot.slane %v1886, 7
    %v1938 = vrot.slane %v1906, 7
    %v1939 = vrot.slane %v1926, 7
    %v1940 = vrot.slane %v1866, 1
    %v1941 = vrot.slane %v1886, 1
    %v1942 = vrot.slane %v1906, 1
    %v1943 = vrot.slane %v1926, 1
    %v1944 = vrot.slane %v1866, 2
    %v1945 = vrot.slane %v1886, 2
    %v1946 = vrot.slane %v1906, 2
    %v1947 = vrot.slane %v1926, 2
    %v1948 = vrot.slane %v1866, 3
    %v1949 = vrot.slane %v1886, 3
    %v1950 = vrot.slane %v1906, 3
    %v1951 = vrot.slane %v1926, 3
    %v1952 = vrot.slane %v1866, 4
    %v1953 = vrot.slane %v1886, 4
    %v1954 = vrot.slane %v1906, 4
    %v1955 = vrot.slane %v1926, 4
    %v1956 = vrot.slane %v1866, 5
    %v1957 = vrot.slane %v1886, 5
    %v1958 = vrot.slane %v1906, 5
    %v1959 = vrot.slane %v1926, 5
    %v1992 = vadd.f32 %v183, %v1932
    %v1993 = vadd.f32 %v224, %v1933
    %v1994 = vadd.f32 %v265, %v1934
    %v1995 = vadd.f32 %v306, %v1935
    %v1996 = vadd.f32 %v186, %v1936
    %v1997 = vadd.f32 %v227, %v1937
    %v1998 = vadd.f32 %v268, %v1938
    %v1999 = vadd.f32 %v309, %v1939
    %v2000 = vadd.f32 %v189, %v1866
    %v2001 = vadd.f32 %v230, %v1886
    %v2002 = vadd.f32 %v271, %v1906
    %v2003 = vadd.f32 %v312, %v1926
    %v2004 = vadd.f32 %v192, %v1940
    %v2005 = vadd.f32 %v233, %v1941
    %v2006 = vadd.f32 %v274, %v1942
    %v2007 = vadd.f32 %v315, %v1943
    %v2008 = vadd.f32 %v195, %v1944
    %v2009 = vadd.f32 %v236, %v1945
    %v2010 = vadd.f32 %v277, %v1946
    %v2011 = vadd.f32 %v318, %v1947
    %v2012 = vadd.f32 %v198, %v1948
    %v2013 = vadd.f32 %v239, %v1949
    %v2014 = vadd.f32 %v280, %v1950
    %v2015 = vadd.f32 %v321, %v1951
    %v2016 = vadd.f32 %v201, %v1952
    %v2017 = vadd.f32 %v242, %v1953
    %v2018 = vadd.f32 %v283, %v1954
    %v2019 = vadd.f32 %v324, %v1955
    %v2020 = vadd.f32 %v204, %v1956
    %v2021 = vadd.f32 %v245, %v1957
    %v2022 = vadd.f32 %v286, %v1958
    %v2023 = vadd.f32 %v327, %v1959
    %v2024 = vxor.u32 %v1992, 2147483648
    %v2025 = vxor.u32 %v1996, 2147483648
    %v2026 = vxor.u32 %v2000, 2147483648
    %v2027 = vxor.u32 %v2004, 2147483648
    %v2028 = vxor.u32 %v2008, 2147483648
    %v2029 = vxor.u32 %v2012, 2147483648
    %v2030 = vxor.u32 %v2016, 2147483648
    %v2031 = vxor.u32 %v2020, 2147483648
    %v2032 = vmul.f32 %v2024, 1.442695
    %v2033 = vpow.pop %v2032
    %v2034 = vmul.f32 %v2025, 1.442695
    %v2035 = vpow.pop %v2034
    %v2036 = vmul.f32 %v2026, 1.442695
    %v2037 = vpow.pop %v2036
    %v2038 = vmul.f32 %v2027, 1.442695
    %v2039 = vpow.pop %v2038
    %v2040 = vmul.f32 %v2028, 1.442695
    %v2041 = vpow.pop %v2040
    %v2042 = vmul.f32 %v2029, 1.442695
    %v2043 = vpow.pop %v2042
    %v2044 = vmul.f32 %v2030, 1.442695
    %v2045 = vpow.pop %v2044
    %v2046 = vmul.f32 %v2031, 1.442695
    %v2047 = vpow.pop %v2046
    %v2048 = vadd.f32 %v2033, 1.0
    %v2049 = vadd.f32 %v2035, 1.0
    %v2050 = vadd.f32 %v2037, 1.0
    %v2051 = vadd.f32 %v2039, 1.0
    %v2052 = vadd.f32 %v2041, 1.0
    %v2053 = vadd.f32 %v2043, 1.0
    %v2054 = vadd.f32 %v2045, 1.0
    %v2055 = vadd.f32 %v2047, 1.0
    %v2056 = vrcp.pop %v2048
    %v2057 = vmul.f32 %v2048, %v2056
    %v2058 = vsub.f32 1.0, %v2057
    %v2059 = vmul.f32 %v2056, %v2058
    %v2060 = vadd.f32 %v2056, %v2059
    %vm2061 = vweird.f32 %v2048
    %vm2062 = vweird.f32 %v2056
    %vm2063 = vmor %vm2061, %vm2062
    %v2064 = vsel %vm2063, %v2056, %v2060
    %v2065 = vand.u32 2147483647, %v2048
    %vm2066 = vcmp.eq.f32.partialorder %v2065, 8.507059e+37
    %v2067 = vand.u32 %v2048, 2147483648
    %v2068 = vor.u32 1.1754944e-38, %v2067
    %v2069 = vsel %vm2066, %v2068, %v2064
    %v2070 = vmul.f32 1.0, %v2069
    %v2071 = vrcp.pop %v2049
    %v2072 = vmul.f32 %v2049, %v2071
    %v2073 = vsub.f32 1.0, %v2072
    %v2074 = vmul.f32 %v2071, %v2073
    %v2075 = vadd.f32 %v2071, %v2074
    %vm2076 = vweird.f32 %v2049
    %vm2077 = vweird.f32 %v2071
    %vm2078 = vmor %vm2076, %vm2077
    %v2079 = vsel %vm2078, %v2071, %v2075
    %v2080 = vand.u32 2147483647, %v2049
    %vm2081 = vcmp.eq.f32.partialorder %v2080, 8.507059e+37
    %v2082 = vand.u32 %v2049, 2147483648
    %v2083 = vor.u32 1.1754944e-38, %v2082
    %v2084 = vsel %vm2081, %v2083, %v2079
    %v2085 = vmul.f32 1.0, %v2084
    %v2086 = vrcp.pop %v2050
    %v2087 = vmul.f32 %v2050, %v2086
    %v2088 = vsub.f32 1.0, %v2087
    %v2089 = vmul.f32 %v2086, %v2088
    %v2090 = vadd.f32 %v2086, %v2089
    %vm2091 = vweird.f32 %v2050
    %vm2092 = vweird.f32 %v2086
    %vm2093 = vmor %vm2091, %vm2092
    %v2094 = vsel %vm2093, %v2086, %v2090
    %v2095 = vand.u32 2147483647, %v2050
    %vm2096 = vcmp.eq.f32.partialorder %v2095, 8.507059e+37
    %v2097 = vand.u32 %v2050, 2147483648
    %v2098 = vor.u32 1.1754944e-38, %v2097
    %v2099 = vsel %vm2096, %v2098, %v2094
    %v2100 = vmul.f32 1.0, %v2099
    %v2101 = vrcp.pop %v2051
    %v2102 = vmul.f32 %v2051, %v2101
    %v2103 = vsub.f32 1.0, %v2102
    %v2104 = vmul.f32 %v2101, %v2103
    %v2105 = vadd.f32 %v2101, %v2104
    %vm2106 = vweird.f32 %v2051
    %vm2107 = vweird.f32 %v2101
    %vm2108 = vmor %vm2106, %vm2107
    %v2109 = vsel %vm2108, %v2101, %v2105
    %v2110 = vand.u32 2147483647, %v2051
    %vm2111 = vcmp.eq.f32.partialorder %v2110, 8.507059e+37
    %v2112 = vand.u32 %v2051, 2147483648
    %v2113 = vor.u32 1.1754944e-38, %v2112
    %v2114 = vsel %vm2111, %v2113, %v2109
    %v2115 = vmul.f32 1.0, %v2114
    %v2116 = vrcp.pop %v2052
    %v2117 = vmul.f32 %v2052, %v2116
    %v2118 = vsub.f32 1.0, %v2117
    %v2119 = vmul.f32 %v2116, %v2118
    %v2120 = vadd.f32 %v2116, %v2119
    %vm2121 = vweird.f32 %v2052
    %vm2122 = vweird.f32 %v2116
    %vm2123 = vmor %vm2121, %vm2122
    %v2124 = vsel %vm2123, %v2116, %v2120
    %v2125 = vand.u32 2147483647, %v2052
    %vm2126 = vcmp.eq.f32.partialorder %v2125, 8.507059e+37
    %v2127 = vand.u32 %v2052, 2147483648
    %v2128 = vor.u32 1.1754944e-38, %v2127
    %v2129 = vsel %vm2126, %v2128, %v2124
    %v2130 = vmul.f32 1.0, %v2129
    %v2131 = vrcp.pop %v2053
    %v2132 = vmul.f32 %v2053, %v2131
    %v2133 = vsub.f32 1.0, %v2132
    %v2134 = vmul.f32 %v2131, %v2133
    %v2135 = vadd.f32 %v2131, %v2134
    %vm2136 = vweird.f32 %v2053
    %vm2137 = vweird.f32 %v2131
    %vm2138 = vmor %vm2136, %vm2137
    %v2139 = vsel %vm2138, %v2131, %v2135
    %v2140 = vand.u32 2147483647, %v2053
    %vm2141 = vcmp.eq.f32.partialorder %v2140, 8.507059e+37
    %v2142 = vand.u32 %v2053, 2147483648
    %v2143 = vor.u32 1.1754944e-38, %v2142
    %v2144 = vsel %vm2141, %v2143, %v2139
    %v2145 = vmul.f32 1.0, %v2144
    %v2146 = vrcp.pop %v2054
    %v2147 = vmul.f32 %v2054, %v2146
    %v2148 = vsub.f32 1.0, %v2147
    %v2149 = vmul.f32 %v2146, %v2148
    %v2150 = vadd.f32 %v2146, %v2149
    %vm2151 = vweird.f32 %v2054
    %vm2152 = vweird.f32 %v2146
    %vm2153 = vmor %vm2151, %vm2152
    %v2154 = vsel %vm2153, %v2146, %v2150
    %v2155 = vand.u32 2147483647, %v2054
    %vm2156 = vcmp.eq.f32.partialorder %v2155, 8.507059e+37
    %v2157 = vand.u32 %v2054, 2147483648
    %v2158 = vor.u32 1.1754944e-38, %v2157
    %v2159 = vsel %vm2156, %v2158, %v2154
    %v2160 = vmul.f32 1.0, %v2159
    %v2161 = vrcp.pop %v2055
    %v2162 = vmul.f32 %v2055, %v2161
    %v2163 = vsub.f32 1.0, %v2162
    %v2164 = vmul.f32 %v2161, %v2163
    %v2165 = vadd.f32 %v2161, %v2164
    %vm2166 = vweird.f32 %v2055
    %vm2167 = vweird.f32 %v2161
    %vm2168 = vmor %vm2166, %vm2167
    %v2169 = vsel %vm2168, %v2161, %v2165
    %v2170 = vand.u32 2147483647, %v2055
    %vm2171 = vcmp.eq.f32.partialorder %v2170, 8.507059e+37
    %v2172 = vand.u32 %v2055, 2147483648
    %v2173 = vor.u32 1.1754944e-38, %v2172
    %v2174 = vsel %vm2171, %v2173, %v2169
    %v2175 = vmul.f32 1.0, %v2174
    %v2176 = vxor.u32 %v1993, 2147483648
    %v2177 = vxor.u32 %v1997, 2147483648
    %v2178 = vxor.u32 %v2001, 2147483648
    %v2179 = vxor.u32 %v2005, 2147483648
    %v2180 = vxor.u32 %v2009, 2147483648
    %v2181 = vxor.u32 %v2013, 2147483648
    %v2182 = vxor.u32 %v2017, 2147483648
    %v2183 = vxor.u32 %v2021, 2147483648
    %v2184 = vmul.f32 %v2176, 1.442695
    %v2185 = vpow.pop %v2184
    %v2186 = vmul.f32 %v2177, 1.442695
    %v2187 = vpow.pop %v2186
    %v2188 = vmul.f32 %v2178, 1.442695
    %v2189 = vpow.pop %v2188
    %v2190 = vmul.f32 %v2179, 1.442695
    %v2191 = vpow.pop %v2190
    %v2192 = vmul.f32 %v2180, 1.442695
    %v2193 = vpow.pop %v2192
    %v2194 = vmul.f32 %v2181, 1.442695
    %v2195 = vpow.pop %v2194
    %v2196 = vmul.f32 %v2182, 1.442695
    %v2197 = vpow.pop %v2196
    %v2198 = vmul.f32 %v2183, 1.442695
    %v2199 = vpow.pop %v2198
    %v2200 = vadd.f32 %v2185, 1.0
    %v2201 = vadd.f32 %v2187, 1.0
    %v2202 = vadd.f32 %v2189, 1.0
    %v2203 = vadd.f32 %v2191, 1.0
    %v2204 = vadd.f32 %v2193, 1.0
    %v2205 = vadd.f32 %v2195, 1.0
    %v2206 = vadd.f32 %v2197, 1.0
    %v2207 = vadd.f32 %v2199, 1.0
    %v2208 = vrcp.pop %v2200
    %v2209 = vmul.f32 %v2200, %v2208
    %v2210 = vsub.f32 1.0, %v2209
    %v2211 = vmul.f32 %v2208, %v2210
    %v2212 = vadd.f32 %v2208, %v2211
    %vm2213 = vweird.f32 %v2200
    %vm2214 = vweird.f32 %v2208
    %vm2215 = vmor %vm2213, %vm2214
    %v2216 = vsel %vm2215, %v2208, %v2212
    %v2217 = vand.u32 2147483647, %v2200
    %vm2218 = vcmp.eq.f32.partialorder %v2217, 8.507059e+37
    %v2219 = vand.u32 %v2200, 2147483648
    %v2220 = vor.u32 1.1754944e-38, %v2219
    %v2221 = vsel %vm2218, %v2220, %v2216
    %v2222 = vmul.f32 1.0, %v2221
    %v2223 = vrcp.pop %v2201
    %v2224 = vmul.f32 %v2201, %v2223
    %v2225 = vsub.f32 1.0, %v2224
    %v2226 = vmul.f32 %v2223, %v2225
    %v2227 = vadd.f32 %v2223, %v2226
    %vm2228 = vweird.f32 %v2201
    %vm2229 = vweird.f32 %v2223
    %vm2230 = vmor %vm2228, %vm2229
    %v2231 = vsel %vm2230, %v2223, %v2227
    %v2232 = vand.u32 2147483647, %v2201
    %vm2233 = vcmp.eq.f32.partialorder %v2232, 8.507059e+37
    %v2234 = vand.u32 %v2201, 2147483648
    %v2235 = vor.u32 1.1754944e-38, %v2234
    %v2236 = vsel %vm2233, %v2235, %v2231
    %v2237 = vmul.f32 1.0, %v2236
    %v2238 = vrcp.pop %v2202
    %v2239 = vmul.f32 %v2202, %v2238
    %v2240 = vsub.f32 1.0, %v2239
    %v2241 = vmul.f32 %v2238, %v2240
    %v2242 = vadd.f32 %v2238, %v2241
    %vm2243 = vweird.f32 %v2202
    %vm2244 = vweird.f32 %v2238
    %vm2245 = vmor %vm2243, %vm2244
    %v2246 = vsel %vm2245, %v2238, %v2242
    %v2247 = vand.u32 2147483647, %v2202
    %vm2248 = vcmp.eq.f32.partialorder %v2247, 8.507059e+37
    %v2249 = vand.u32 %v2202, 2147483648
    %v2250 = vor.u32 1.1754944e-38, %v2249
    %v2251 = vsel %vm2248, %v2250, %v2246
    %v2252 = vmul.f32 1.0, %v2251
    %v2253 = vrcp.pop %v2203
    %v2254 = vmul.f32 %v2203, %v2253
    %v2255 = vsub.f32 1.0, %v2254
    %v2256 = vmul.f32 %v2253, %v2255
    %v2257 = vadd.f32 %v2253, %v2256
    %vm2258 = vweird.f32 %v2203
    %vm2259 = vweird.f32 %v2253
    %vm2260 = vmor %vm2258, %vm2259
    %v2261 = vsel %vm2260, %v2253, %v2257
    %v2262 = vand.u32 2147483647, %v2203
    %vm2263 = vcmp.eq.f32.partialorder %v2262, 8.507059e+37
    %v2264 = vand.u32 %v2203, 2147483648
    %v2265 = vor.u32 1.1754944e-38, %v2264
    %v2266 = vsel %vm2263, %v2265, %v2261
    %v2267 = vmul.f32 1.0, %v2266
    %v2268 = vrcp.pop %v2204
    %v2269 = vmul.f32 %v2204, %v2268
    %v2270 = vsub.f32 1.0, %v2269
    %v2271 = vmul.f32 %v2268, %v2270
    %v2272 = vadd.f32 %v2268, %v2271
    %vm2273 = vweird.f32 %v2204
    %vm2274 = vweird.f32 %v2268
    %vm2275 = vmor %vm2273, %vm2274
    %v2276 = vsel %vm2275, %v2268, %v2272
    %v2277 = vand.u32 2147483647, %v2204
    %vm2278 = vcmp.eq.f32.partialorder %v2277, 8.507059e+37
    %v2279 = vand.u32 %v2204, 2147483648
    %v2280 = vor.u32 1.1754944e-38, %v2279
    %v2281 = vsel %vm2278, %v2280, %v2276
    %v2282 = vmul.f32 1.0, %v2281
    %v2283 = vrcp.pop %v2205
    %v2284 = vmul.f32 %v2205, %v2283
    %v2285 = vsub.f32 1.0, %v2284
    %v2286 = vmul.f32 %v2283, %v2285
    %v2287 = vadd.f32 %v2283, %v2286
    %vm2288 = vweird.f32 %v2205
    %vm2289 = vweird.f32 %v2283
    %vm2290 = vmor %vm2288, %vm2289
    %v2291 = vsel %vm2290, %v2283, %v2287
    %v2292 = vand.u32 2147483647, %v2205
    %vm2293 = vcmp.eq.f32.partialorder %v2292, 8.507059e+37
    %v2294 = vand.u32 %v2205, 2147483648
    %v2295 = vor.u32 1.1754944e-38, %v2294
    %v2296 = vsel %vm2293, %v2295, %v2291
    %v2297 = vmul.f32 1.0, %v2296
    %v2298 = vrcp.pop %v2206
    %v2299 = vmul.f32 %v2206, %v2298
    %v2300 = vsub.f32 1.0, %v2299
    %v2301 = vmul.f32 %v2298, %v2300
    %v2302 = vadd.f32 %v2298, %v2301
    %vm2303 = vweird.f32 %v2206
    %vm2304 = vweird.f32 %v2298
    %vm2305 = vmor %vm2303, %vm2304
    %v2306 = vsel %vm2305, %v2298, %v2302
    %v2307 = vand.u32 2147483647, %v2206
    %vm2308 = vcmp.eq.f32.partialorder %v2307, 8.507059e+37
    %v2309 = vand.u32 %v2206, 2147483648
    %v2310 = vor.u32 1.1754944e-38, %v2309
    %v2311 = vsel %vm2308, %v2310, %v2306
    %v2312 = vmul.f32 1.0, %v2311
    %v2313 = vrcp.pop %v2207
    %v2314 = vmul.f32 %v2207, %v2313
    %v2315 = vsub.f32 1.0, %v2314
    %v2316 = vmul.f32 %v2313, %v2315
    %v2317 = vadd.f32 %v2313, %v2316
    %vm2318 = vweird.f32 %v2207
    %vm2319 = vweird.f32 %v2313
    %vm2320 = vmor %vm2318, %vm2319
    %v2321 = vsel %vm2320, %v2313, %v2317
    %v2322 = vand.u32 2147483647, %v2207
    %vm2323 = vcmp.eq.f32.partialorder %v2322, 8.507059e+37
    %v2324 = vand.u32 %v2207, 2147483648
    %v2325 = vor.u32 1.1754944e-38, %v2324
    %v2326 = vsel %vm2323, %v2325, %v2321
    %v2327 = vmul.f32 1.0, %v2326
    %v2328 = vtanh.pop %v1994
    %v2329 = vtanh.pop %v1998
    %v2330 = vtanh.pop %v2002
    %v2331 = vtanh.pop %v2006
    %v2332 = vtanh.pop %v2010
    %v2333 = vtanh.pop %v2014
    %v2334 = vtanh.pop %v2018
    %v2335 = vtanh.pop %v2022
    %v2336 = vxor.u32 %v1995, 2147483648
    %v2337 = vxor.u32 %v1999, 2147483648
    %v2338 = vxor.u32 %v2003, 2147483648
    %v2339 = vxor.u32 %v2007, 2147483648
    %v2340 = vxor.u32 %v2011, 2147483648
    %v2341 = vxor.u32 %v2015, 2147483648
    %v2342 = vxor.u32 %v2019, 2147483648
    %v2343 = vxor.u32 %v2023, 2147483648
    %v2344 = vmul.f32 %v2336, 1.442695
    %v2345 = vpow.pop %v2344
    %v2346 = vmul.f32 %v2337, 1.442695
    %v2347 = vpow.pop %v2346
    %v2348 = vmul.f32 %v2338, 1.442695
    %v2349 = vpow.pop %v2348
    %v2350 = vmul.f32 %v2339, 1.442695
    %v2351 = vpow.pop %v2350
    %v2352 = vmul.f32 %v2340, 1.442695
    %v2353 = vpow.pop %v2352
    %v2354 = vmul.f32 %v2341, 1.442695
    %v2355 = vpow.pop %v2354
    %v2356 = vmul.f32 %v2342, 1.442695
    %v2357 = vpow.pop %v2356
    %v2358 = vmul.f32 %v2343, 1.442695
    %v2359 = vpow.pop %v2358
    %v2360 = vadd.f32 %v2345, 1.0
    %v2361 = vadd.f32 %v2347, 1.0
    %v2362 = vadd.f32 %v2349, 1.0
    %v2363 = vadd.f32 %v2351, 1.0
    %v2364 = vadd.f32 %v2353, 1.0
    %v2365 = vadd.f32 %v2355, 1.0
    %v2366 = vadd.f32 %v2357, 1.0
    %v2367 = vadd.f32 %v2359, 1.0
    %v2368 = vrcp.pop %v2360
    %v2369 = vmul.f32 %v2360, %v2368
    %v2370 = vsub.f32 1.0, %v2369
    %v2371 = vmul.f32 %v2368, %v2370
    %v2372 = vadd.f32 %v2368, %v2371
    %vm2373 = vweird.f32 %v2360
    %vm2374 = vweird.f32 %v2368
    %vm2375 = vmor %vm2373, %vm2374
    %v2376 = vsel %vm2375, %v2368, %v2372
    %v2377 = vand.u32 2147483647, %v2360
    %vm2378 = vcmp.eq.f32.partialorder %v2377, 8.507059e+37
    %v2379 = vand.u32 %v2360, 2147483648
    %v2380 = vor.u32 1.1754944e-38, %v2379
    %v2381 = vsel %vm2378, %v2380, %v2376
    %v2382 = vmul.f32 1.0, %v2381
    %v2383 = vrcp.pop %v2361
    %v2384 = vmul.f32 %v2361, %v2383
    %v2385 = vsub.f32 1.0, %v2384
    %v2386 = vmul.f32 %v2383, %v2385
    %v2387 = vadd.f32 %v2383, %v2386
    %vm2388 = vweird.f32 %v2361
    %vm2389 = vweird.f32 %v2383
    %vm2390 = vmor %vm2388, %vm2389
    %v2391 = vsel %vm2390, %v2383, %v2387
    %v2392 = vand.u32 2147483647, %v2361
    %vm2393 = vcmp.eq.f32.partialorder %v2392, 8.507059e+37
    %v2394 = vand.u32 %v2361, 2147483648
    %v2395 = vor.u32 1.1754944e-38, %v2394
    %v2396 = vsel %vm2393, %v2395, %v2391
    %v2397 = vmul.f32 1.0, %v2396
    %v2398 = vrcp.pop %v2362
    %v2399 = vmul.f32 %v2362, %v2398
    %v2400 = vsub.f32 1.0, %v2399
    %v2401 = vmul.f32 %v2398, %v2400
    %v2402 = vadd.f32 %v2398, %v2401
    %vm2403 = vweird.f32 %v2362
    %vm2404 = vweird.f32 %v2398
    %vm2405 = vmor %vm2403, %vm2404
    %v2406 = vsel %vm2405, %v2398, %v2402
    %v2407 = vand.u32 2147483647, %v2362
    %vm2408 = vcmp.eq.f32.partialorder %v2407, 8.507059e+37
    %v2409 = vand.u32 %v2362, 2147483648
    %v2410 = vor.u32 1.1754944e-38, %v2409
    %v2411 = vsel %vm2408, %v2410, %v2406
    %v2412 = vmul.f32 1.0, %v2411
    %v2413 = vrcp.pop %v2363
    %v2414 = vmul.f32 %v2363, %v2413
    %v2415 = vsub.f32 1.0, %v2414
    %v2416 = vmul.f32 %v2413, %v2415
    %v2417 = vadd.f32 %v2413, %v2416
    %vm2418 = vweird.f32 %v2363
    %vm2419 = vweird.f32 %v2413
    %vm2420 = vmor %vm2418, %vm2419
    %v2421 = vsel %vm2420, %v2413, %v2417
    %v2422 = vand.u32 2147483647, %v2363
    %vm2423 = vcmp.eq.f32.partialorder %v2422, 8.507059e+37
    %v2424 = vand.u32 %v2363, 2147483648
    %v2425 = vor.u32 1.1754944e-38, %v2424
    %v2426 = vsel %vm2423, %v2425, %v2421
    %v2427 = vmul.f32 1.0, %v2426
    %v2428 = vrcp.pop %v2364
    %v2429 = vmul.f32 %v2364, %v2428
    %v2430 = vsub.f32 1.0, %v2429
    %v2431 = vmul.f32 %v2428, %v2430
    %v2432 = vadd.f32 %v2428, %v2431
    %vm2433 = vweird.f32 %v2364
    %vm2434 = vweird.f32 %v2428
    %vm2435 = vmor %vm2433, %vm2434
    %v2436 = vsel %vm2435, %v2428, %v2432
    %v2437 = vand.u32 2147483647, %v2364
    %vm2438 = vcmp.eq.f32.partialorder %v2437, 8.507059e+37
    %v2439 = vand.u32 %v2364, 2147483648
    %v2440 = vor.u32 1.1754944e-38, %v2439
    %v2441 = vsel %vm2438, %v2440, %v2436
    %v2442 = vmul.f32 1.0, %v2441
    %v2443 = vrcp.pop %v2365
    %v2444 = vmul.f32 %v2365, %v2443
    %v2445 = vsub.f32 1.0, %v2444
    %v2446 = vmul.f32 %v2443, %v2445
    %v2447 = vadd.f32 %v2443, %v2446
    %vm2448 = vweird.f32 %v2365
    %vm2449 = vweird.f32 %v2443
    %vm2450 = vmor %vm2448, %vm2449
    %v2451 = vsel %vm2450, %v2443, %v2447
    %v2452 = vand.u32 2147483647, %v2365
    %vm2453 = vcmp.eq.f32.partialorder %v2452, 8.507059e+37
    %v2454 = vand.u32 %v2365, 2147483648
    %v2455 = vor.u32 1.1754944e-38, %v2454
    %v2456 = vsel %vm2453, %v2455, %v2451
    %v2457 = vmul.f32 1.0, %v2456
    %v2458 = vrcp.pop %v2366
    %v2459 = vmul.f32 %v2366, %v2458
    %v2460 = vsub.f32 1.0, %v2459
    %v2461 = vmul.f32 %v2458, %v2460
    %v2462 = vadd.f32 %v2458, %v2461
    %vm2463 = vweird.f32 %v2366
    %vm2464 = vweird.f32 %v2458
    %vm2465 = vmor %vm2463, %vm2464
    %v2466 = vsel %vm2465, %v2458, %v2462
    %v2467 = vand.u32 2147483647, %v2366
    %vm2468 = vcmp.eq.f32.partialorder %v2467, 8.507059e+37
    %v2469 = vand.u32 %v2366, 2147483648
    %v2470 = vor.u32 1.1754944e-38, %v2469
    %v2471 = vsel %vm2468, %v2470, %v2466
    %v2472 = vmul.f32 1.0, %v2471
    %v2473 = vrcp.pop %v2367
    %v2474 = vmul.f32 %v2367, %v2473
    %v2475 = vsub.f32 1.0, %v2474
    %v2476 = vmul.f32 %v2473, %v2475
    %v2477 = vadd.f32 %v2473, %v2476
    %vm2478 = vweird.f32 %v2367
    %vm2479 = vweird.f32 %v2473
    %vm2480 = vmor %vm2478, %vm2479
    %v2481 = vsel %vm2480, %v2473, %v2477
    %v2482 = vand.u32 2147483647, %v2367
    %vm2483 = vcmp.eq.f32.partialorder %v2482, 8.507059e+37
    %v2484 = vand.u32 %v2367, 2147483648
    %v2485 = vor.u32 1.1754944e-38, %v2484
    %v2486 = vsel %vm2483, %v2485, %v2481
    %v2487 = vmul.f32 1.0, %v2486
    %v2496 = vrot.slane %v1801, 7
    %v2497 = vrot.slane %v1802, 7
    %v2498 = vrot.slane %v1803, 7
    %v2499 = vrot.slane %v1804, 7
    %v2500 = vrot.slane %v1805, 7
    %v2501 = vrot.slane %v1806, 7
    %v2502 = vrot.slane %v1807, 7
    %v2503 = vrot.slane %v1808, 7
    %v2512 = vmul.f32 %v2222, %v2496
    %v2513 = vmul.f32 %v2237, %v2497
    %v2514 = vmul.f32 %v2252, %v2498
    %v2515 = vmul.f32 %v2267, %v2499
    %v2516 = vmul.f32 %v2282, %v2500
    %v2517 = vmul.f32 %v2297, %v2501
    %v2518 = vmul.f32 %v2312, %v2502
    %v2519 = vmul.f32 %v2327, %v2503
    %v2520 = vmul.f32 %v2070, %v2328
    %v2521 = vmul.f32 %v2085, %v2329
    %v2522 = vmul.f32 %v2100, %v2330
    %v2523 = vmul.f32 %v2115, %v2331
    %v2524 = vmul.f32 %v2130, %v2332
    %v2525 = vmul.f32 %v2145, %v2333
    %v2526 = vmul.f32 %v2160, %v2334
    %v2527 = vmul.f32 %v2175, %v2335
    %v2528 = vadd.f32 %v2512, %v2520
    %v2529 = vadd.f32 %v2513, %v2521
    %v2530 = vadd.f32 %v2514, %v2522
    %v2531 = vadd.f32 %v2515, %v2523
    %v2532 = vadd.f32 %v2516, %v2524
    %v2533 = vadd.f32 %v2517, %v2525
    %v2534 = vadd.f32 %v2518, %v2526
    %v2535 = vadd.f32 %v2519, %v2527
    %v2536 = vtanh.pop %v2528
    %v2537 = vtanh.pop %v2529
    %v2538 = vtanh.pop %v2530
    %v2539 = vtanh.pop %v2531
    %v2540 = vtanh.pop %v2532
    %v2541 = vtanh.pop %v2533
    %v2542 = vtanh.pop %v2534
    %v2543 = vtanh.pop %v2535
    %v2544 = vmul.f32 %v2382, %v2536
    %v2545 = vmul.f32 %v2397, %v2537
    %v2546 = vmul.f32 %v2412, %v2538
    %v2547 = vmul.f32 %v2427, %v2539
    %v2548 = vmul.f32 %v2442, %v2540
    %v2549 = vmul.f32 %v2457, %v2541
    %v2550 = vmul.f32 %v2472, %v2542
    %v2551 = vmul.f32 %v2487, %v2543
    %v2560 = vrot.slane %v2544, 2
    %v2561 = vrot.slane %v2545, 1
    %v2562 = vsel %vm1100, %v2561, %v2560
    %v2563 = vsel %vm1103, %v2546, %v2562
    %v2564 = vrot.slane %v2547, 7
    %v2565 = vsel %vm1106, %v2564, %v2563
    %v2566 = vrot.slane %v2548, 6
    %v2567 = vsel %vm1109, %v2566, %v2565
    %v2568 = vrot.slane %v2549, 5
    %v2569 = vsel %vm1112, %v2568, %v2567
    %v2570 = vrot.slane %v2550, 4
    %v2571 = vsel %vm1115, %v2570, %v2569
    %v2572 = vrot.slane %v2551, 3
    %v2573 = vsel %vm1118, %v2572, %v2571
    %2575 = vmatpush.msra.mxu0 %v389
    %2576 = vmatpush.msra.mxu0 %v385
    %2577 = vmatpush.msra.mxu0 %v381
    %2578 = vmatpush.msra.mxu0 %v377
    %2579 = vmatpush.msra.mxu0 %v373
    %2580 = vmatpush.msra.mxu0 %v369
    %2581 = vmatpush.msra.mxu0 %v365
    %2582 = vmatpush.msra.mxu0 %v361
    %2583 = vmatpush.msra.mxu0 %v357
    %2584 = vmatpush.msra.mxu0 %v353
    %2585 = vmatpush.msra.mxu0 %v349
    %2586 = vmatpush.msra.mxu0 %v345
    %2587 = vmatpush.msra.mxu0 %v341
    %2588 = vmatpush.msra.mxu0 %v337
    %2589 = vmatpush.msra.mxu0 %v333
    %2590 = vmatpush.msra.mxu0 %v329
    %2591 = vmatmul.f32.gmra.mxu0 %v2573
    %v2592 = vpop.f32.mrf.mxu0
    %v2593 = vadd.f32 0.0, %v2592
    %2594 = vdwg.mxu0
    %2595 = vmatpush.msra.mxu0 %v390
    %2596 = vmatpush.msra.mxu0 %v386
    %2597 = vmatpush.msra.mxu0 %v382
    %2598 = vmatpush.msra.mxu0 %v378
    %2599 = vmatpush.msra.mxu0 %v374
    %2600 = vmatpush.msra.mxu0 %v370
    %2601 = vmatpush.msra.mxu0 %v366
    %2602 = vmatpush.msra.mxu0 %v362
    %2603 = vmatpush.msra.mxu0 %v358
    %2604 = vmatpush.msra.mxu0 %v354
    %2605 = vmatpush.msra.mxu0 %v350
    %2606 = vmatpush.msra.mxu0 %v346
    %2607 = vmatpush.msra.mxu0 %v342
    %2608 = vmatpush.msra.mxu0 %v338
    %2609 = vmatpush.msra.mxu0 %v334
    %2610 = vmatpush.msra.mxu0 %v330
    %2611 = vmatmul.f32.gmra.mxu0 %v2573
    %v2612 = vpop.f32.mrf.mxu0
    %v2613 = vadd.f32 0.0, %v2612
    %2614 = vdwg.mxu0
    %2615 = vmatpush.msra.mxu0 %v391
    %2616 = vmatpush.msra.mxu0 %v387
    %2617 = vmatpush.msra.mxu0 %v383
    %2618 = vmatpush.msra.mxu0 %v379
    %2619 = vmatpush.msra.mxu0 %v375
    %2620 = vmatpush.msra.mxu0 %v371
    %2621 = vmatpush.msra.mxu0 %v367
    %2622 = vmatpush.msra.mxu0 %v363
    %2623 = vmatpush.msra.mxu0 %v359
    %2624 = vmatpush.msra.mxu0 %v355
    %2625 = vmatpush.msra.mxu0 %v351
    %2626 = vmatpush.msra.mxu0 %v347
    %2627 = vmatpush.msra.mxu0 %v343
    %2628 = vmatpush.msra.mxu0 %v339
    %2629 = vmatpush.msra.mxu0 %v335
    %2630 = vmatpush.msra.mxu0 %v331
    %2631 = vmatmul.f32.gmra.mxu0 %v2573
    %v2632 = vpop.f32.mrf.mxu0
    %v2633 = vadd.f32 0.0, %v2632
    %2634 = vdwg.mxu0
    %2635 = vmatpush.msra.mxu0 %v392
    %2636 = vmatpush.msra.mxu0 %v388
    %2637 = vmatpush.msra.mxu0 %v384
    %2638 = vmatpush.msra.mxu0 %v380
    %2639 = vmatpush.msra.mxu0 %v376
    %2640 = vmatpush.msra.mxu0 %v372
    %2641 = vmatpush.msra.mxu0 %v368
    %2642 = vmatpush.msra.mxu0 %v364
    %2643 = vmatpush.msra.mxu0 %v360
    %2644 = vmatpush.msra.mxu0 %v356
    %2645 = vmatpush.msra.mxu0 %v352
    %2646 = vmatpush.msra.mxu0 %v348
    %2647 = vmatpush.msra.mxu0 %v344
    %2648 = vmatpush.msra.mxu0 %v340
    %2649 = vmatpush.msra.mxu0 %v336
    %2650 = vmatpush.msra.mxu0 %v332
    %2651 = vmatmul.f32.gmra.mxu0 %v2573
    %v2652 = vpop.f32.mrf.mxu0
    %v2653 = vadd.f32 0.0, %v2652
    %2654 = vdwg.mxu0
    %v2659 = vrot.slane %v2593, 5
    %v2660 = vrot.slane %v2613, 5
    %v2661 = vrot.slane %v2633, 5
    %v2662 = vrot.slane %v2653, 5
    %v2663 = vrot.slane %v2593, 6
    %v2664 = vrot.slane %v2613, 6
    %v2665 = vrot.slane %v2633, 6
    %v2666 = vrot.slane %v2653, 6
    %v2667 = vrot.slane %v2593, 7
    %v2668 = vrot.slane %v2613, 7
    %v2669 = vrot.slane %v2633, 7
    %v2670 = vrot.slane %v2653, 7
    %v2671 = vrot.slane %v2593, 1
    %v2672 = vrot.slane %v2613, 1
    %v2673 = vrot.slane %v2633, 1
    %v2674 = vrot.slane %v2653, 1
    %v2675 = vrot.slane %v2593, 2
    %v2676 = vrot.slane %v2613, 2
    %v2677 = vrot.slane %v2633, 2
    %v2678 = vrot.slane %v2653, 2
    %v2679 = vrot.slane %v2593, 3
    %v2680 = vrot.slane %v2613, 3
    %v2681 = vrot.slane %v2633, 3
    %v2682 = vrot.slane %v2653, 3
    %v2683 = vrot.slane %v2593, 4
    %v2684 = vrot.slane %v2613, 4
    %v2685 = vrot.slane %v2633, 4
    %v2686 = vrot.slane %v2653, 4
    %v2719 = vadd.f32 %v183, %v2659
    %v2720 = vadd.f32 %v224, %v2660
    %v2721 = vadd.f32 %v265, %v2661
    %v2722 = vadd.f32 %v306, %v2662
    %v2723 = vadd.f32 %v186, %v2663
    %v2724 = vadd.f32 %v227, %v2664
    %v2725 = vadd.f32 %v268, %v2665
    %v2726 = vadd.f32 %v309, %v2666
    %v2727 = vadd.f32 %v189, %v2667
    %v2728 = vadd.f32 %v230, %v2668
    %v2729 = vadd.f32 %v271, %v2669
    %v2730 = vadd.f32 %v312, %v2670
    %v2731 = vadd.f32 %v192, %v2593
    %v2732 = vadd.f32 %v233, %v2613
    %v2733 = vadd.f32 %v274, %v2633
    %v2734 = vadd.f32 %v315, %v2653
    %v2735 = vadd.f32 %v195, %v2671
    %v2736 = vadd.f32 %v236, %v2672
    %v2737 = vadd.f32 %v277, %v2673
    %v2738 = vadd.f32 %v318, %v2674
    %v2739 = vadd.f32 %v198, %v2675
    %v2740 = vadd.f32 %v239, %v2676
    %v2741 = vadd.f32 %v280, %v2677
    %v2742 = vadd.f32 %v321, %v2678
    %v2743 = vadd.f32 %v201, %v2679
    %v2744 = vadd.f32 %v242, %v2680
    %v2745 = vadd.f32 %v283, %v2681
    %v2746 = vadd.f32 %v324, %v2682
    %v2747 = vadd.f32 %v204, %v2683
    %v2748 = vadd.f32 %v245, %v2684
    %v2749 = vadd.f32 %v286, %v2685
    %v2750 = vadd.f32 %v327, %v2686
    %v2751 = vxor.u32 %v2719, 2147483648
    %v2752 = vxor.u32 %v2723, 2147483648
    %v2753 = vxor.u32 %v2727, 2147483648
    %v2754 = vxor.u32 %v2731, 2147483648
    %v2755 = vxor.u32 %v2735, 2147483648
    %v2756 = vxor.u32 %v2739, 2147483648
    %v2757 = vxor.u32 %v2743, 2147483648
    %v2758 = vxor.u32 %v2747, 2147483648
    %v2759 = vmul.f32 %v2751, 1.442695
    %v2760 = vpow.pop %v2759
    %v2761 = vmul.f32 %v2752, 1.442695
    %v2762 = vpow.pop %v2761
    %v2763 = vmul.f32 %v2753, 1.442695
    %v2764 = vpow.pop %v2763
    %v2765 = vmul.f32 %v2754, 1.442695
    %v2766 = vpow.pop %v2765
    %v2767 = vmul.f32 %v2755, 1.442695
    %v2768 = vpow.pop %v2767
    %v2769 = vmul.f32 %v2756, 1.442695
    %v2770 = vpow.pop %v2769
    %v2771 = vmul.f32 %v2757, 1.442695
    %v2772 = vpow.pop %v2771
    %v2773 = vmul.f32 %v2758, 1.442695
    %v2774 = vpow.pop %v2773
    %v2775 = vadd.f32 %v2760, 1.0
    %v2776 = vadd.f32 %v2762, 1.0
    %v2777 = vadd.f32 %v2764, 1.0
    %v2778 = vadd.f32 %v2766, 1.0
    %v2779 = vadd.f32 %v2768, 1.0
    %v2780 = vadd.f32 %v2770, 1.0
    %v2781 = vadd.f32 %v2772, 1.0
    %v2782 = vadd.f32 %v2774, 1.0
    %v2783 = vrcp.pop %v2775
    %v2784 = vmul.f32 %v2775, %v2783
    %v2785 = vsub.f32 1.0, %v2784
    %v2786 = vmul.f32 %v2783, %v2785
    %v2787 = vadd.f32 %v2783, %v2786
    %vm2788 = vweird.f32 %v2775
    %vm2789 = vweird.f32 %v2783
    %vm2790 = vmor %vm2788, %vm2789
    %v2791 = vsel %vm2790, %v2783, %v2787
    %v2792 = vand.u32 2147483647, %v2775
    %vm2793 = vcmp.eq.f32.partialorder %v2792, 8.507059e+37
    %v2794 = vand.u32 %v2775, 2147483648
    %v2795 = vor.u32 1.1754944e-38, %v2794
    %v2796 = vsel %vm2793, %v2795, %v2791
    %v2797 = vmul.f32 1.0, %v2796
    %v2798 = vrcp.pop %v2776
    %v2799 = vmul.f32 %v2776, %v2798
    %v2800 = vsub.f32 1.0, %v2799
    %v2801 = vmul.f32 %v2798, %v2800
    %v2802 = vadd.f32 %v2798, %v2801
    %vm2803 = vweird.f32 %v2776
    %vm2804 = vweird.f32 %v2798
    %vm2805 = vmor %vm2803, %vm2804
    %v2806 = vsel %vm2805, %v2798, %v2802
    %v2807 = vand.u32 2147483647, %v2776
    %vm2808 = vcmp.eq.f32.partialorder %v2807, 8.507059e+37
    %v2809 = vand.u32 %v2776, 2147483648
    %v2810 = vor.u32 1.1754944e-38, %v2809
    %v2811 = vsel %vm2808, %v2810, %v2806
    %v2812 = vmul.f32 1.0, %v2811
    %v2813 = vrcp.pop %v2777
    %v2814 = vmul.f32 %v2777, %v2813
    %v2815 = vsub.f32 1.0, %v2814
    %v2816 = vmul.f32 %v2813, %v2815
    %v2817 = vadd.f32 %v2813, %v2816
    %vm2818 = vweird.f32 %v2777
    %vm2819 = vweird.f32 %v2813
    %vm2820 = vmor %vm2818, %vm2819
    %v2821 = vsel %vm2820, %v2813, %v2817
    %v2822 = vand.u32 2147483647, %v2777
    %vm2823 = vcmp.eq.f32.partialorder %v2822, 8.507059e+37
    %v2824 = vand.u32 %v2777, 2147483648
    %v2825 = vor.u32 1.1754944e-38, %v2824
    %v2826 = vsel %vm2823, %v2825, %v2821
    %v2827 = vmul.f32 1.0, %v2826
    %v2828 = vrcp.pop %v2778
    %v2829 = vmul.f32 %v2778, %v2828
    %v2830 = vsub.f32 1.0, %v2829
    %v2831 = vmul.f32 %v2828, %v2830
    %v2832 = vadd.f32 %v2828, %v2831
    %vm2833 = vweird.f32 %v2778
    %vm2834 = vweird.f32 %v2828
    %vm2835 = vmor %vm2833, %vm2834
    %v2836 = vsel %vm2835, %v2828, %v2832
    %v2837 = vand.u32 2147483647, %v2778
    %vm2838 = vcmp.eq.f32.partialorder %v2837, 8.507059e+37
    %v2839 = vand.u32 %v2778, 2147483648
    %v2840 = vor.u32 1.1754944e-38, %v2839
    %v2841 = vsel %vm2838, %v2840, %v2836
    %v2842 = vmul.f32 1.0, %v2841
    %v2843 = vrcp.pop %v2779
    %v2844 = vmul.f32 %v2779, %v2843
    %v2845 = vsub.f32 1.0, %v2844
    %v2846 = vmul.f32 %v2843, %v2845
    %v2847 = vadd.f32 %v2843, %v2846
    %vm2848 = vweird.f32 %v2779
    %vm2849 = vweird.f32 %v2843
    %vm2850 = vmor %vm2848, %vm2849
    %v2851 = vsel %vm2850, %v2843, %v2847
    %v2852 = vand.u32 2147483647, %v2779
    %vm2853 = vcmp.eq.f32.partialorder %v2852, 8.507059e+37
    %v2854 = vand.u32 %v2779, 2147483648
    %v2855 = vor.u32 1.1754944e-38, %v2854
    %v2856 = vsel %vm2853, %v2855, %v2851
    %v2857 = vmul.f32 1.0, %v2856
    %v2858 = vrcp.pop %v2780
    %v2859 = vmul.f32 %v2780, %v2858
    %v2860 = vsub.f32 1.0, %v2859
    %v2861 = vmul.f32 %v2858, %v2860
    %v2862 = vadd.f32 %v2858, %v2861
    %vm2863 = vweird.f32 %v2780
    %vm2864 = vweird.f32 %v2858
    %vm2865 = vmor %vm2863, %vm2864
    %v2866 = vsel %vm2865, %v2858, %v2862
    %v2867 = vand.u32 2147483647, %v2780
    %vm2868 = vcmp.eq.f32.partialorder %v2867, 8.507059e+37
    %v2869 = vand.u32 %v2780, 2147483648
    %v2870 = vor.u32 1.1754944e-38, %v2869
    %v2871 = vsel %vm2868, %v2870, %v2866
    %v2872 = vmul.f32 1.0, %v2871
    %v2873 = vrcp.pop %v2781
    %v2874 = vmul.f32 %v2781, %v2873
    %v2875 = vsub.f32 1.0, %v2874
    %v2876 = vmul.f32 %v2873, %v2875
    %v2877 = vadd.f32 %v2873, %v2876
    %vm2878 = vweird.f32 %v2781
    %vm2879 = vweird.f32 %v2873
    %vm2880 = vmor %vm2878, %vm2879
    %v2881 = vsel %vm2880, %v2873, %v2877
    %v2882 = vand.u32 2147483647, %v2781
    %vm2883 = vcmp.eq.f32.partialorder %v2882, 8.507059e+37
    %v2884 = vand.u32 %v2781, 2147483648
    %v2885 = vor.u32 1.1754944e-38, %v2884
    %v2886 = vsel %vm2883, %v2885, %v2881
    %v2887 = vmul.f32 1.0, %v2886
    %v2888 = vrcp.pop %v2782
    %v2889 = vmul.f32 %v2782, %v2888
    %v2890 = vsub.f32 1.0, %v2889
    %v2891 = vmul.f32 %v2888, %v2890
    %v2892 = vadd.f32 %v2888, %v2891
    %vm2893 = vweird.f32 %v2782
    %vm2894 = vweird.f32 %v2888
    %vm2895 = vmor %vm2893, %vm2894
    %v2896 = vsel %vm2895, %v2888, %v2892
    %v2897 = vand.u32 2147483647, %v2782
    %vm2898 = vcmp.eq.f32.partialorder %v2897, 8.507059e+37
    %v2899 = vand.u32 %v2782, 2147483648
    %v2900 = vor.u32 1.1754944e-38, %v2899
    %v2901 = vsel %vm2898, %v2900, %v2896
    %v2902 = vmul.f32 1.0, %v2901
    %v2903 = vxor.u32 %v2720, 2147483648
    %v2904 = vxor.u32 %v2724, 2147483648
    %v2905 = vxor.u32 %v2728, 2147483648
    %v2906 = vxor.u32 %v2732, 2147483648
    %v2907 = vxor.u32 %v2736, 2147483648
    %v2908 = vxor.u32 %v2740, 2147483648
    %v2909 = vxor.u32 %v2744, 2147483648
    %v2910 = vxor.u32 %v2748, 2147483648
    %v2911 = vmul.f32 %v2903, 1.442695
    %v2912 = vpow.pop %v2911
    %v2913 = vmul.f32 %v2904, 1.442695
    %v2914 = vpow.pop %v2913
    %v2915 = vmul.f32 %v2905, 1.442695
    %v2916 = vpow.pop %v2915
    %v2917 = vmul.f32 %v2906, 1.442695
    %v2918 = vpow.pop %v2917
    %v2919 = vmul.f32 %v2907, 1.442695
    %v2920 = vpow.pop %v2919
    %v2921 = vmul.f32 %v2908, 1.442695
    %v2922 = vpow.pop %v2921
    %v2923 = vmul.f32 %v2909, 1.442695
    %v2924 = vpow.pop %v2923
    %v2925 = vmul.f32 %v2910, 1.442695
    %v2926 = vpow.pop %v2925
    %v2927 = vadd.f32 %v2912, 1.0
    %v2928 = vadd.f32 %v2914, 1.0
    %v2929 = vadd.f32 %v2916, 1.0
    %v2930 = vadd.f32 %v2918, 1.0
    %v2931 = vadd.f32 %v2920, 1.0
    %v2932 = vadd.f32 %v2922, 1.0
    %v2933 = vadd.f32 %v2924, 1.0
    %v2934 = vadd.f32 %v2926, 1.0
    %v2935 = vrcp.pop %v2927
    %v2936 = vmul.f32 %v2927, %v2935
    %v2937 = vsub.f32 1.0, %v2936
    %v2938 = vmul.f32 %v2935, %v2937
    %v2939 = vadd.f32 %v2935, %v2938
    %vm2940 = vweird.f32 %v2927
    %vm2941 = vweird.f32 %v2935
    %vm2942 = vmor %vm2940, %vm2941
    %v2943 = vsel %vm2942, %v2935, %v2939
    %v2944 = vand.u32 2147483647, %v2927
    %vm2945 = vcmp.eq.f32.partialorder %v2944, 8.507059e+37
    %v2946 = vand.u32 %v2927, 2147483648
    %v2947 = vor.u32 1.1754944e-38, %v2946
    %v2948 = vsel %vm2945, %v2947, %v2943
    %v2949 = vmul.f32 1.0, %v2948
    %v2950 = vrcp.pop %v2928
    %v2951 = vmul.f32 %v2928, %v2950
    %v2952 = vsub.f32 1.0, %v2951
    %v2953 = vmul.f32 %v2950, %v2952
    %v2954 = vadd.f32 %v2950, %v2953
    %vm2955 = vweird.f32 %v2928
    %vm2956 = vweird.f32 %v2950
    %vm2957 = vmor %vm2955, %vm2956
    %v2958 = vsel %vm2957, %v2950, %v2954
    %v2959 = vand.u32 2147483647, %v2928
    %vm2960 = vcmp.eq.f32.partialorder %v2959, 8.507059e+37
    %v2961 = vand.u32 %v2928, 2147483648
    %v2962 = vor.u32 1.1754944e-38, %v2961
    %v2963 = vsel %vm2960, %v2962, %v2958
    %v2964 = vmul.f32 1.0, %v2963
    %v2965 = vrcp.pop %v2929
    %v2966 = vmul.f32 %v2929, %v2965
    %v2967 = vsub.f32 1.0, %v2966
    %v2968 = vmul.f32 %v2965, %v2967
    %v2969 = vadd.f32 %v2965, %v2968
    %vm2970 = vweird.f32 %v2929
    %vm2971 = vweird.f32 %v2965
    %vm2972 = vmor %vm2970, %vm2971
    %v2973 = vsel %vm2972, %v2965, %v2969
    %v2974 = vand.u32 2147483647, %v2929
    %vm2975 = vcmp.eq.f32.partialorder %v2974, 8.507059e+37
    %v2976 = vand.u32 %v2929, 2147483648
    %v2977 = vor.u32 1.1754944e-38, %v2976
    %v2978 = vsel %vm2975, %v2977, %v2973
    %v2979 = vmul.f32 1.0, %v2978
    %v2980 = vrcp.pop %v2930
    %v2981 = vmul.f32 %v2930, %v2980
    %v2982 = vsub.f32 1.0, %v2981
    %v2983 = vmul.f32 %v2980, %v2982
    %v2984 = vadd.f32 %v2980, %v2983
    %vm2985 = vweird.f32 %v2930
    %vm2986 = vweird.f32 %v2980
    %vm2987 = vmor %vm2985, %vm2986
    %v2988 = vsel %vm2987, %v2980, %v2984
    %v2989 = vand.u32 2147483647, %v2930
    %vm2990 = vcmp.eq.f32.partialorder %v2989, 8.507059e+37
    %v2991 = vand.u32 %v2930, 2147483648
    %v2992 = vor.u32 1.1754944e-38, %v2991
    %v2993 = vsel %vm2990, %v2992, %v2988
    %v2994 = vmul.f32 1.0, %v2993
    %v2995 = vrcp.pop %v2931
    %v2996 = vmul.f32 %v2931, %v2995
    %v2997 = vsub.f32 1.0, %v2996
    %v2998 = vmul.f32 %v2995, %v2997
    %v2999 = vadd.f32 %v2995, %v2998
    %vm3000 = vweird.f32 %v2931
    %vm3001 = vweird.f32 %v2995
    %vm3002 = vmor %vm3000, %vm3001
    %v3003 = vsel %vm3002, %v2995, %v2999
    %v3004 = vand.u32 2147483647, %v2931
    %vm3005 = vcmp.eq.f32.partialorder %v3004, 8.507059e+37
    %v3006 = vand.u32 %v2931, 2147483648
    %v3007 = vor.u32 1.1754944e-38, %v3006
    %v3008 = vsel %vm3005, %v3007, %v3003
    %v3009 = vmul.f32 1.0, %v3008
    %v3010 = vrcp.pop %v2932
    %v3011 = vmul.f32 %v2932, %v3010
    %v3012 = vsub.f32 1.0, %v3011
    %v3013 = vmul.f32 %v3010, %v3012
    %v3014 = vadd.f32 %v3010, %v3013
    %vm3015 = vweird.f32 %v2932
    %vm3016 = vweird.f32 %v3010
    %vm3017 = vmor %vm3015, %vm3016
    %v3018 = vsel %vm3017, %v3010, %v3014
    %v3019 = vand.u32 2147483647, %v2932
    %vm3020 = vcmp.eq.f32.partialorder %v3019, 8.507059e+37
    %v3021 = vand.u32 %v2932, 2147483648
    %v3022 = vor.u32 1.1754944e-38, %v3021
    %v3023 = vsel %vm3020, %v3022, %v3018
    %v3024 = vmul.f32 1.0, %v3023
    %v3025 = vrcp.pop %v2933
    %v3026 = vmul.f32 %v2933, %v3025
    %v3027 = vsub.f32 1.0, %v3026
    %v3028 = vmul.f32 %v3025, %v3027
    %v3029 = vadd.f32 %v3025, %v3028
    %vm3030 = vweird.f32 %v2933
    %vm3031 = vweird.f32 %v3025
    %vm3032 = vmor %vm3030, %vm3031
    %v3033 = vsel %vm3032, %v3025, %v3029
    %v3034 = vand.u32 2147483647, %v2933
    %vm3035 = vcmp.eq.f32.partialorder %v3034, 8.507059e+37
    %v3036 = vand.u32 %v2933, 2147483648
    %v3037 = vor.u32 1.1754944e-38, %v3036
    %v3038 = vsel %vm3035, %v3037, %v3033
    %v3039 = vmul.f32 1.0, %v3038
    %v3040 = vrcp.pop %v2934
    %v3041 = vmul.f32 %v2934, %v3040
    %v3042 = vsub.f32 1.0, %v3041
    %v3043 = vmul.f32 %v3040, %v3042
    %v3044 = vadd.f32 %v3040, %v3043
    %vm3045 = vweird.f32 %v2934
    %vm3046 = vweird.f32 %v3040
    %vm3047 = vmor %vm3045, %vm3046
    %v3048 = vsel %vm3047, %v3040, %v3044
    %v3049 = vand.u32 2147483647, %v2934
    %vm3050 = vcmp.eq.f32.partialorder %v3049, 8.507059e+37
    %v3051 = vand.u32 %v2934, 2147483648
    %v3052 = vor.u32 1.1754944e-38, %v3051
    %v3053 = vsel %vm3050, %v3052, %v3048
    %v3054 = vmul.f32 1.0, %v3053
    %v3055 = vtanh.pop %v2721
    %v3056 = vtanh.pop %v2725
    %v3057 = vtanh.pop %v2729
    %v3058 = vtanh.pop %v2733
    %v3059 = vtanh.pop %v2737
    %v3060 = vtanh.pop %v2741
    %v3061 = vtanh.pop %v2745
    %v3062 = vtanh.pop %v2749
    %v3063 = vxor.u32 %v2722, 2147483648
    %v3064 = vxor.u32 %v2726, 2147483648
    %v3065 = vxor.u32 %v2730, 2147483648
    %v3066 = vxor.u32 %v2734, 2147483648
    %v3067 = vxor.u32 %v2738, 2147483648
    %v3068 = vxor.u32 %v2742, 2147483648
    %v3069 = vxor.u32 %v2746, 2147483648
    %v3070 = vxor.u32 %v2750, 2147483648
    %v3071 = vmul.f32 %v3063, 1.442695
    %v3072 = vpow.pop %v3071
    %v3073 = vmul.f32 %v3064, 1.442695
    %v3074 = vpow.pop %v3073
    %v3075 = vmul.f32 %v3065, 1.442695
    %v3076 = vpow.pop %v3075
    %v3077 = vmul.f32 %v3066, 1.442695
    %v3078 = vpow.pop %v3077
    %v3079 = vmul.f32 %v3067, 1.442695
    %v3080 = vpow.pop %v3079
    %v3081 = vmul.f32 %v3068, 1.442695
    %v3082 = vpow.pop %v3081
    %v3083 = vmul.f32 %v3069, 1.442695
    %v3084 = vpow.pop %v3083
    %v3085 = vmul.f32 %v3070, 1.442695
    %v3086 = vpow.pop %v3085
    %v3087 = vadd.f32 %v3072, 1.0
    %v3088 = vadd.f32 %v3074, 1.0
    %v3089 = vadd.f32 %v3076, 1.0
    %v3090 = vadd.f32 %v3078, 1.0
    %v3091 = vadd.f32 %v3080, 1.0
    %v3092 = vadd.f32 %v3082, 1.0
    %v3093 = vadd.f32 %v3084, 1.0
    %v3094 = vadd.f32 %v3086, 1.0
    %v3095 = vrcp.pop %v3087
    %v3096 = vmul.f32 %v3087, %v3095
    %v3097 = vsub.f32 1.0, %v3096
    %v3098 = vmul.f32 %v3095, %v3097
    %v3099 = vadd.f32 %v3095, %v3098
    %vm3100 = vweird.f32 %v3087
    %vm3101 = vweird.f32 %v3095
    %vm3102 = vmor %vm3100, %vm3101
    %v3103 = vsel %vm3102, %v3095, %v3099
    %v3104 = vand.u32 2147483647, %v3087
    %vm3105 = vcmp.eq.f32.partialorder %v3104, 8.507059e+37
    %v3106 = vand.u32 %v3087, 2147483648
    %v3107 = vor.u32 1.1754944e-38, %v3106
    %v3108 = vsel %vm3105, %v3107, %v3103
    %v3109 = vmul.f32 1.0, %v3108
    %v3110 = vrcp.pop %v3088
    %v3111 = vmul.f32 %v3088, %v3110
    %v3112 = vsub.f32 1.0, %v3111
    %v3113 = vmul.f32 %v3110, %v3112
    %v3114 = vadd.f32 %v3110, %v3113
    %vm3115 = vweird.f32 %v3088
    %vm3116 = vweird.f32 %v3110
    %vm3117 = vmor %vm3115, %vm3116
    %v3118 = vsel %vm3117, %v3110, %v3114
    %v3119 = vand.u32 2147483647, %v3088
    %vm3120 = vcmp.eq.f32.partialorder %v3119, 8.507059e+37
    %v3121 = vand.u32 %v3088, 2147483648
    %v3122 = vor.u32 1.1754944e-38, %v3121
    %v3123 = vsel %vm3120, %v3122, %v3118
    %v3124 = vmul.f32 1.0, %v3123
    %v3125 = vrcp.pop %v3089
    %v3126 = vmul.f32 %v3089, %v3125
    %v3127 = vsub.f32 1.0, %v3126
    %v3128 = vmul.f32 %v3125, %v3127
    %v3129 = vadd.f32 %v3125, %v3128
    %vm3130 = vweird.f32 %v3089
    %vm3131 = vweird.f32 %v3125
    %vm3132 = vmor %vm3130, %vm3131
    %v3133 = vsel %vm3132, %v3125, %v3129
    %v3134 = vand.u32 2147483647, %v3089
    %vm3135 = vcmp.eq.f32.partialorder %v3134, 8.507059e+37
    %v3136 = vand.u32 %v3089, 2147483648
    %v3137 = vor.u32 1.1754944e-38, %v3136
    %v3138 = vsel %vm3135, %v3137, %v3133
    %v3139 = vmul.f32 1.0, %v3138
    %v3140 = vrcp.pop %v3090
    %v3141 = vmul.f32 %v3090, %v3140
    %v3142 = vsub.f32 1.0, %v3141
    %v3143 = vmul.f32 %v3140, %v3142
    %v3144 = vadd.f32 %v3140, %v3143
    %vm3145 = vweird.f32 %v3090
    %vm3146 = vweird.f32 %v3140
    %vm3147 = vmor %vm3145, %vm3146
    %v3148 = vsel %vm3147, %v3140, %v3144
    %v3149 = vand.u32 2147483647, %v3090
    %vm3150 = vcmp.eq.f32.partialorder %v3149, 8.507059e+37
    %v3151 = vand.u32 %v3090, 2147483648
    %v3152 = vor.u32 1.1754944e-38, %v3151
    %v3153 = vsel %vm3150, %v3152, %v3148
    %v3154 = vmul.f32 1.0, %v3153
    %v3155 = vrcp.pop %v3091
    %v3156 = vmul.f32 %v3091, %v3155
    %v3157 = vsub.f32 1.0, %v3156
    %v3158 = vmul.f32 %v3155, %v3157
    %v3159 = vadd.f32 %v3155, %v3158
    %vm3160 = vweird.f32 %v3091
    %vm3161 = vweird.f32 %v3155
    %vm3162 = vmor %vm3160, %vm3161
    %v3163 = vsel %vm3162, %v3155, %v3159
    %v3164 = vand.u32 2147483647, %v3091
    %vm3165 = vcmp.eq.f32.partialorder %v3164, 8.507059e+37
    %v3166 = vand.u32 %v3091, 2147483648
    %v3167 = vor.u32 1.1754944e-38, %v3166
    %v3168 = vsel %vm3165, %v3167, %v3163
    %v3169 = vmul.f32 1.0, %v3168
    %v3170 = vrcp.pop %v3092
    %v3171 = vmul.f32 %v3092, %v3170
    %v3172 = vsub.f32 1.0, %v3171
    %v3173 = vmul.f32 %v3170, %v3172
    %v3174 = vadd.f32 %v3170, %v3173
    %vm3175 = vweird.f32 %v3092
    %vm3176 = vweird.f32 %v3170
    %vm3177 = vmor %vm3175, %vm3176
    %v3178 = vsel %vm3177, %v3170, %v3174
    %v3179 = vand.u32 2147483647, %v3092
    %vm3180 = vcmp.eq.f32.partialorder %v3179, 8.507059e+37
    %v3181 = vand.u32 %v3092, 2147483648
    %v3182 = vor.u32 1.1754944e-38, %v3181
    %v3183 = vsel %vm3180, %v3182, %v3178
    %v3184 = vmul.f32 1.0, %v3183
    %v3185 = vrcp.pop %v3093
    %v3186 = vmul.f32 %v3093, %v3185
    %v3187 = vsub.f32 1.0, %v3186
    %v3188 = vmul.f32 %v3185, %v3187
    %v3189 = vadd.f32 %v3185, %v3188
    %vm3190 = vweird.f32 %v3093
    %vm3191 = vweird.f32 %v3185
    %vm3192 = vmor %vm3190, %vm3191
    %v3193 = vsel %vm3192, %v3185, %v3189
    %v3194 = vand.u32 2147483647, %v3093
    %vm3195 = vcmp.eq.f32.partialorder %v3194, 8.507059e+37
    %v3196 = vand.u32 %v3093, 2147483648
    %v3197 = vor.u32 1.1754944e-38, %v3196
    %v3198 = vsel %vm3195, %v3197, %v3193
    %v3199 = vmul.f32 1.0, %v3198
    %v3200 = vrcp.pop %v3094
    %v3201 = vmul.f32 %v3094, %v3200
    %v3202 = vsub.f32 1.0, %v3201
    %v3203 = vmul.f32 %v3200, %v3202
    %v3204 = vadd.f32 %v3200, %v3203
    %vm3205 = vweird.f32 %v3094
    %vm3206 = vweird.f32 %v3200
    %vm3207 = vmor %vm3205, %vm3206
    %v3208 = vsel %vm3207, %v3200, %v3204
    %v3209 = vand.u32 2147483647, %v3094
    %vm3210 = vcmp.eq.f32.partialorder %v3209, 8.507059e+37
    %v3211 = vand.u32 %v3094, 2147483648
    %v3212 = vor.u32 1.1754944e-38, %v3211
    %v3213 = vsel %vm3210, %v3212, %v3208
    %v3214 = vmul.f32 1.0, %v3213
    %v3223 = vrot.slane %v2528, 7
    %v3224 = vrot.slane %v2529, 7
    %v3225 = vrot.slane %v2530, 7
    %v3226 = vrot.slane %v2531, 7
    %v3227 = vrot.slane %v2532, 7
    %v3228 = vrot.slane %v2533, 7
    %v3229 = vrot.slane %v2534, 7
    %v3230 = vrot.slane %v2535, 7
    %v3239 = vmul.f32 %v2949, %v3223
    %v3240 = vmul.f32 %v2964, %v3224
    %v3241 = vmul.f32 %v2979, %v3225
    %v3242 = vmul.f32 %v2994, %v3226
    %v3243 = vmul.f32 %v3009, %v3227
    %v3244 = vmul.f32 %v3024, %v3228
    %v3245 = vmul.f32 %v3039, %v3229
    %v3246 = vmul.f32 %v3054, %v3230
    %v3247 = vmul.f32 %v2797, %v3055
    %v3248 = vmul.f32 %v2812, %v3056
    %v3249 = vmul.f32 %v2827, %v3057
    %v3250 = vmul.f32 %v2842, %v3058
    %v3251 = vmul.f32 %v2857, %v3059
    %v3252 = vmul.f32 %v2872, %v3060
    %v3253 = vmul.f32 %v2887, %v3061
    %v3254 = vmul.f32 %v2902, %v3062
    %v3255 = vadd.f32 %v3239, %v3247
    %v3256 = vadd.f32 %v3240, %v3248
    %v3257 = vadd.f32 %v3241, %v3249
    %v3258 = vadd.f32 %v3242, %v3250
    %v3259 = vadd.f32 %v3243, %v3251
    %v3260 = vadd.f32 %v3244, %v3252
    %v3261 = vadd.f32 %v3245, %v3253
    %v3262 = vadd.f32 %v3246, %v3254
    %v3263 = vtanh.pop %v3255
    %v3264 = vtanh.pop %v3256
    %v3265 = vtanh.pop %v3257
    %v3266 = vtanh.pop %v3258
    %v3267 = vtanh.pop %v3259
    %v3268 = vtanh.pop %v3260
    %v3269 = vtanh.pop %v3261
    %v3270 = vtanh.pop %v3262
    %v3271 = vmul.f32 %v3109, %v3263
    %v3272 = vmul.f32 %v3124, %v3264
    %v3273 = vmul.f32 %v3139, %v3265
    %v3274 = vmul.f32 %v3154, %v3266
    %v3275 = vmul.f32 %v3169, %v3267
    %v3276 = vmul.f32 %v3184, %v3268
    %v3277 = vmul.f32 %v3199, %v3269
    %v3278 = vmul.f32 %v3214, %v3270
    %v3287 = vrot.slane %v3271, 3
    %v3288 = vrot.slane %v3272, 2
    %v3289 = vsel %vm1100, %v3288, %v3287
    %v3290 = vrot.slane %v3273, 1
    %v3291 = vsel %vm1103, %v3290, %v3289
    %v3292 = vsel %vm1106, %v3274, %v3291
    %v3293 = vrot.slane %v3275, 7
    %v3294 = vsel %vm1109, %v3293, %v3292
    %v3295 = vrot.slane %v3276, 6
    %v3296 = vsel %vm1112, %v3295, %v3294
    %v3297 = vrot.slane %v3277, 5
    %v3298 = vsel %vm1115, %v3297, %v3296
    %v3299 = vrot.slane %v3278, 4
    %v3300 = vsel %vm1118, %v3299, %v3298
    %3302 = vmatpush.msra.mxu0 %v389
    %3303 = vmatpush.msra.mxu0 %v385
    %3304 = vmatpush.msra.mxu0 %v381
    %3305 = vmatpush.msra.mxu0 %v377
    %3306 = vmatpush.msra.mxu0 %v373
    %3307 = vmatpush.msra.mxu0 %v369
    %3308 = vmatpush.msra.mxu0 %v365
    %3309 = vmatpush.msra.mxu0 %v361
    %3310 = vmatpush.msra.mxu0 %v357
    %3311 = vmatpush.msra.mxu0 %v353
    %3312 = vmatpush.msra.mxu0 %v349
    %3313 = vmatpush.msra.mxu0 %v345
    %3314 = vmatpush.msra.mxu0 %v341
    %3315 = vmatpush.msra.mxu0 %v337
    %3316 = vmatpush.msra.mxu0 %v333
    %3317 = vmatpush.msra.mxu0 %v329
    %3318 = vmatmul.f32.gmra.mxu0 %v3300
    %v3319 = vpop.f32.mrf.mxu0
    %v3320 = vadd.f32 0.0, %v3319
    %3321 = vdwg.mxu0
    %3322 = vmatpush.msra.mxu0 %v390
    %3323 = vmatpush.msra.mxu0 %v386
    %3324 = vmatpush.msra.mxu0 %v382
    %3325 = vmatpush.msra.mxu0 %v378
    %3326 = vmatpush.msra.mxu0 %v374
    %3327 = vmatpush.msra.mxu0 %v370
    %3328 = vmatpush.msra.mxu0 %v366
    %3329 = vmatpush.msra.mxu0 %v362
    %3330 = vmatpush.msra.mxu0 %v358
    %3331 = vmatpush.msra.mxu0 %v354
    %3332 = vmatpush.msra.mxu0 %v350
    %3333 = vmatpush.msra.mxu0 %v346
    %3334 = vmatpush.msra.mxu0 %v342
    %3335 = vmatpush.msra.mxu0 %v338
    %3336 = vmatpush.msra.mxu0 %v334
    %3337 = vmatpush.msra.mxu0 %v330
    %3338 = vmatmul.f32.gmra.mxu0 %v3300
    %v3339 = vpop.f32.mrf.mxu0
    %v3340 = vadd.f32 0.0, %v3339
    %3341 = vdwg.mxu0
    %3342 = vmatpush.msra.mxu0 %v391
    %3343 = vmatpush.msra.mxu0 %v387
    %3344 = vmatpush.msra.mxu0 %v383
    %3345 = vmatpush.msra.mxu0 %v379
    %3346 = vmatpush.msra.mxu0 %v375
    %3347 = vmatpush.msra.mxu0 %v371
    %3348 = vmatpush.msra.mxu0 %v367
    %3349 = vmatpush.msra.mxu0 %v363
    %3350 = vmatpush.msra.mxu0 %v359
    %3351 = vmatpush.msra.mxu0 %v355
    %3352 = vmatpush.msra.mxu0 %v351
    %3353 = vmatpush.msra.mxu0 %v347
    %3354 = vmatpush.msra.mxu0 %v343
    %3355 = vmatpush.msra.mxu0 %v339
    %3356 = vmatpush.msra.mxu0 %v335
    %3357 = vmatpush.msra.mxu0 %v331
    %3358 = vmatmul.f32.gmra.mxu0 %v3300
    %v3359 = vpop.f32.mrf.mxu0
    %v3360 = vadd.f32 0.0, %v3359
    %3361 = vdwg.mxu0
    %3362 = vmatpush.msra.mxu0 %v392
    %3363 = vmatpush.msra.mxu0 %v388
    %3364 = vmatpush.msra.mxu0 %v384
    %3365 = vmatpush.msra.mxu0 %v380
    %3366 = vmatpush.msra.mxu0 %v376
    %3367 = vmatpush.msra.mxu0 %v372
    %3368 = vmatpush.msra.mxu0 %v368
    %3369 = vmatpush.msra.mxu0 %v364
    %3370 = vmatpush.msra.mxu0 %v360
    %3371 = vmatpush.msra.mxu0 %v356
    %3372 = vmatpush.msra.mxu0 %v352
    %3373 = vmatpush.msra.mxu0 %v348
    %3374 = vmatpush.msra.mxu0 %v344
    %3375 = vmatpush.msra.mxu0 %v340
    %3376 = vmatpush.msra.mxu0 %v336
    %3377 = vmatpush.msra.mxu0 %v332
    %3378 = vmatmul.f32.gmra.mxu0 %v3300
    %v3379 = vpop.f32.mrf.mxu0
    %v3380 = vadd.f32 0.0, %v3379
    %3381 = vdwg.mxu0
    %v3386 = vrot.slane %v3320, 4
    %v3387 = vrot.slane %v3340, 4
    %v3388 = vrot.slane %v3360, 4
    %v3389 = vrot.slane %v3380, 4
    %v3390 = vrot.slane %v3320, 5
    %v3391 = vrot.slane %v3340, 5
    %v3392 = vrot.slane %v3360, 5
    %v3393 = vrot.slane %v3380, 5
    %v3394 = vrot.slane %v3320, 6
    %v3395 = vrot.slane %v3340, 6
    %v3396 = vrot.slane %v3360, 6
    %v3397 = vrot.slane %v3380, 6
    %v3398 = vrot.slane %v3320, 7
    %v3399 = vrot.slane %v3340, 7
    %v3400 = vrot.slane %v3360, 7
    %v3401 = vrot.slane %v3380, 7
    %v3402 = vrot.slane %v3320, 1
    %v3403 = vrot.slane %v3340, 1
    %v3404 = vrot.slane %v3360, 1
    %v3405 = vrot.slane %v3380, 1
    %v3406 = vrot.slane %v3320, 2
    %v3407 = vrot.slane %v3340, 2
    %v3408 = vrot.slane %v3360, 2
    %v3409 = vrot.slane %v3380, 2
    %v3410 = vrot.slane %v3320, 3
    %v3411 = vrot.slane %v3340, 3
    %v3412 = vrot.slane %v3360, 3
    %v3413 = vrot.slane %v3380, 3
    %v3446 = vadd.f32 %v183, %v3386
    %v3447 = vadd.f32 %v224, %v3387
    %v3448 = vadd.f32 %v265, %v3388
    %v3449 = vadd.f32 %v306, %v3389
    %v3450 = vadd.f32 %v186, %v3390
    %v3451 = vadd.f32 %v227, %v3391
    %v3452 = vadd.f32 %v268, %v3392
    %v3453 = vadd.f32 %v309, %v3393
    %v3454 = vadd.f32 %v189, %v3394
    %v3455 = vadd.f32 %v230, %v3395
    %v3456 = vadd.f32 %v271, %v3396
    %v3457 = vadd.f32 %v312, %v3397
    %v3458 = vadd.f32 %v192, %v3398
    %v3459 = vadd.f32 %v233, %v3399
    %v3460 = vadd.f32 %v274, %v3400
    %v3461 = vadd.f32 %v315, %v3401
    %v3462 = vadd.f32 %v195, %v3320
    %v3463 = vadd.f32 %v236, %v3340
    %v3464 = vadd.f32 %v277, %v3360
    %v3465 = vadd.f32 %v318, %v3380
    %v3466 = vadd.f32 %v198, %v3402
    %v3467 = vadd.f32 %v239, %v3403
    %v3468 = vadd.f32 %v280, %v3404
    %v3469 = vadd.f32 %v321, %v3405
    %v3470 = vadd.f32 %v201, %v3406
    %v3471 = vadd.f32 %v242, %v3407
    %v3472 = vadd.f32 %v283, %v3408
    %v3473 = vadd.f32 %v324, %v3409
    %v3474 = vadd.f32 %v204, %v3410
    %v3475 = vadd.f32 %v245, %v3411
    %v3476 = vadd.f32 %v286, %v3412
    %v3477 = vadd.f32 %v327, %v3413
    %v3478 = vxor.u32 %v3446, 2147483648
    %v3479 = vxor.u32 %v3450, 2147483648
    %v3480 = vxor.u32 %v3454, 2147483648
    %v3481 = vxor.u32 %v3458, 2147483648
    %v3482 = vxor.u32 %v3462, 2147483648
    %v3483 = vxor.u32 %v3466, 2147483648
    %v3484 = vxor.u32 %v3470, 2147483648
    %v3485 = vxor.u32 %v3474, 2147483648
    %v3486 = vmul.f32 %v3478, 1.442695
    %v3487 = vpow.pop %v3486
    %v3488 = vmul.f32 %v3479, 1.442695
    %v3489 = vpow.pop %v3488
    %v3490 = vmul.f32 %v3480, 1.442695
    %v3491 = vpow.pop %v3490
    %v3492 = vmul.f32 %v3481, 1.442695
    %v3493 = vpow.pop %v3492
    %v3494 = vmul.f32 %v3482, 1.442695
    %v3495 = vpow.pop %v3494
    %v3496 = vmul.f32 %v3483, 1.442695
    %v3497 = vpow.pop %v3496
    %v3498 = vmul.f32 %v3484, 1.442695
    %v3499 = vpow.pop %v3498
    %v3500 = vmul.f32 %v3485, 1.442695
    %v3501 = vpow.pop %v3500
    %v3502 = vadd.f32 %v3487, 1.0
    %v3503 = vadd.f32 %v3489, 1.0
    %v3504 = vadd.f32 %v3491, 1.0
    %v3505 = vadd.f32 %v3493, 1.0
    %v3506 = vadd.f32 %v3495, 1.0
    %v3507 = vadd.f32 %v3497, 1.0
    %v3508 = vadd.f32 %v3499, 1.0
    %v3509 = vadd.f32 %v3501, 1.0
    %v3510 = vrcp.pop %v3502
    %v3511 = vmul.f32 %v3502, %v3510
    %v3512 = vsub.f32 1.0, %v3511
    %v3513 = vmul.f32 %v3510, %v3512
    %v3514 = vadd.f32 %v3510, %v3513
    %vm3515 = vweird.f32 %v3502
    %vm3516 = vweird.f32 %v3510
    %vm3517 = vmor %vm3515, %vm3516
    %v3518 = vsel %vm3517, %v3510, %v3514
    %v3519 = vand.u32 2147483647, %v3502
    %vm3520 = vcmp.eq.f32.partialorder %v3519, 8.507059e+37
    %v3521 = vand.u32 %v3502, 2147483648
    %v3522 = vor.u32 1.1754944e-38, %v3521
    %v3523 = vsel %vm3520, %v3522, %v3518
    %v3524 = vmul.f32 1.0, %v3523
    %v3525 = vrcp.pop %v3503
    %v3526 = vmul.f32 %v3503, %v3525
    %v3527 = vsub.f32 1.0, %v3526
    %v3528 = vmul.f32 %v3525, %v3527
    %v3529 = vadd.f32 %v3525, %v3528
    %vm3530 = vweird.f32 %v3503
    %vm3531 = vweird.f32 %v3525
    %vm3532 = vmor %vm3530, %vm3531
    %v3533 = vsel %vm3532, %v3525, %v3529
    %v3534 = vand.u32 2147483647, %v3503
    %vm3535 = vcmp.eq.f32.partialorder %v3534, 8.507059e+37
    %v3536 = vand.u32 %v3503, 2147483648
    %v3537 = vor.u32 1.1754944e-38, %v3536
    %v3538 = vsel %vm3535, %v3537, %v3533
    %v3539 = vmul.f32 1.0, %v3538
    %v3540 = vrcp.pop %v3504
    %v3541 = vmul.f32 %v3504, %v3540
    %v3542 = vsub.f32 1.0, %v3541
    %v3543 = vmul.f32 %v3540, %v3542
    %v3544 = vadd.f32 %v3540, %v3543
    %vm3545 = vweird.f32 %v3504
    %vm3546 = vweird.f32 %v3540
    %vm3547 = vmor %vm3545, %vm3546
    %v3548 = vsel %vm3547, %v3540, %v3544
    %v3549 = vand.u32 2147483647, %v3504
    %vm3550 = vcmp.eq.f32.partialorder %v3549, 8.507059e+37
    %v3551 = vand.u32 %v3504, 2147483648
    %v3552 = vor.u32 1.1754944e-38, %v3551
    %v3553 = vsel %vm3550, %v3552, %v3548
    %v3554 = vmul.f32 1.0, %v3553
    %v3555 = vrcp.pop %v3505
    %v3556 = vmul.f32 %v3505, %v3555
    %v3557 = vsub.f32 1.0, %v3556
    %v3558 = vmul.f32 %v3555, %v3557
    %v3559 = vadd.f32 %v3555, %v3558
    %vm3560 = vweird.f32 %v3505
    %vm3561 = vweird.f32 %v3555
    %vm3562 = vmor %vm3560, %vm3561
    %v3563 = vsel %vm3562, %v3555, %v3559
    %v3564 = vand.u32 2147483647, %v3505
    %vm3565 = vcmp.eq.f32.partialorder %v3564, 8.507059e+37
    %v3566 = vand.u32 %v3505, 2147483648
    %v3567 = vor.u32 1.1754944e-38, %v3566
    %v3568 = vsel %vm3565, %v3567, %v3563
    %v3569 = vmul.f32 1.0, %v3568
    %v3570 = vrcp.pop %v3506
    %v3571 = vmul.f32 %v3506, %v3570
    %v3572 = vsub.f32 1.0, %v3571
    %v3573 = vmul.f32 %v3570, %v3572
    %v3574 = vadd.f32 %v3570, %v3573
    %vm3575 = vweird.f32 %v3506
    %vm3576 = vweird.f32 %v3570
    %vm3577 = vmor %vm3575, %vm3576
    %v3578 = vsel %vm3577, %v3570, %v3574
    %v3579 = vand.u32 2147483647, %v3506
    %vm3580 = vcmp.eq.f32.partialorder %v3579, 8.507059e+37
    %v3581 = vand.u32 %v3506, 2147483648
    %v3582 = vor.u32 1.1754944e-38, %v3581
    %v3583 = vsel %vm3580, %v3582, %v3578
    %v3584 = vmul.f32 1.0, %v3583
    %v3585 = vrcp.pop %v3507
    %v3586 = vmul.f32 %v3507, %v3585
    %v3587 = vsub.f32 1.0, %v3586
    %v3588 = vmul.f32 %v3585, %v3587
    %v3589 = vadd.f32 %v3585, %v3588
    %vm3590 = vweird.f32 %v3507
    %vm3591 = vweird.f32 %v3585
    %vm3592 = vmor %vm3590, %vm3591
    %v3593 = vsel %vm3592, %v3585, %v3589
    %v3594 = vand.u32 2147483647, %v3507
    %vm3595 = vcmp.eq.f32.partialorder %v3594, 8.507059e+37
    %v3596 = vand.u32 %v3507, 2147483648
    %v3597 = vor.u32 1.1754944e-38, %v3596
    %v3598 = vsel %vm3595, %v3597, %v3593
    %v3599 = vmul.f32 1.0, %v3598
    %v3600 = vrcp.pop %v3508
    %v3601 = vmul.f32 %v3508, %v3600
    %v3602 = vsub.f32 1.0, %v3601
    %v3603 = vmul.f32 %v3600, %v3602
    %v3604 = vadd.f32 %v3600, %v3603
    %vm3605 = vweird.f32 %v3508
    %vm3606 = vweird.f32 %v3600
    %vm3607 = vmor %vm3605, %vm3606
    %v3608 = vsel %vm3607, %v3600, %v3604
    %v3609 = vand.u32 2147483647, %v3508
    %vm3610 = vcmp.eq.f32.partialorder %v3609, 8.507059e+37
    %v3611 = vand.u32 %v3508, 2147483648
    %v3612 = vor.u32 1.1754944e-38, %v3611
    %v3613 = vsel %vm3610, %v3612, %v3608
    %v3614 = vmul.f32 1.0, %v3613
    %v3615 = vrcp.pop %v3509
    %v3616 = vmul.f32 %v3509, %v3615
    %v3617 = vsub.f32 1.0, %v3616
    %v3618 = vmul.f32 %v3615, %v3617
    %v3619 = vadd.f32 %v3615, %v3618
    %vm3620 = vweird.f32 %v3509
    %vm3621 = vweird.f32 %v3615
    %vm3622 = vmor %vm3620, %vm3621
    %v3623 = vsel %vm3622, %v3615, %v3619
    %v3624 = vand.u32 2147483647, %v3509
    %vm3625 = vcmp.eq.f32.partialorder %v3624, 8.507059e+37
    %v3626 = vand.u32 %v3509, 2147483648
    %v3627 = vor.u32 1.1754944e-38, %v3626
    %v3628 = vsel %vm3625, %v3627, %v3623
    %v3629 = vmul.f32 1.0, %v3628
    %v3630 = vxor.u32 %v3447, 2147483648
    %v3631 = vxor.u32 %v3451, 2147483648
    %v3632 = vxor.u32 %v3455, 2147483648
    %v3633 = vxor.u32 %v3459, 2147483648
    %v3634 = vxor.u32 %v3463, 2147483648
    %v3635 = vxor.u32 %v3467, 2147483648
    %v3636 = vxor.u32 %v3471, 2147483648
    %v3637 = vxor.u32 %v3475, 2147483648
    %v3638 = vmul.f32 %v3630, 1.442695
    %v3639 = vpow.pop %v3638
    %v3640 = vmul.f32 %v3631, 1.442695
    %v3641 = vpow.pop %v3640
    %v3642 = vmul.f32 %v3632, 1.442695
    %v3643 = vpow.pop %v3642
    %v3644 = vmul.f32 %v3633, 1.442695
    %v3645 = vpow.pop %v3644
    %v3646 = vmul.f32 %v3634, 1.442695
    %v3647 = vpow.pop %v3646
    %v3648 = vmul.f32 %v3635, 1.442695
    %v3649 = vpow.pop %v3648
    %v3650 = vmul.f32 %v3636, 1.442695
    %v3651 = vpow.pop %v3650
    %v3652 = vmul.f32 %v3637, 1.442695
    %v3653 = vpow.pop %v3652
    %v3654 = vadd.f32 %v3639, 1.0
    %v3655 = vadd.f32 %v3641, 1.0
    %v3656 = vadd.f32 %v3643, 1.0
    %v3657 = vadd.f32 %v3645, 1.0
    %v3658 = vadd.f32 %v3647, 1.0
    %v3659 = vadd.f32 %v3649, 1.0
    %v3660 = vadd.f32 %v3651, 1.0
    %v3661 = vadd.f32 %v3653, 1.0
    %v3662 = vrcp.pop %v3654
    %v3663 = vmul.f32 %v3654, %v3662
    %v3664 = vsub.f32 1.0, %v3663
    %v3665 = vmul.f32 %v3662, %v3664
    %v3666 = vadd.f32 %v3662, %v3665
    %vm3667 = vweird.f32 %v3654
    %vm3668 = vweird.f32 %v3662
    %vm3669 = vmor %vm3667, %vm3668
    %v3670 = vsel %vm3669, %v3662, %v3666
    %v3671 = vand.u32 2147483647, %v3654
    %vm3672 = vcmp.eq.f32.partialorder %v3671, 8.507059e+37
    %v3673 = vand.u32 %v3654, 2147483648
    %v3674 = vor.u32 1.1754944e-38, %v3673
    %v3675 = vsel %vm3672, %v3674, %v3670
    %v3676 = vmul.f32 1.0, %v3675
    %v3677 = vrcp.pop %v3655
    %v3678 = vmul.f32 %v3655, %v3677
    %v3679 = vsub.f32 1.0, %v3678
    %v3680 = vmul.f32 %v3677, %v3679
    %v3681 = vadd.f32 %v3677, %v3680
    %vm3682 = vweird.f32 %v3655
    %vm3683 = vweird.f32 %v3677
    %vm3684 = vmor %vm3682, %vm3683
    %v3685 = vsel %vm3684, %v3677, %v3681
    %v3686 = vand.u32 2147483647, %v3655
    %vm3687 = vcmp.eq.f32.partialorder %v3686, 8.507059e+37
    %v3688 = vand.u32 %v3655, 2147483648
    %v3689 = vor.u32 1.1754944e-38, %v3688
    %v3690 = vsel %vm3687, %v3689, %v3685
    %v3691 = vmul.f32 1.0, %v3690
    %v3692 = vrcp.pop %v3656
    %v3693 = vmul.f32 %v3656, %v3692
    %v3694 = vsub.f32 1.0, %v3693
    %v3695 = vmul.f32 %v3692, %v3694
    %v3696 = vadd.f32 %v3692, %v3695
    %vm3697 = vweird.f32 %v3656
    %vm3698 = vweird.f32 %v3692
    %vm3699 = vmor %vm3697, %vm3698
    %v3700 = vsel %vm3699, %v3692, %v3696
    %v3701 = vand.u32 2147483647, %v3656
    %vm3702 = vcmp.eq.f32.partialorder %v3701, 8.507059e+37
    %v3703 = vand.u32 %v3656, 2147483648
    %v3704 = vor.u32 1.1754944e-38, %v3703
    %v3705 = vsel %vm3702, %v3704, %v3700
    %v3706 = vmul.f32 1.0, %v3705
    %v3707 = vrcp.pop %v3657
    %v3708 = vmul.f32 %v3657, %v3707
    %v3709 = vsub.f32 1.0, %v3708
    %v3710 = vmul.f32 %v3707, %v3709
    %v3711 = vadd.f32 %v3707, %v3710
    %vm3712 = vweird.f32 %v3657
    %vm3713 = vweird.f32 %v3707
    %vm3714 = vmor %vm3712, %vm3713
    %v3715 = vsel %vm3714, %v3707, %v3711
    %v3716 = vand.u32 2147483647, %v3657
    %vm3717 = vcmp.eq.f32.partialorder %v3716, 8.507059e+37
    %v3718 = vand.u32 %v3657, 2147483648
    %v3719 = vor.u32 1.1754944e-38, %v3718
    %v3720 = vsel %vm3717, %v3719, %v3715
    %v3721 = vmul.f32 1.0, %v3720
    %v3722 = vrcp.pop %v3658
    %v3723 = vmul.f32 %v3658, %v3722
    %v3724 = vsub.f32 1.0, %v3723
    %v3725 = vmul.f32 %v3722, %v3724
    %v3726 = vadd.f32 %v3722, %v3725
    %vm3727 = vweird.f32 %v3658
    %vm3728 = vweird.f32 %v3722
    %vm3729 = vmor %vm3727, %vm3728
    %v3730 = vsel %vm3729, %v3722, %v3726
    %v3731 = vand.u32 2147483647, %v3658
    %vm3732 = vcmp.eq.f32.partialorder %v3731, 8.507059e+37
    %v3733 = vand.u32 %v3658, 2147483648
    %v3734 = vor.u32 1.1754944e-38, %v3733
    %v3735 = vsel %vm3732, %v3734, %v3730
    %v3736 = vmul.f32 1.0, %v3735
    %v3737 = vrcp.pop %v3659
    %v3738 = vmul.f32 %v3659, %v3737
    %v3739 = vsub.f32 1.0, %v3738
    %v3740 = vmul.f32 %v3737, %v3739
    %v3741 = vadd.f32 %v3737, %v3740
    %vm3742 = vweird.f32 %v3659
    %vm3743 = vweird.f32 %v3737
    %vm3744 = vmor %vm3742, %vm3743
    %v3745 = vsel %vm3744, %v3737, %v3741
    %v3746 = vand.u32 2147483647, %v3659
    %vm3747 = vcmp.eq.f32.partialorder %v3746, 8.507059e+37
    %v3748 = vand.u32 %v3659, 2147483648
    %v3749 = vor.u32 1.1754944e-38, %v3748
    %v3750 = vsel %vm3747, %v3749, %v3745
    %v3751 = vmul.f32 1.0, %v3750
    %v3752 = vrcp.pop %v3660
    %v3753 = vmul.f32 %v3660, %v3752
    %v3754 = vsub.f32 1.0, %v3753
    %v3755 = vmul.f32 %v3752, %v3754
    %v3756 = vadd.f32 %v3752, %v3755
    %vm3757 = vweird.f32 %v3660
    %vm3758 = vweird.f32 %v3752
    %vm3759 = vmor %vm3757, %vm3758
    %v3760 = vsel %vm3759, %v3752, %v3756
    %v3761 = vand.u32 2147483647, %v3660
    %vm3762 = vcmp.eq.f32.partialorder %v3761, 8.507059e+37
    %v3763 = vand.u32 %v3660, 2147483648
    %v3764 = vor.u32 1.1754944e-38, %v3763
    %v3765 = vsel %vm3762, %v3764, %v3760
    %v3766 = vmul.f32 1.0, %v3765
    %v3767 = vrcp.pop %v3661
    %v3768 = vmul.f32 %v3661, %v3767
    %v3769 = vsub.f32 1.0, %v3768
    %v3770 = vmul.f32 %v3767, %v3769
    %v3771 = vadd.f32 %v3767, %v3770
    %vm3772 = vweird.f32 %v3661
    %vm3773 = vweird.f32 %v3767
    %vm3774 = vmor %vm3772, %vm3773
    %v3775 = vsel %vm3774, %v3767, %v3771
    %v3776 = vand.u32 2147483647, %v3661
    %vm3777 = vcmp.eq.f32.partialorder %v3776, 8.507059e+37
    %v3778 = vand.u32 %v3661, 2147483648
    %v3779 = vor.u32 1.1754944e-38, %v3778
    %v3780 = vsel %vm3777, %v3779, %v3775
    %v3781 = vmul.f32 1.0, %v3780
    %v3782 = vtanh.pop %v3448
    %v3783 = vtanh.pop %v3452
    %v3784 = vtanh.pop %v3456
    %v3785 = vtanh.pop %v3460
    %v3786 = vtanh.pop %v3464
    %v3787 = vtanh.pop %v3468
    %v3788 = vtanh.pop %v3472
    %v3789 = vtanh.pop %v3476
    %v3790 = vxor.u32 %v3449, 2147483648
    %v3791 = vxor.u32 %v3453, 2147483648
    %v3792 = vxor.u32 %v3457, 2147483648
    %v3793 = vxor.u32 %v3461, 2147483648
    %v3794 = vxor.u32 %v3465, 2147483648
    %v3795 = vxor.u32 %v3469, 2147483648
    %v3796 = vxor.u32 %v3473, 2147483648
    %v3797 = vxor.u32 %v3477, 2147483648
    %v3798 = vmul.f32 %v3790, 1.442695
    %v3799 = vpow.pop %v3798
    %v3800 = vmul.f32 %v3791, 1.442695
    %v3801 = vpow.pop %v3800
    %v3802 = vmul.f32 %v3792, 1.442695
    %v3803 = vpow.pop %v3802
    %v3804 = vmul.f32 %v3793, 1.442695
    %v3805 = vpow.pop %v3804
    %v3806 = vmul.f32 %v3794, 1.442695
    %v3807 = vpow.pop %v3806
    %v3808 = vmul.f32 %v3795, 1.442695
    %v3809 = vpow.pop %v3808
    %v3810 = vmul.f32 %v3796, 1.442695
    %v3811 = vpow.pop %v3810
    %v3812 = vmul.f32 %v3797, 1.442695
    %v3813 = vpow.pop %v3812
    %v3814 = vadd.f32 %v3799, 1.0
    %v3815 = vadd.f32 %v3801, 1.0
    %v3816 = vadd.f32 %v3803, 1.0
    %v3817 = vadd.f32 %v3805, 1.0
    %v3818 = vadd.f32 %v3807, 1.0
    %v3819 = vadd.f32 %v3809, 1.0
    %v3820 = vadd.f32 %v3811, 1.0
    %v3821 = vadd.f32 %v3813, 1.0
    %v3822 = vrcp.pop %v3814
    %v3823 = vmul.f32 %v3814, %v3822
    %v3824 = vsub.f32 1.0, %v3823
    %v3825 = vmul.f32 %v3822, %v3824
    %v3826 = vadd.f32 %v3822, %v3825
    %vm3827 = vweird.f32 %v3814
    %vm3828 = vweird.f32 %v3822
    %vm3829 = vmor %vm3827, %vm3828
    %v3830 = vsel %vm3829, %v3822, %v3826
    %v3831 = vand.u32 2147483647, %v3814
    %vm3832 = vcmp.eq.f32.partialorder %v3831, 8.507059e+37
    %v3833 = vand.u32 %v3814, 2147483648
    %v3834 = vor.u32 1.1754944e-38, %v3833
    %v3835 = vsel %vm3832, %v3834, %v3830
    %v3836 = vmul.f32 1.0, %v3835
    %v3837 = vrcp.pop %v3815
    %v3838 = vmul.f32 %v3815, %v3837
    %v3839 = vsub.f32 1.0, %v3838
    %v3840 = vmul.f32 %v3837, %v3839
    %v3841 = vadd.f32 %v3837, %v3840
    %vm3842 = vweird.f32 %v3815
    %vm3843 = vweird.f32 %v3837
    %vm3844 = vmor %vm3842, %vm3843
    %v3845 = vsel %vm3844, %v3837, %v3841
    %v3846 = vand.u32 2147483647, %v3815
    %vm3847 = vcmp.eq.f32.partialorder %v3846, 8.507059e+37
    %v3848 = vand.u32 %v3815, 2147483648
    %v3849 = vor.u32 1.1754944e-38, %v3848
    %v3850 = vsel %vm3847, %v3849, %v3845
    %v3851 = vmul.f32 1.0, %v3850
    %v3852 = vrcp.pop %v3816
    %v3853 = vmul.f32 %v3816, %v3852
    %v3854 = vsub.f32 1.0, %v3853
    %v3855 = vmul.f32 %v3852, %v3854
    %v3856 = vadd.f32 %v3852, %v3855
    %vm3857 = vweird.f32 %v3816
    %vm3858 = vweird.f32 %v3852
    %vm3859 = vmor %vm3857, %vm3858
    %v3860 = vsel %vm3859, %v3852, %v3856
    %v3861 = vand.u32 2147483647, %v3816
    %vm3862 = vcmp.eq.f32.partialorder %v3861, 8.507059e+37
    %v3863 = vand.u32 %v3816, 2147483648
    %v3864 = vor.u32 1.1754944e-38, %v3863
    %v3865 = vsel %vm3862, %v3864, %v3860
    %v3866 = vmul.f32 1.0, %v3865
    %v3867 = vrcp.pop %v3817
    %v3868 = vmul.f32 %v3817, %v3867
    %v3869 = vsub.f32 1.0, %v3868
    %v3870 = vmul.f32 %v3867, %v3869
    %v3871 = vadd.f32 %v3867, %v3870
    %vm3872 = vweird.f32 %v3817
    %vm3873 = vweird.f32 %v3867
    %vm3874 = vmor %vm3872, %vm3873
    %v3875 = vsel %vm3874, %v3867, %v3871
    %v3876 = vand.u32 2147483647, %v3817
    %vm3877 = vcmp.eq.f32.partialorder %v3876, 8.507059e+37
    %v3878 = vand.u32 %v3817, 2147483648
    %v3879 = vor.u32 1.1754944e-38, %v3878
    %v3880 = vsel %vm3877, %v3879, %v3875
    %v3881 = vmul.f32 1.0, %v3880
    %v3882 = vrcp.pop %v3818
    %v3883 = vmul.f32 %v3818, %v3882
    %v3884 = vsub.f32 1.0, %v3883
    %v3885 = vmul.f32 %v3882, %v3884
    %v3886 = vadd.f32 %v3882, %v3885
    %vm3887 = vweird.f32 %v3818
    %vm3888 = vweird.f32 %v3882
    %vm3889 = vmor %vm3887, %vm3888
    %v3890 = vsel %vm3889, %v3882, %v3886
    %v3891 = vand.u32 2147483647, %v3818
    %vm3892 = vcmp.eq.f32.partialorder %v3891, 8.507059e+37
    %v3893 = vand.u32 %v3818, 2147483648
    %v3894 = vor.u32 1.1754944e-38, %v3893
    %v3895 = vsel %vm3892, %v3894, %v3890
    %v3896 = vmul.f32 1.0, %v3895
    %v3897 = vrcp.pop %v3819
    %v3898 = vmul.f32 %v3819, %v3897
    %v3899 = vsub.f32 1.0, %v3898
    %v3900 = vmul.f32 %v3897, %v3899
    %v3901 = vadd.f32 %v3897, %v3900
    %vm3902 = vweird.f32 %v3819
    %vm3903 = vweird.f32 %v3897
    %vm3904 = vmor %vm3902, %vm3903
    %v3905 = vsel %vm3904, %v3897, %v3901
    %v3906 = vand.u32 2147483647, %v3819
    %vm3907 = vcmp.eq.f32.partialorder %v3906, 8.507059e+37
    %v3908 = vand.u32 %v3819, 2147483648
    %v3909 = vor.u32 1.1754944e-38, %v3908
    %v3910 = vsel %vm3907, %v3909, %v3905
    %v3911 = vmul.f32 1.0, %v3910
    %v3912 = vrcp.pop %v3820
    %v3913 = vmul.f32 %v3820, %v3912
    %v3914 = vsub.f32 1.0, %v3913
    %v3915 = vmul.f32 %v3912, %v3914
    %v3916 = vadd.f32 %v3912, %v3915
    %vm3917 = vweird.f32 %v3820
    %vm3918 = vweird.f32 %v3912
    %vm3919 = vmor %vm3917, %vm3918
    %v3920 = vsel %vm3919, %v3912, %v3916
    %v3921 = vand.u32 2147483647, %v3820
    %vm3922 = vcmp.eq.f32.partialorder %v3921, 8.507059e+37
    %v3923 = vand.u32 %v3820, 2147483648
    %v3924 = vor.u32 1.1754944e-38, %v3923
    %v3925 = vsel %vm3922, %v3924, %v3920
    %v3926 = vmul.f32 1.0, %v3925
    %v3927 = vrcp.pop %v3821
    %v3928 = vmul.f32 %v3821, %v3927
    %v3929 = vsub.f32 1.0, %v3928
    %v3930 = vmul.f32 %v3927, %v3929
    %v3931 = vadd.f32 %v3927, %v3930
    %vm3932 = vweird.f32 %v3821
    %vm3933 = vweird.f32 %v3927
    %vm3934 = vmor %vm3932, %vm3933
    %v3935 = vsel %vm3934, %v3927, %v3931
    %v3936 = vand.u32 2147483647, %v3821
    %vm3937 = vcmp.eq.f32.partialorder %v3936, 8.507059e+37
    %v3938 = vand.u32 %v3821, 2147483648
    %v3939 = vor.u32 1.1754944e-38, %v3938
    %v3940 = vsel %vm3937, %v3939, %v3935
    %v3941 = vmul.f32 1.0, %v3940
    %v3950 = vrot.slane %v3255, 7
    %v3951 = vrot.slane %v3256, 7
    %v3952 = vrot.slane %v3257, 7
    %v3953 = vrot.slane %v3258, 7
    %v3954 = vrot.slane %v3259, 7
    %v3955 = vrot.slane %v3260, 7
    %v3956 = vrot.slane %v3261, 7
    %v3957 = vrot.slane %v3262, 7
    %v3966 = vmul.f32 %v3676, %v3950
    %v3967 = vmul.f32 %v3691, %v3951
    %v3968 = vmul.f32 %v3706, %v3952
    %v3969 = vmul.f32 %v3721, %v3953
    %v3970 = vmul.f32 %v3736, %v3954
    %v3971 = vmul.f32 %v3751, %v3955
    %v3972 = vmul.f32 %v3766, %v3956
    %v3973 = vmul.f32 %v3781, %v3957
    %v3974 = vmul.f32 %v3524, %v3782
    %v3975 = vmul.f32 %v3539, %v3783
    %v3976 = vmul.f32 %v3554, %v3784
    %v3977 = vmul.f32 %v3569, %v3785
    %v3978 = vmul.f32 %v3584, %v3786
    %v3979 = vmul.f32 %v3599, %v3787
    %v3980 = vmul.f32 %v3614, %v3788
    %v3981 = vmul.f32 %v3629, %v3789
    %v3982 = vadd.f32 %v3966, %v3974
    %v3983 = vadd.f32 %v3967, %v3975
    %v3984 = vadd.f32 %v3968, %v3976
    %v3985 = vadd.f32 %v3969, %v3977
    %v3986 = vadd.f32 %v3970, %v3978
    %v3987 = vadd.f32 %v3971, %v3979
    %v3988 = vadd.f32 %v3972, %v3980
    %v3989 = vadd.f32 %v3973, %v3981
    %v3990 = vtanh.pop %v3982
    %v3991 = vtanh.pop %v3983
    %v3992 = vtanh.pop %v3984
    %v3993 = vtanh.pop %v3985
    %v3994 = vtanh.pop %v3986
    %v3995 = vtanh.pop %v3987
    %v3996 = vtanh.pop %v3988
    %v3997 = vtanh.pop %v3989
    %v3998 = vmul.f32 %v3836, %v3990
    %v3999 = vmul.f32 %v3851, %v3991
    %v4000 = vmul.f32 %v3866, %v3992
    %v4001 = vmul.f32 %v3881, %v3993
    %v4002 = vmul.f32 %v3896, %v3994
    %v4003 = vmul.f32 %v3911, %v3995
    %v4004 = vmul.f32 %v3926, %v3996
    %v4005 = vmul.f32 %v3941, %v3997
    %v4014 = vrot.slane %v3998, 4
    %v4015 = vrot.slane %v3999, 3
    %v4016 = vsel %vm1100, %v4015, %v4014
    %v4017 = vrot.slane %v4000, 2
    %v4018 = vsel %vm1103, %v4017, %v4016
    %v4019 = vrot.slane %v4001, 1
    %v4020 = vsel %vm1106, %v4019, %v4018
    %v4021 = vsel %vm1109, %v4002, %v4020
    %v4022 = vrot.slane %v4003, 7
    %v4023 = vsel %vm1112, %v4022, %v4021
    %v4024 = vrot.slane %v4004, 6
    %v4025 = vsel %vm1115, %v4024, %v4023
    %v4026 = vrot.slane %v4005, 5
    %v4027 = vsel %vm1118, %v4026, %v4025
    %4029 = vmatpush.msra.mxu0 %v389
    %4030 = vmatpush.msra.mxu0 %v385
    %4031 = vmatpush.msra.mxu0 %v381
    %4032 = vmatpush.msra.mxu0 %v377
    %4033 = vmatpush.msra.mxu0 %v373
    %4034 = vmatpush.msra.mxu0 %v369
    %4035 = vmatpush.msra.mxu0 %v365
    %4036 = vmatpush.msra.mxu0 %v361
    %4037 = vmatpush.msra.mxu0 %v357
    %4038 = vmatpush.msra.mxu0 %v353
    %4039 = vmatpush.msra.mxu0 %v349
    %4040 = vmatpush.msra.mxu0 %v345
    %4041 = vmatpush.msra.mxu0 %v341
    %4042 = vmatpush.msra.mxu0 %v337
    %4043 = vmatpush.msra.mxu0 %v333
    %4044 = vmatpush.msra.mxu0 %v329
    %4045 = vmatmul.f32.gmra.mxu0 %v4027
    %v4046 = vpop.f32.mrf.mxu0
    %v4047 = vadd.f32 0.0, %v4046
    %4048 = vdwg.mxu0
    %4049 = vmatpush.msra.mxu0 %v390
    %4050 = vmatpush.msra.mxu0 %v386
    %4051 = vmatpush.msra.mxu0 %v382
    %4052 = vmatpush.msra.mxu0 %v378
    %4053 = vmatpush.msra.mxu0 %v374
    %4054 = vmatpush.msra.mxu0 %v370
    %4055 = vmatpush.msra.mxu0 %v366
    %4056 = vmatpush.msra.mxu0 %v362
    %4057 = vmatpush.msra.mxu0 %v358
    %4058 = vmatpush.msra.mxu0 %v354
    %4059 = vmatpush.msra.mxu0 %v350
    %4060 = vmatpush.msra.mxu0 %v346
    %4061 = vmatpush.msra.mxu0 %v342
    %4062 = vmatpush.msra.mxu0 %v338
    %4063 = vmatpush.msra.mxu0 %v334
    %4064 = vmatpush.msra.mxu0 %v330
    %4065 = vmatmul.f32.gmra.mxu0 %v4027
    %v4066 = vpop.f32.mrf.mxu0
    %v4067 = vadd.f32 0.0, %v4066
    %4068 = vdwg.mxu0
    %4069 = vmatpush.msra.mxu0 %v391
    %4070 = vmatpush.msra.mxu0 %v387
    %4071 = vmatpush.msra.mxu0 %v383
    %4072 = vmatpush.msra.mxu0 %v379
    %4073 = vmatpush.msra.mxu0 %v375
    %4074 = vmatpush.msra.mxu0 %v371
    %4075 = vmatpush.msra.mxu0 %v367
    %4076 = vmatpush.msra.mxu0 %v363
    %4077 = vmatpush.msra.mxu0 %v359
    %4078 = vmatpush.msra.mxu0 %v355
    %4079 = vmatpush.msra.mxu0 %v351
    %4080 = vmatpush.msra.mxu0 %v347
    %4081 = vmatpush.msra.mxu0 %v343
    %4082 = vmatpush.msra.mxu0 %v339
    %4083 = vmatpush.msra.mxu0 %v335
    %4084 = vmatpush.msra.mxu0 %v331
    %4085 = vmatmul.f32.gmra.mxu0 %v4027
    %v4086 = vpop.f32.mrf.mxu0
    %v4087 = vadd.f32 0.0, %v4086
    %4088 = vdwg.mxu0
    %4089 = vmatpush.msra.mxu0 %v392
    %4090 = vmatpush.msra.mxu0 %v388
    %4091 = vmatpush.msra.mxu0 %v384
    %4092 = vmatpush.msra.mxu0 %v380
    %4093 = vmatpush.msra.mxu0 %v376
    %4094 = vmatpush.msra.mxu0 %v372
    %4095 = vmatpush.msra.mxu0 %v368
    %4096 = vmatpush.msra.mxu0 %v364
    %4097 = vmatpush.msra.mxu0 %v360
    %4098 = vmatpush.msra.mxu0 %v356
    %4099 = vmatpush.msra.mxu0 %v352
    %4100 = vmatpush.msra.mxu0 %v348
    %4101 = vmatpush.msra.mxu0 %v344
    %4102 = vmatpush.msra.mxu0 %v340
    %4103 = vmatpush.msra.mxu0 %v336
    %4104 = vmatpush.msra.mxu0 %v332
    %4105 = vmatmul.f32.gmra.mxu0 %v4027
    %v4106 = vpop.f32.mrf.mxu0
    %v4107 = vadd.f32 0.0, %v4106
    %4108 = vdwg.mxu0
    %v4113 = vrot.slane %v4047, 3
    %v4114 = vrot.slane %v4067, 3
    %v4115 = vrot.slane %v4087, 3
    %v4116 = vrot.slane %v4107, 3
    %v4117 = vrot.slane %v4047, 4
    %v4118 = vrot.slane %v4067, 4
    %v4119 = vrot.slane %v4087, 4
    %v4120 = vrot.slane %v4107, 4
    %v4121 = vrot.slane %v4047, 5
    %v4122 = vrot.slane %v4067, 5
    %v4123 = vrot.slane %v4087, 5
    %v4124 = vrot.slane %v4107, 5
    %v4125 = vrot.slane %v4047, 6
    %v4126 = vrot.slane %v4067, 6
    %v4127 = vrot.slane %v4087, 6
    %v4128 = vrot.slane %v4107, 6
    %v4129 = vrot.slane %v4047, 7
    %v4130 = vrot.slane %v4067, 7
    %v4131 = vrot.slane %v4087, 7
    %v4132 = vrot.slane %v4107, 7
    %v4133 = vrot.slane %v4047, 1
    %v4134 = vrot.slane %v4067, 1
    %v4135 = vrot.slane %v4087, 1
    %v4136 = vrot.slane %v4107, 1
    %v4137 = vrot.slane %v4047, 2
    %v4138 = vrot.slane %v4067, 2
    %v4139 = vrot.slane %v4087, 2
    %v4140 = vrot.slane %v4107, 2
    %v4173 = vadd.f32 %v183, %v4113
    %v4174 = vadd.f32 %v224, %v4114
    %v4175 = vadd.f32 %v265, %v4115
    %v4176 = vadd.f32 %v306, %v4116
    %v4177 = vadd.f32 %v186, %v4117
    %v4178 = vadd.f32 %v227, %v4118
    %v4179 = vadd.f32 %v268, %v4119
    %v4180 = vadd.f32 %v309, %v4120
    %v4181 = vadd.f32 %v189, %v4121
    %v4182 = vadd.f32 %v230, %v4122
    %v4183 = vadd.f32 %v271, %v4123
    %v4184 = vadd.f32 %v312, %v4124
    %v4185 = vadd.f32 %v192, %v4125
    %v4186 = vadd.f32 %v233, %v4126
    %v4187 = vadd.f32 %v274, %v4127
    %v4188 = vadd.f32 %v315, %v4128
    %v4189 = vadd.f32 %v195, %v4129
    %v4190 = vadd.f32 %v236, %v4130
    %v4191 = vadd.f32 %v277, %v4131
    %v4192 = vadd.f32 %v318, %v4132
    %v4193 = vadd.f32 %v198, %v4047
    %v4194 = vadd.f32 %v239, %v4067
    %v4195 = vadd.f32 %v280, %v4087
    %v4196 = vadd.f32 %v321, %v4107
    %v4197 = vadd.f32 %v201, %v4133
    %v4198 = vadd.f32 %v242, %v4134
    %v4199 = vadd.f32 %v283, %v4135
    %v4200 = vadd.f32 %v324, %v4136
    %v4201 = vadd.f32 %v204, %v4137
    %v4202 = vadd.f32 %v245, %v4138
    %v4203 = vadd.f32 %v286, %v4139
    %v4204 = vadd.f32 %v327, %v4140
    %v4205 = vxor.u32 %v4173, 2147483648
    %v4206 = vxor.u32 %v4177, 2147483648
    %v4207 = vxor.u32 %v4181, 2147483648
    %v4208 = vxor.u32 %v4185, 2147483648
    %v4209 = vxor.u32 %v4189, 2147483648
    %v4210 = vxor.u32 %v4193, 2147483648
    %v4211 = vxor.u32 %v4197, 2147483648
    %v4212 = vxor.u32 %v4201, 2147483648
    %v4213 = vmul.f32 %v4205, 1.442695
    %v4214 = vpow.pop %v4213
    %v4215 = vmul.f32 %v4206, 1.442695
    %v4216 = vpow.pop %v4215
    %v4217 = vmul.f32 %v4207, 1.442695
    %v4218 = vpow.pop %v4217
    %v4219 = vmul.f32 %v4208, 1.442695
    %v4220 = vpow.pop %v4219
    %v4221 = vmul.f32 %v4209, 1.442695
    %v4222 = vpow.pop %v4221
    %v4223 = vmul.f32 %v4210, 1.442695
    %v4224 = vpow.pop %v4223
    %v4225 = vmul.f32 %v4211, 1.442695
    %v4226 = vpow.pop %v4225
    %v4227 = vmul.f32 %v4212, 1.442695
    %v4228 = vpow.pop %v4227
    %v4229 = vadd.f32 %v4214, 1.0
    %v4230 = vadd.f32 %v4216, 1.0
    %v4231 = vadd.f32 %v4218, 1.0
    %v4232 = vadd.f32 %v4220, 1.0
    %v4233 = vadd.f32 %v4222, 1.0
    %v4234 = vadd.f32 %v4224, 1.0
    %v4235 = vadd.f32 %v4226, 1.0
    %v4236 = vadd.f32 %v4228, 1.0
    %v4237 = vrcp.pop %v4229
    %v4238 = vmul.f32 %v4229, %v4237
    %v4239 = vsub.f32 1.0, %v4238
    %v4240 = vmul.f32 %v4237, %v4239
    %v4241 = vadd.f32 %v4237, %v4240
    %vm4242 = vweird.f32 %v4229
    %vm4243 = vweird.f32 %v4237
    %vm4244 = vmor %vm4242, %vm4243
    %v4245 = vsel %vm4244, %v4237, %v4241
    %v4246 = vand.u32 2147483647, %v4229
    %vm4247 = vcmp.eq.f32.partialorder %v4246, 8.507059e+37
    %v4248 = vand.u32 %v4229, 2147483648
    %v4249 = vor.u32 1.1754944e-38, %v4248
    %v4250 = vsel %vm4247, %v4249, %v4245
    %v4251 = vmul.f32 1.0, %v4250
    %v4252 = vrcp.pop %v4230
    %v4253 = vmul.f32 %v4230, %v4252
    %v4254 = vsub.f32 1.0, %v4253
    %v4255 = vmul.f32 %v4252, %v4254
    %v4256 = vadd.f32 %v4252, %v4255
    %vm4257 = vweird.f32 %v4230
    %vm4258 = vweird.f32 %v4252
    %vm4259 = vmor %vm4257, %vm4258
    %v4260 = vsel %vm4259, %v4252, %v4256
    %v4261 = vand.u32 2147483647, %v4230
    %vm4262 = vcmp.eq.f32.partialorder %v4261, 8.507059e+37
    %v4263 = vand.u32 %v4230, 2147483648
    %v4264 = vor.u32 1.1754944e-38, %v4263
    %v4265 = vsel %vm4262, %v4264, %v4260
    %v4266 = vmul.f32 1.0, %v4265
    %v4267 = vrcp.pop %v4231
    %v4268 = vmul.f32 %v4231, %v4267
    %v4269 = vsub.f32 1.0, %v4268
    %v4270 = vmul.f32 %v4267, %v4269
    %v4271 = vadd.f32 %v4267, %v4270
    %vm4272 = vweird.f32 %v4231
    %vm4273 = vweird.f32 %v4267
    %vm4274 = vmor %vm4272, %vm4273
    %v4275 = vsel %vm4274, %v4267, %v4271
    %v4276 = vand.u32 2147483647, %v4231
    %vm4277 = vcmp.eq.f32.partialorder %v4276, 8.507059e+37
    %v4278 = vand.u32 %v4231, 2147483648
    %v4279 = vor.u32 1.1754944e-38, %v4278
    %v4280 = vsel %vm4277, %v4279, %v4275
    %v4281 = vmul.f32 1.0, %v4280
    %v4282 = vrcp.pop %v4232
    %v4283 = vmul.f32 %v4232, %v4282
    %v4284 = vsub.f32 1.0, %v4283
    %v4285 = vmul.f32 %v4282, %v4284
    %v4286 = vadd.f32 %v4282, %v4285
    %vm4287 = vweird.f32 %v4232
    %vm4288 = vweird.f32 %v4282
    %vm4289 = vmor %vm4287, %vm4288
    %v4290 = vsel %vm4289, %v4282, %v4286
    %v4291 = vand.u32 2147483647, %v4232
    %vm4292 = vcmp.eq.f32.partialorder %v4291, 8.507059e+37
    %v4293 = vand.u32 %v4232, 2147483648
    %v4294 = vor.u32 1.1754944e-38, %v4293
    %v4295 = vsel %vm4292, %v4294, %v4290
    %v4296 = vmul.f32 1.0, %v4295
    %v4297 = vrcp.pop %v4233
    %v4298 = vmul.f32 %v4233, %v4297
    %v4299 = vsub.f32 1.0, %v4298
    %v4300 = vmul.f32 %v4297, %v4299
    %v4301 = vadd.f32 %v4297, %v4300
    %vm4302 = vweird.f32 %v4233
    %vm4303 = vweird.f32 %v4297
    %vm4304 = vmor %vm4302, %vm4303
    %v4305 = vsel %vm4304, %v4297, %v4301
    %v4306 = vand.u32 2147483647, %v4233
    %vm4307 = vcmp.eq.f32.partialorder %v4306, 8.507059e+37
    %v4308 = vand.u32 %v4233, 2147483648
    %v4309 = vor.u32 1.1754944e-38, %v4308
    %v4310 = vsel %vm4307, %v4309, %v4305
    %v4311 = vmul.f32 1.0, %v4310
    %v4312 = vrcp.pop %v4234
    %v4313 = vmul.f32 %v4234, %v4312
    %v4314 = vsub.f32 1.0, %v4313
    %v4315 = vmul.f32 %v4312, %v4314
    %v4316 = vadd.f32 %v4312, %v4315
    %vm4317 = vweird.f32 %v4234
    %vm4318 = vweird.f32 %v4312
    %vm4319 = vmor %vm4317, %vm4318
    %v4320 = vsel %vm4319, %v4312, %v4316
    %v4321 = vand.u32 2147483647, %v4234
    %vm4322 = vcmp.eq.f32.partialorder %v4321, 8.507059e+37
    %v4323 = vand.u32 %v4234, 2147483648
    %v4324 = vor.u32 1.1754944e-38, %v4323
    %v4325 = vsel %vm4322, %v4324, %v4320
    %v4326 = vmul.f32 1.0, %v4325
    %v4327 = vrcp.pop %v4235
    %v4328 = vmul.f32 %v4235, %v4327
    %v4329 = vsub.f32 1.0, %v4328
    %v4330 = vmul.f32 %v4327, %v4329
    %v4331 = vadd.f32 %v4327, %v4330
    %vm4332 = vweird.f32 %v4235
    %vm4333 = vweird.f32 %v4327
    %vm4334 = vmor %vm4332, %vm4333
    %v4335 = vsel %vm4334, %v4327, %v4331
    %v4336 = vand.u32 2147483647, %v4235
    %vm4337 = vcmp.eq.f32.partialorder %v4336, 8.507059e+37
    %v4338 = vand.u32 %v4235, 2147483648
    %v4339 = vor.u32 1.1754944e-38, %v4338
    %v4340 = vsel %vm4337, %v4339, %v4335
    %v4341 = vmul.f32 1.0, %v4340
    %v4342 = vrcp.pop %v4236
    %v4343 = vmul.f32 %v4236, %v4342
    %v4344 = vsub.f32 1.0, %v4343
    %v4345 = vmul.f32 %v4342, %v4344
    %v4346 = vadd.f32 %v4342, %v4345
    %vm4347 = vweird.f32 %v4236
    %vm4348 = vweird.f32 %v4342
    %vm4349 = vmor %vm4347, %vm4348
    %v4350 = vsel %vm4349, %v4342, %v4346
    %v4351 = vand.u32 2147483647, %v4236
    %vm4352 = vcmp.eq.f32.partialorder %v4351, 8.507059e+37
    %v4353 = vand.u32 %v4236, 2147483648
    %v4354 = vor.u32 1.1754944e-38, %v4353
    %v4355 = vsel %vm4352, %v4354, %v4350
    %v4356 = vmul.f32 1.0, %v4355
    %v4357 = vxor.u32 %v4174, 2147483648
    %v4358 = vxor.u32 %v4178, 2147483648
    %v4359 = vxor.u32 %v4182, 2147483648
    %v4360 = vxor.u32 %v4186, 2147483648
    %v4361 = vxor.u32 %v4190, 2147483648
    %v4362 = vxor.u32 %v4194, 2147483648
    %v4363 = vxor.u32 %v4198, 2147483648
    %v4364 = vxor.u32 %v4202, 2147483648
    %v4365 = vmul.f32 %v4357, 1.442695
    %v4366 = vpow.pop %v4365
    %v4367 = vmul.f32 %v4358, 1.442695
    %v4368 = vpow.pop %v4367
    %v4369 = vmul.f32 %v4359, 1.442695
    %v4370 = vpow.pop %v4369
    %v4371 = vmul.f32 %v4360, 1.442695
    %v4372 = vpow.pop %v4371
    %v4373 = vmul.f32 %v4361, 1.442695
    %v4374 = vpow.pop %v4373
    %v4375 = vmul.f32 %v4362, 1.442695
    %v4376 = vpow.pop %v4375
    %v4377 = vmul.f32 %v4363, 1.442695
    %v4378 = vpow.pop %v4377
    %v4379 = vmul.f32 %v4364, 1.442695
    %v4380 = vpow.pop %v4379
    %v4381 = vadd.f32 %v4366, 1.0
    %v4382 = vadd.f32 %v4368, 1.0
    %v4383 = vadd.f32 %v4370, 1.0
    %v4384 = vadd.f32 %v4372, 1.0
    %v4385 = vadd.f32 %v4374, 1.0
    %v4386 = vadd.f32 %v4376, 1.0
    %v4387 = vadd.f32 %v4378, 1.0
    %v4388 = vadd.f32 %v4380, 1.0
    %v4389 = vrcp.pop %v4381
    %v4390 = vmul.f32 %v4381, %v4389
    %v4391 = vsub.f32 1.0, %v4390
    %v4392 = vmul.f32 %v4389, %v4391
    %v4393 = vadd.f32 %v4389, %v4392
    %vm4394 = vweird.f32 %v4381
    %vm4395 = vweird.f32 %v4389
    %vm4396 = vmor %vm4394, %vm4395
    %v4397 = vsel %vm4396, %v4389, %v4393
    %v4398 = vand.u32 2147483647, %v4381
    %vm4399 = vcmp.eq.f32.partialorder %v4398, 8.507059e+37
    %v4400 = vand.u32 %v4381, 2147483648
    %v4401 = vor.u32 1.1754944e-38, %v4400
    %v4402 = vsel %vm4399, %v4401, %v4397
    %v4403 = vmul.f32 1.0, %v4402
    %v4404 = vrcp.pop %v4382
    %v4405 = vmul.f32 %v4382, %v4404
    %v4406 = vsub.f32 1.0, %v4405
    %v4407 = vmul.f32 %v4404, %v4406
    %v4408 = vadd.f32 %v4404, %v4407
    %vm4409 = vweird.f32 %v4382
    %vm4410 = vweird.f32 %v4404
    %vm4411 = vmor %vm4409, %vm4410
    %v4412 = vsel %vm4411, %v4404, %v4408
    %v4413 = vand.u32 2147483647, %v4382
    %vm4414 = vcmp.eq.f32.partialorder %v4413, 8.507059e+37
    %v4415 = vand.u32 %v4382, 2147483648
    %v4416 = vor.u32 1.1754944e-38, %v4415
    %v4417 = vsel %vm4414, %v4416, %v4412
    %v4418 = vmul.f32 1.0, %v4417
    %v4419 = vrcp.pop %v4383
    %v4420 = vmul.f32 %v4383, %v4419
    %v4421 = vsub.f32 1.0, %v4420
    %v4422 = vmul.f32 %v4419, %v4421
    %v4423 = vadd.f32 %v4419, %v4422
    %vm4424 = vweird.f32 %v4383
    %vm4425 = vweird.f32 %v4419
    %vm4426 = vmor %vm4424, %vm4425
    %v4427 = vsel %vm4426, %v4419, %v4423
    %v4428 = vand.u32 2147483647, %v4383
    %vm4429 = vcmp.eq.f32.partialorder %v4428, 8.507059e+37
    %v4430 = vand.u32 %v4383, 2147483648
    %v4431 = vor.u32 1.1754944e-38, %v4430
    %v4432 = vsel %vm4429, %v4431, %v4427
    %v4433 = vmul.f32 1.0, %v4432
    %v4434 = vrcp.pop %v4384
    %v4435 = vmul.f32 %v4384, %v4434
    %v4436 = vsub.f32 1.0, %v4435
    %v4437 = vmul.f32 %v4434, %v4436
    %v4438 = vadd.f32 %v4434, %v4437
    %vm4439 = vweird.f32 %v4384
    %vm4440 = vweird.f32 %v4434
    %vm4441 = vmor %vm4439, %vm4440
    %v4442 = vsel %vm4441, %v4434, %v4438
    %v4443 = vand.u32 2147483647, %v4384
    %vm4444 = vcmp.eq.f32.partialorder %v4443, 8.507059e+37
    %v4445 = vand.u32 %v4384, 2147483648
    %v4446 = vor.u32 1.1754944e-38, %v4445
    %v4447 = vsel %vm4444, %v4446, %v4442
    %v4448 = vmul.f32 1.0, %v4447
    %v4449 = vrcp.pop %v4385
    %v4450 = vmul.f32 %v4385, %v4449
    %v4451 = vsub.f32 1.0, %v4450
    %v4452 = vmul.f32 %v4449, %v4451
    %v4453 = vadd.f32 %v4449, %v4452
    %vm4454 = vweird.f32 %v4385
    %vm4455 = vweird.f32 %v4449
    %vm4456 = vmor %vm4454, %vm4455
    %v4457 = vsel %vm4456, %v4449, %v4453
    %v4458 = vand.u32 2147483647, %v4385
    %vm4459 = vcmp.eq.f32.partialorder %v4458, 8.507059e+37
    %v4460 = vand.u32 %v4385, 2147483648
    %v4461 = vor.u32 1.1754944e-38, %v4460
    %v4462 = vsel %vm4459, %v4461, %v4457
    %v4463 = vmul.f32 1.0, %v4462
    %v4464 = vrcp.pop %v4386
    %v4465 = vmul.f32 %v4386, %v4464
    %v4466 = vsub.f32 1.0, %v4465
    %v4467 = vmul.f32 %v4464, %v4466
    %v4468 = vadd.f32 %v4464, %v4467
    %vm4469 = vweird.f32 %v4386
    %vm4470 = vweird.f32 %v4464
    %vm4471 = vmor %vm4469, %vm4470
    %v4472 = vsel %vm4471, %v4464, %v4468
    %v4473 = vand.u32 2147483647, %v4386
    %vm4474 = vcmp.eq.f32.partialorder %v4473, 8.507059e+37
    %v4475 = vand.u32 %v4386, 2147483648
    %v4476 = vor.u32 1.1754944e-38, %v4475
    %v4477 = vsel %vm4474, %v4476, %v4472
    %v4478 = vmul.f32 1.0, %v4477
    %v4479 = vrcp.pop %v4387
    %v4480 = vmul.f32 %v4387, %v4479
    %v4481 = vsub.f32 1.0, %v4480
    %v4482 = vmul.f32 %v4479, %v4481
    %v4483 = vadd.f32 %v4479, %v4482
    %vm4484 = vweird.f32 %v4387
    %vm4485 = vweird.f32 %v4479
    %vm4486 = vmor %vm4484, %vm4485
    %v4487 = vsel %vm4486, %v4479, %v4483
    %v4488 = vand.u32 2147483647, %v4387
    %vm4489 = vcmp.eq.f32.partialorder %v4488, 8.507059e+37
    %v4490 = vand.u32 %v4387, 2147483648
    %v4491 = vor.u32 1.1754944e-38, %v4490
    %v4492 = vsel %vm4489, %v4491, %v4487
    %v4493 = vmul.f32 1.0, %v4492
    %v4494 = vrcp.pop %v4388
    %v4495 = vmul.f32 %v4388, %v4494
    %v4496 = vsub.f32 1.0, %v4495
    %v4497 = vmul.f32 %v4494, %v4496
    %v4498 = vadd.f32 %v4494, %v4497
    %vm4499 = vweird.f32 %v4388
    %vm4500 = vweird.f32 %v4494
    %vm4501 = vmor %vm4499, %vm4500
    %v4502 = vsel %vm4501, %v4494, %v4498
    %v4503 = vand.u32 2147483647, %v4388
    %vm4504 = vcmp.eq.f32.partialorder %v4503, 8.507059e+37
    %v4505 = vand.u32 %v4388, 2147483648
    %v4506 = vor.u32 1.1754944e-38, %v4505
    %v4507 = vsel %vm4504, %v4506, %v4502
    %v4508 = vmul.f32 1.0, %v4507
    %v4509 = vtanh.pop %v4175
    %v4510 = vtanh.pop %v4179
    %v4511 = vtanh.pop %v4183
    %v4512 = vtanh.pop %v4187
    %v4513 = vtanh.pop %v4191
    %v4514 = vtanh.pop %v4195
    %v4515 = vtanh.pop %v4199
    %v4516 = vtanh.pop %v4203
    %v4517 = vxor.u32 %v4176, 2147483648
    %v4518 = vxor.u32 %v4180, 2147483648
    %v4519 = vxor.u32 %v4184, 2147483648
    %v4520 = vxor.u32 %v4188, 2147483648
    %v4521 = vxor.u32 %v4192, 2147483648
    %v4522 = vxor.u32 %v4196, 2147483648
    %v4523 = vxor.u32 %v4200, 2147483648
    %v4524 = vxor.u32 %v4204, 2147483648
    %v4525 = vmul.f32 %v4517, 1.442695
    %v4526 = vpow.pop %v4525
    %v4527 = vmul.f32 %v4518, 1.442695
    %v4528 = vpow.pop %v4527
    %v4529 = vmul.f32 %v4519, 1.442695
    %v4530 = vpow.pop %v4529
    %v4531 = vmul.f32 %v4520, 1.442695
    %v4532 = vpow.pop %v4531
    %v4533 = vmul.f32 %v4521, 1.442695
    %v4534 = vpow.pop %v4533
    %v4535 = vmul.f32 %v4522, 1.442695
    %v4536 = vpow.pop %v4535
    %v4537 = vmul.f32 %v4523, 1.442695
    %v4538 = vpow.pop %v4537
    %v4539 = vmul.f32 %v4524, 1.442695
    %v4540 = vpow.pop %v4539
    %v4541 = vadd.f32 %v4526, 1.0
    %v4542 = vadd.f32 %v4528, 1.0
    %v4543 = vadd.f32 %v4530, 1.0
    %v4544 = vadd.f32 %v4532, 1.0
    %v4545 = vadd.f32 %v4534, 1.0
    %v4546 = vadd.f32 %v4536, 1.0
    %v4547 = vadd.f32 %v4538, 1.0
    %v4548 = vadd.f32 %v4540, 1.0
    %v4549 = vrcp.pop %v4541
    %v4550 = vmul.f32 %v4541, %v4549
    %v4551 = vsub.f32 1.0, %v4550
    %v4552 = vmul.f32 %v4549, %v4551
    %v4553 = vadd.f32 %v4549, %v4552
    %vm4554 = vweird.f32 %v4541
    %vm4555 = vweird.f32 %v4549
    %vm4556 = vmor %vm4554, %vm4555
    %v4557 = vsel %vm4556, %v4549, %v4553
    %v4558 = vand.u32 2147483647, %v4541
    %vm4559 = vcmp.eq.f32.partialorder %v4558, 8.507059e+37
    %v4560 = vand.u32 %v4541, 2147483648
    %v4561 = vor.u32 1.1754944e-38, %v4560
    %v4562 = vsel %vm4559, %v4561, %v4557
    %v4563 = vmul.f32 1.0, %v4562
    %v4564 = vrcp.pop %v4542
    %v4565 = vmul.f32 %v4542, %v4564
    %v4566 = vsub.f32 1.0, %v4565
    %v4567 = vmul.f32 %v4564, %v4566
    %v4568 = vadd.f32 %v4564, %v4567
    %vm4569 = vweird.f32 %v4542
    %vm4570 = vweird.f32 %v4564
    %vm4571 = vmor %vm4569, %vm4570
    %v4572 = vsel %vm4571, %v4564, %v4568
    %v4573 = vand.u32 2147483647, %v4542
    %vm4574 = vcmp.eq.f32.partialorder %v4573, 8.507059e+37
    %v4575 = vand.u32 %v4542, 2147483648
    %v4576 = vor.u32 1.1754944e-38, %v4575
    %v4577 = vsel %vm4574, %v4576, %v4572
    %v4578 = vmul.f32 1.0, %v4577
    %v4579 = vrcp.pop %v4543
    %v4580 = vmul.f32 %v4543, %v4579
    %v4581 = vsub.f32 1.0, %v4580
    %v4582 = vmul.f32 %v4579, %v4581
    %v4583 = vadd.f32 %v4579, %v4582
    %vm4584 = vweird.f32 %v4543
    %vm4585 = vweird.f32 %v4579
    %vm4586 = vmor %vm4584, %vm4585
    %v4587 = vsel %vm4586, %v4579, %v4583
    %v4588 = vand.u32 2147483647, %v4543
    %vm4589 = vcmp.eq.f32.partialorder %v4588, 8.507059e+37
    %v4590 = vand.u32 %v4543, 2147483648
    %v4591 = vor.u32 1.1754944e-38, %v4590
    %v4592 = vsel %vm4589, %v4591, %v4587
    %v4593 = vmul.f32 1.0, %v4592
    %v4594 = vrcp.pop %v4544
    %v4595 = vmul.f32 %v4544, %v4594
    %v4596 = vsub.f32 1.0, %v4595
    %v4597 = vmul.f32 %v4594, %v4596
    %v4598 = vadd.f32 %v4594, %v4597
    %vm4599 = vweird.f32 %v4544
    %vm4600 = vweird.f32 %v4594
    %vm4601 = vmor %vm4599, %vm4600
    %v4602 = vsel %vm4601, %v4594, %v4598
    %v4603 = vand.u32 2147483647, %v4544
    %vm4604 = vcmp.eq.f32.partialorder %v4603, 8.507059e+37
    %v4605 = vand.u32 %v4544, 2147483648
    %v4606 = vor.u32 1.1754944e-38, %v4605
    %v4607 = vsel %vm4604, %v4606, %v4602
    %v4608 = vmul.f32 1.0, %v4607
    %v4609 = vrcp.pop %v4545
    %v4610 = vmul.f32 %v4545, %v4609
    %v4611 = vsub.f32 1.0, %v4610
    %v4612 = vmul.f32 %v4609, %v4611
    %v4613 = vadd.f32 %v4609, %v4612
    %vm4614 = vweird.f32 %v4545
    %vm4615 = vweird.f32 %v4609
    %vm4616 = vmor %vm4614, %vm4615
    %v4617 = vsel %vm4616, %v4609, %v4613
    %v4618 = vand.u32 2147483647, %v4545
    %vm4619 = vcmp.eq.f32.partialorder %v4618, 8.507059e+37
    %v4620 = vand.u32 %v4545, 2147483648
    %v4621 = vor.u32 1.1754944e-38, %v4620
    %v4622 = vsel %vm4619, %v4621, %v4617
    %v4623 = vmul.f32 1.0, %v4622
    %v4624 = vrcp.pop %v4546
    %v4625 = vmul.f32 %v4546, %v4624
    %v4626 = vsub.f32 1.0, %v4625
    %v4627 = vmul.f32 %v4624, %v4626
    %v4628 = vadd.f32 %v4624, %v4627
    %vm4629 = vweird.f32 %v4546
    %vm4630 = vweird.f32 %v4624
    %vm4631 = vmor %vm4629, %vm4630
    %v4632 = vsel %vm4631, %v4624, %v4628
    %v4633 = vand.u32 2147483647, %v4546
    %vm4634 = vcmp.eq.f32.partialorder %v4633, 8.507059e+37
    %v4635 = vand.u32 %v4546, 2147483648
    %v4636 = vor.u32 1.1754944e-38, %v4635
    %v4637 = vsel %vm4634, %v4636, %v4632
    %v4638 = vmul.f32 1.0, %v4637
    %v4639 = vrcp.pop %v4547
    %v4640 = vmul.f32 %v4547, %v4639
    %v4641 = vsub.f32 1.0, %v4640
    %v4642 = vmul.f32 %v4639, %v4641
    %v4643 = vadd.f32 %v4639, %v4642
    %vm4644 = vweird.f32 %v4547
    %vm4645 = vweird.f32 %v4639
    %vm4646 = vmor %vm4644, %vm4645
    %v4647 = vsel %vm4646, %v4639, %v4643
    %v4648 = vand.u32 2147483647, %v4547
    %vm4649 = vcmp.eq.f32.partialorder %v4648, 8.507059e+37
    %v4650 = vand.u32 %v4547, 2147483648
    %v4651 = vor.u32 1.1754944e-38, %v4650
    %v4652 = vsel %vm4649, %v4651, %v4647
    %v4653 = vmul.f32 1.0, %v4652
    %v4654 = vrcp.pop %v4548
    %v4655 = vmul.f32 %v4548, %v4654
    %v4656 = vsub.f32 1.0, %v4655
    %v4657 = vmul.f32 %v4654, %v4656
    %v4658 = vadd.f32 %v4654, %v4657
    %vm4659 = vweird.f32 %v4548
    %vm4660 = vweird.f32 %v4654
    %vm4661 = vmor %vm4659, %vm4660
    %v4662 = vsel %vm4661, %v4654, %v4658
    %v4663 = vand.u32 2147483647, %v4548
    %vm4664 = vcmp.eq.f32.partialorder %v4663, 8.507059e+37
    %v4665 = vand.u32 %v4548, 2147483648
    %v4666 = vor.u32 1.1754944e-38, %v4665
    %v4667 = vsel %vm4664, %v4666, %v4662
    %v4668 = vmul.f32 1.0, %v4667
    %v4677 = vrot.slane %v3982, 7
    %v4678 = vrot.slane %v3983, 7
    %v4679 = vrot.slane %v3984, 7
    %v4680 = vrot.slane %v3985, 7
    %v4681 = vrot.slane %v3986, 7
    %v4682 = vrot.slane %v3987, 7
    %v4683 = vrot.slane %v3988, 7
    %v4684 = vrot.slane %v3989, 7
    %v4693 = vmul.f32 %v4403, %v4677
    %v4694 = vmul.f32 %v4418, %v4678
    %v4695 = vmul.f32 %v4433, %v4679
    %v4696 = vmul.f32 %v4448, %v4680
    %v4697 = vmul.f32 %v4463, %v4681
    %v4698 = vmul.f32 %v4478, %v4682
    %v4699 = vmul.f32 %v4493, %v4683
    %v4700 = vmul.f32 %v4508, %v4684
    %v4701 = vmul.f32 %v4251, %v4509
    %v4702 = vmul.f32 %v4266, %v4510
    %v4703 = vmul.f32 %v4281, %v4511
    %v4704 = vmul.f32 %v4296, %v4512
    %v4705 = vmul.f32 %v4311, %v4513
    %v4706 = vmul.f32 %v4326, %v4514
    %v4707 = vmul.f32 %v4341, %v4515
    %v4708 = vmul.f32 %v4356, %v4516
    %v4709 = vadd.f32 %v4693, %v4701
    %v4710 = vadd.f32 %v4694, %v4702
    %v4711 = vadd.f32 %v4695, %v4703
    %v4712 = vadd.f32 %v4696, %v4704
    %v4713 = vadd.f32 %v4697, %v4705
    %v4714 = vadd.f32 %v4698, %v4706
    %v4715 = vadd.f32 %v4699, %v4707
    %v4716 = vadd.f32 %v4700, %v4708
    %v4717 = vtanh.pop %v4709
    %v4718 = vtanh.pop %v4710
    %v4719 = vtanh.pop %v4711
    %v4720 = vtanh.pop %v4712
    %v4721 = vtanh.pop %v4713
    %v4722 = vtanh.pop %v4714
    %v4723 = vtanh.pop %v4715
    %v4724 = vtanh.pop %v4716
    %v4725 = vmul.f32 %v4563, %v4717
    %v4726 = vmul.f32 %v4578, %v4718
    %v4727 = vmul.f32 %v4593, %v4719
    %v4728 = vmul.f32 %v4608, %v4720
    %v4729 = vmul.f32 %v4623, %v4721
    %v4730 = vmul.f32 %v4638, %v4722
    %v4731 = vmul.f32 %v4653, %v4723
    %v4732 = vmul.f32 %v4668, %v4724
    %v4741 = vrot.slane %v4725, 5
    %v4742 = vrot.slane %v4726, 4
    %v4743 = vsel %vm1100, %v4742, %v4741
    %v4744 = vrot.slane %v4727, 3
    %v4745 = vsel %vm1103, %v4744, %v4743
    %v4746 = vrot.slane %v4728, 2
    %v4747 = vsel %vm1106, %v4746, %v4745
    %v4748 = vrot.slane %v4729, 1
    %v4749 = vsel %vm1109, %v4748, %v4747
    %v4750 = vsel %vm1112, %v4730, %v4749
    %v4751 = vrot.slane %v4731, 7
    %v4752 = vsel %vm1115, %v4751, %v4750
    %v4753 = vrot.slane %v4732, 6
    %v4754 = vsel %vm1118, %v4753, %v4752
    %4756 = vmatpush.msra.mxu0 %v389
    %4757 = vmatpush.msra.mxu0 %v385
    %4758 = vmatpush.msra.mxu0 %v381
    %4759 = vmatpush.msra.mxu0 %v377
    %4760 = vmatpush.msra.mxu0 %v373
    %4761 = vmatpush.msra.mxu0 %v369
    %4762 = vmatpush.msra.mxu0 %v365
    %4763 = vmatpush.msra.mxu0 %v361
    %4764 = vmatpush.msra.mxu0 %v357
    %4765 = vmatpush.msra.mxu0 %v353
    %4766 = vmatpush.msra.mxu0 %v349
    %4767 = vmatpush.msra.mxu0 %v345
    %4768 = vmatpush.msra.mxu0 %v341
    %4769 = vmatpush.msra.mxu0 %v337
    %4770 = vmatpush.msra.mxu0 %v333
    %4771 = vmatpush.msra.mxu0 %v329
    %4772 = vmatmul.f32.gmra.mxu0 %v4754
    %v4773 = vpop.f32.mrf.mxu0
    %v4774 = vadd.f32 0.0, %v4773
    %4775 = vdwg.mxu0
    %4776 = vmatpush.msra.mxu0 %v390
    %4777 = vmatpush.msra.mxu0 %v386
    %4778 = vmatpush.msra.mxu0 %v382
    %4779 = vmatpush.msra.mxu0 %v378
    %4780 = vmatpush.msra.mxu0 %v374
    %4781 = vmatpush.msra.mxu0 %v370
    %4782 = vmatpush.msra.mxu0 %v366
    %4783 = vmatpush.msra.mxu0 %v362
    %4784 = vmatpush.msra.mxu0 %v358
    %4785 = vmatpush.msra.mxu0 %v354
    %4786 = vmatpush.msra.mxu0 %v350
    %4787 = vmatpush.msra.mxu0 %v346
    %4788 = vmatpush.msra.mxu0 %v342
    %4789 = vmatpush.msra.mxu0 %v338
    %4790 = vmatpush.msra.mxu0 %v334
    %4791 = vmatpush.msra.mxu0 %v330
    %4792 = vmatmul.f32.gmra.mxu0 %v4754
    %v4793 = vpop.f32.mrf.mxu0
    %v4794 = vadd.f32 0.0, %v4793
    %4795 = vdwg.mxu0
    %4796 = vmatpush.msra.mxu0 %v391
    %4797 = vmatpush.msra.mxu0 %v387
    %4798 = vmatpush.msra.mxu0 %v383
    %4799 = vmatpush.msra.mxu0 %v379
    %4800 = vmatpush.msra.mxu0 %v375
    %4801 = vmatpush.msra.mxu0 %v371
    %4802 = vmatpush.msra.mxu0 %v367
    %4803 = vmatpush.msra.mxu0 %v363
    %4804 = vmatpush.msra.mxu0 %v359
    %4805 = vmatpush.msra.mxu0 %v355
    %4806 = vmatpush.msra.mxu0 %v351
    %4807 = vmatpush.msra.mxu0 %v347
    %4808 = vmatpush.msra.mxu0 %v343
    %4809 = vmatpush.msra.mxu0 %v339
    %4810 = vmatpush.msra.mxu0 %v335
    %4811 = vmatpush.msra.mxu0 %v331
    %4812 = vmatmul.f32.gmra.mxu0 %v4754
    %v4813 = vpop.f32.mrf.mxu0
    %v4814 = vadd.f32 0.0, %v4813
    %4815 = vdwg.mxu0
    %4816 = vmatpush.msra.mxu0 %v392
    %4817 = vmatpush.msra.mxu0 %v388
    %4818 = vmatpush.msra.mxu0 %v384
    %4819 = vmatpush.msra.mxu0 %v380
    %4820 = vmatpush.msra.mxu0 %v376
    %4821 = vmatpush.msra.mxu0 %v372
    %4822 = vmatpush.msra.mxu0 %v368
    %4823 = vmatpush.msra.mxu0 %v364
    %4824 = vmatpush.msra.mxu0 %v360
    %4825 = vmatpush.msra.mxu0 %v356
    %4826 = vmatpush.msra.mxu0 %v352
    %4827 = vmatpush.msra.mxu0 %v348
    %4828 = vmatpush.msra.mxu0 %v344
    %4829 = vmatpush.msra.mxu0 %v340
    %4830 = vmatpush.msra.mxu0 %v336
    %4831 = vmatpush.msra.mxu0 %v332
    %4832 = vmatmul.f32.gmra.mxu0 %v4754
    %v4833 = vpop.f32.mrf.mxu0
    %v4834 = vadd.f32 0.0, %v4833
    %4835 = vdwg.mxu0
    %v4840 = vrot.slane %v4774, 2
    %v4841 = vrot.slane %v4794, 2
    %v4842 = vrot.slane %v4814, 2
    %v4843 = vrot.slane %v4834, 2
    %v4844 = vrot.slane %v4774, 3
    %v4845 = vrot.slane %v4794, 3
    %v4846 = vrot.slane %v4814, 3
    %v4847 = vrot.slane %v4834, 3
    %v4848 = vrot.slane %v4774, 4
    %v4849 = vrot.slane %v4794, 4
    %v4850 = vrot.slane %v4814, 4
    %v4851 = vrot.slane %v4834, 4
    %v4852 = vrot.slane %v4774, 5
    %v4853 = vrot.slane %v4794, 5
    %v4854 = vrot.slane %v4814, 5
    %v4855 = vrot.slane %v4834, 5
    %v4856 = vrot.slane %v4774, 6
    %v4857 = vrot.slane %v4794, 6
    %v4858 = vrot.slane %v4814, 6
    %v4859 = vrot.slane %v4834, 6
    %v4860 = vrot.slane %v4774, 7
    %v4861 = vrot.slane %v4794, 7
    %v4862 = vrot.slane %v4814, 7
    %v4863 = vrot.slane %v4834, 7
    %v4864 = vrot.slane %v4774, 1
    %v4865 = vrot.slane %v4794, 1
    %v4866 = vrot.slane %v4814, 1
    %v4867 = vrot.slane %v4834, 1
    %v4900 = vadd.f32 %v183, %v4840
    %v4901 = vadd.f32 %v224, %v4841
    %v4902 = vadd.f32 %v265, %v4842
    %v4903 = vadd.f32 %v306, %v4843
    %v4904 = vadd.f32 %v186, %v4844
    %v4905 = vadd.f32 %v227, %v4845
    %v4906 = vadd.f32 %v268, %v4846
    %v4907 = vadd.f32 %v309, %v4847
    %v4908 = vadd.f32 %v189, %v4848
    %v4909 = vadd.f32 %v230, %v4849
    %v4910 = vadd.f32 %v271, %v4850
    %v4911 = vadd.f32 %v312, %v4851
    %v4912 = vadd.f32 %v192, %v4852
    %v4913 = vadd.f32 %v233, %v4853
    %v4914 = vadd.f32 %v274, %v4854
    %v4915 = vadd.f32 %v315, %v4855
    %v4916 = vadd.f32 %v195, %v4856
    %v4917 = vadd.f32 %v236, %v4857
    %v4918 = vadd.f32 %v277, %v4858
    %v4919 = vadd.f32 %v318, %v4859
    %v4920 = vadd.f32 %v198, %v4860
    %v4921 = vadd.f32 %v239, %v4861
    %v4922 = vadd.f32 %v280, %v4862
    %v4923 = vadd.f32 %v321, %v4863
    %v4924 = vadd.f32 %v201, %v4774
    %v4925 = vadd.f32 %v242, %v4794
    %v4926 = vadd.f32 %v283, %v4814
    %v4927 = vadd.f32 %v324, %v4834
    %v4928 = vadd.f32 %v204, %v4864
    %v4929 = vadd.f32 %v245, %v4865
    %v4930 = vadd.f32 %v286, %v4866
    %v4931 = vadd.f32 %v327, %v4867
    %v4932 = vxor.u32 %v4900, 2147483648
    %v4933 = vxor.u32 %v4904, 2147483648
    %v4934 = vxor.u32 %v4908, 2147483648
    %v4935 = vxor.u32 %v4912, 2147483648
    %v4936 = vxor.u32 %v4916, 2147483648
    %v4937 = vxor.u32 %v4920, 2147483648
    %v4938 = vxor.u32 %v4924, 2147483648
    %v4939 = vxor.u32 %v4928, 2147483648
    %v4940 = vmul.f32 %v4932, 1.442695
    %v4941 = vpow.pop %v4940
    %v4942 = vmul.f32 %v4933, 1.442695
    %v4943 = vpow.pop %v4942
    %v4944 = vmul.f32 %v4934, 1.442695
    %v4945 = vpow.pop %v4944
    %v4946 = vmul.f32 %v4935, 1.442695
    %v4947 = vpow.pop %v4946
    %v4948 = vmul.f32 %v4936, 1.442695
    %v4949 = vpow.pop %v4948
    %v4950 = vmul.f32 %v4937, 1.442695
    %v4951 = vpow.pop %v4950
    %v4952 = vmul.f32 %v4938, 1.442695
    %v4953 = vpow.pop %v4952
    %v4954 = vmul.f32 %v4939, 1.442695
    %v4955 = vpow.pop %v4954
    %v4956 = vadd.f32 %v4941, 1.0
    %v4957 = vadd.f32 %v4943, 1.0
    %v4958 = vadd.f32 %v4945, 1.0
    %v4959 = vadd.f32 %v4947, 1.0
    %v4960 = vadd.f32 %v4949, 1.0
    %v4961 = vadd.f32 %v4951, 1.0
    %v4962 = vadd.f32 %v4953, 1.0
    %v4963 = vadd.f32 %v4955, 1.0
    %v4964 = vrcp.pop %v4956
    %v4965 = vmul.f32 %v4956, %v4964
    %v4966 = vsub.f32 1.0, %v4965
    %v4967 = vmul.f32 %v4964, %v4966
    %v4968 = vadd.f32 %v4964, %v4967
    %vm4969 = vweird.f32 %v4956
    %vm4970 = vweird.f32 %v4964
    %vm4971 = vmor %vm4969, %vm4970
    %v4972 = vsel %vm4971, %v4964, %v4968
    %v4973 = vand.u32 2147483647, %v4956
    %vm4974 = vcmp.eq.f32.partialorder %v4973, 8.507059e+37
    %v4975 = vand.u32 %v4956, 2147483648
    %v4976 = vor.u32 1.1754944e-38, %v4975
    %v4977 = vsel %vm4974, %v4976, %v4972
    %v4978 = vmul.f32 1.0, %v4977
    %v4979 = vrcp.pop %v4957
    %v4980 = vmul.f32 %v4957, %v4979
    %v4981 = vsub.f32 1.0, %v4980
    %v4982 = vmul.f32 %v4979, %v4981
    %v4983 = vadd.f32 %v4979, %v4982
    %vm4984 = vweird.f32 %v4957
    %vm4985 = vweird.f32 %v4979
    %vm4986 = vmor %vm4984, %vm4985
    %v4987 = vsel %vm4986, %v4979, %v4983
    %v4988 = vand.u32 2147483647, %v4957
    %vm4989 = vcmp.eq.f32.partialorder %v4988, 8.507059e+37
    %v4990 = vand.u32 %v4957, 2147483648
    %v4991 = vor.u32 1.1754944e-38, %v4990
    %v4992 = vsel %vm4989, %v4991, %v4987
    %v4993 = vmul.f32 1.0, %v4992
    %v4994 = vrcp.pop %v4958
    %v4995 = vmul.f32 %v4958, %v4994
    %v4996 = vsub.f32 1.0, %v4995
    %v4997 = vmul.f32 %v4994, %v4996
    %v4998 = vadd.f32 %v4994, %v4997
    %vm4999 = vweird.f32 %v4958
    %vm5000 = vweird.f32 %v4994
    %vm5001 = vmor %vm4999, %vm5000
    %v5002 = vsel %vm5001, %v4994, %v4998
    %v5003 = vand.u32 2147483647, %v4958
    %vm5004 = vcmp.eq.f32.partialorder %v5003, 8.507059e+37
    %v5005 = vand.u32 %v4958, 2147483648
    %v5006 = vor.u32 1.1754944e-38, %v5005
    %v5007 = vsel %vm5004, %v5006, %v5002
    %v5008 = vmul.f32 1.0, %v5007
    %v5009 = vrcp.pop %v4959
    %v5010 = vmul.f32 %v4959, %v5009
    %v5011 = vsub.f32 1.0, %v5010
    %v5012 = vmul.f32 %v5009, %v5011
    %v5013 = vadd.f32 %v5009, %v5012
    %vm5014 = vweird.f32 %v4959
    %vm5015 = vweird.f32 %v5009
    %vm5016 = vmor %vm5014, %vm5015
    %v5017 = vsel %vm5016, %v5009, %v5013
    %v5018 = vand.u32 2147483647, %v4959
    %vm5019 = vcmp.eq.f32.partialorder %v5018, 8.507059e+37
    %v5020 = vand.u32 %v4959, 2147483648
    %v5021 = vor.u32 1.1754944e-38, %v5020
    %v5022 = vsel %vm5019, %v5021, %v5017
    %v5023 = vmul.f32 1.0, %v5022
    %v5024 = vrcp.pop %v4960
    %v5025 = vmul.f32 %v4960, %v5024
    %v5026 = vsub.f32 1.0, %v5025
    %v5027 = vmul.f32 %v5024, %v5026
    %v5028 = vadd.f32 %v5024, %v5027
    %vm5029 = vweird.f32 %v4960
    %vm5030 = vweird.f32 %v5024
    %vm5031 = vmor %vm5029, %vm5030
    %v5032 = vsel %vm5031, %v5024, %v5028
    %v5033 = vand.u32 2147483647, %v4960
    %vm5034 = vcmp.eq.f32.partialorder %v5033, 8.507059e+37
    %v5035 = vand.u32 %v4960, 2147483648
    %v5036 = vor.u32 1.1754944e-38, %v5035
    %v5037 = vsel %vm5034, %v5036, %v5032
    %v5038 = vmul.f32 1.0, %v5037
    %v5039 = vrcp.pop %v4961
    %v5040 = vmul.f32 %v4961, %v5039
    %v5041 = vsub.f32 1.0, %v5040
    %v5042 = vmul.f32 %v5039, %v5041
    %v5043 = vadd.f32 %v5039, %v5042
    %vm5044 = vweird.f32 %v4961
    %vm5045 = vweird.f32 %v5039
    %vm5046 = vmor %vm5044, %vm5045
    %v5047 = vsel %vm5046, %v5039, %v5043
    %v5048 = vand.u32 2147483647, %v4961
    %vm5049 = vcmp.eq.f32.partialorder %v5048, 8.507059e+37
    %v5050 = vand.u32 %v4961, 2147483648
    %v5051 = vor.u32 1.1754944e-38, %v5050
    %v5052 = vsel %vm5049, %v5051, %v5047
    %v5053 = vmul.f32 1.0, %v5052
    %v5054 = vrcp.pop %v4962
    %v5055 = vmul.f32 %v4962, %v5054
    %v5056 = vsub.f32 1.0, %v5055
    %v5057 = vmul.f32 %v5054, %v5056
    %v5058 = vadd.f32 %v5054, %v5057
    %vm5059 = vweird.f32 %v4962
    %vm5060 = vweird.f32 %v5054
    %vm5061 = vmor %vm5059, %vm5060
    %v5062 = vsel %vm5061, %v5054, %v5058
    %v5063 = vand.u32 2147483647, %v4962
    %vm5064 = vcmp.eq.f32.partialorder %v5063, 8.507059e+37
    %v5065 = vand.u32 %v4962, 2147483648
    %v5066 = vor.u32 1.1754944e-38, %v5065
    %v5067 = vsel %vm5064, %v5066, %v5062
    %v5068 = vmul.f32 1.0, %v5067
    %v5069 = vrcp.pop %v4963
    %v5070 = vmul.f32 %v4963, %v5069
    %v5071 = vsub.f32 1.0, %v5070
    %v5072 = vmul.f32 %v5069, %v5071
    %v5073 = vadd.f32 %v5069, %v5072
    %vm5074 = vweird.f32 %v4963
    %vm5075 = vweird.f32 %v5069
    %vm5076 = vmor %vm5074, %vm5075
    %v5077 = vsel %vm5076, %v5069, %v5073
    %v5078 = vand.u32 2147483647, %v4963
    %vm5079 = vcmp.eq.f32.partialorder %v5078, 8.507059e+37
    %v5080 = vand.u32 %v4963, 2147483648
    %v5081 = vor.u32 1.1754944e-38, %v5080
    %v5082 = vsel %vm5079, %v5081, %v5077
    %v5083 = vmul.f32 1.0, %v5082
    %v5084 = vxor.u32 %v4901, 2147483648
    %v5085 = vxor.u32 %v4905, 2147483648
    %v5086 = vxor.u32 %v4909, 2147483648
    %v5087 = vxor.u32 %v4913, 2147483648
    %v5088 = vxor.u32 %v4917, 2147483648
    %v5089 = vxor.u32 %v4921, 2147483648
    %v5090 = vxor.u32 %v4925, 2147483648
    %v5091 = vxor.u32 %v4929, 2147483648
    %v5092 = vmul.f32 %v5084, 1.442695
    %v5093 = vpow.pop %v5092
    %v5094 = vmul.f32 %v5085, 1.442695
    %v5095 = vpow.pop %v5094
    %v5096 = vmul.f32 %v5086, 1.442695
    %v5097 = vpow.pop %v5096
    %v5098 = vmul.f32 %v5087, 1.442695
    %v5099 = vpow.pop %v5098
    %v5100 = vmul.f32 %v5088, 1.442695
    %v5101 = vpow.pop %v5100
    %v5102 = vmul.f32 %v5089, 1.442695
    %v5103 = vpow.pop %v5102
    %v5104 = vmul.f32 %v5090, 1.442695
    %v5105 = vpow.pop %v5104
    %v5106 = vmul.f32 %v5091, 1.442695
    %v5107 = vpow.pop %v5106
    %v5108 = vadd.f32 %v5093, 1.0
    %v5109 = vadd.f32 %v5095, 1.0
    %v5110 = vadd.f32 %v5097, 1.0
    %v5111 = vadd.f32 %v5099, 1.0
    %v5112 = vadd.f32 %v5101, 1.0
    %v5113 = vadd.f32 %v5103, 1.0
    %v5114 = vadd.f32 %v5105, 1.0
    %v5115 = vadd.f32 %v5107, 1.0
    %v5116 = vrcp.pop %v5108
    %v5117 = vmul.f32 %v5108, %v5116
    %v5118 = vsub.f32 1.0, %v5117
    %v5119 = vmul.f32 %v5116, %v5118
    %v5120 = vadd.f32 %v5116, %v5119
    %vm5121 = vweird.f32 %v5108
    %vm5122 = vweird.f32 %v5116
    %vm5123 = vmor %vm5121, %vm5122
    %v5124 = vsel %vm5123, %v5116, %v5120
    %v5125 = vand.u32 2147483647, %v5108
    %vm5126 = vcmp.eq.f32.partialorder %v5125, 8.507059e+37
    %v5127 = vand.u32 %v5108, 2147483648
    %v5128 = vor.u32 1.1754944e-38, %v5127
    %v5129 = vsel %vm5126, %v5128, %v5124
    %v5130 = vmul.f32 1.0, %v5129
    %v5131 = vrcp.pop %v5109
    %v5132 = vmul.f32 %v5109, %v5131
    %v5133 = vsub.f32 1.0, %v5132
    %v5134 = vmul.f32 %v5131, %v5133
    %v5135 = vadd.f32 %v5131, %v5134
    %vm5136 = vweird.f32 %v5109
    %vm5137 = vweird.f32 %v5131
    %vm5138 = vmor %vm5136, %vm5137
    %v5139 = vsel %vm5138, %v5131, %v5135
    %v5140 = vand.u32 2147483647, %v5109
    %vm5141 = vcmp.eq.f32.partialorder %v5140, 8.507059e+37
    %v5142 = vand.u32 %v5109, 2147483648
    %v5143 = vor.u32 1.1754944e-38, %v5142
    %v5144 = vsel %vm5141, %v5143, %v5139
    %v5145 = vmul.f32 1.0, %v5144
    %v5146 = vrcp.pop %v5110
    %v5147 = vmul.f32 %v5110, %v5146
    %v5148 = vsub.f32 1.0, %v5147
    %v5149 = vmul.f32 %v5146, %v5148
    %v5150 = vadd.f32 %v5146, %v5149
    %vm5151 = vweird.f32 %v5110
    %vm5152 = vweird.f32 %v5146
    %vm5153 = vmor %vm5151, %vm5152
    %v5154 = vsel %vm5153, %v5146, %v5150
    %v5155 = vand.u32 2147483647, %v5110
    %vm5156 = vcmp.eq.f32.partialorder %v5155, 8.507059e+37
    %v5157 = vand.u32 %v5110, 2147483648
    %v5158 = vor.u32 1.1754944e-38, %v5157
    %v5159 = vsel %vm5156, %v5158, %v5154
    %v5160 = vmul.f32 1.0, %v5159
    %v5161 = vrcp.pop %v5111
    %v5162 = vmul.f32 %v5111, %v5161
    %v5163 = vsub.f32 1.0, %v5162
    %v5164 = vmul.f32 %v5161, %v5163
    %v5165 = vadd.f32 %v5161, %v5164
    %vm5166 = vweird.f32 %v5111
    %vm5167 = vweird.f32 %v5161
    %vm5168 = vmor %vm5166, %vm5167
    %v5169 = vsel %vm5168, %v5161, %v5165
    %v5170 = vand.u32 2147483647, %v5111
    %vm5171 = vcmp.eq.f32.partialorder %v5170, 8.507059e+37
    %v5172 = vand.u32 %v5111, 2147483648
    %v5173 = vor.u32 1.1754944e-38, %v5172
    %v5174 = vsel %vm5171, %v5173, %v5169
    %v5175 = vmul.f32 1.0, %v5174
    %v5176 = vrcp.pop %v5112
    %v5177 = vmul.f32 %v5112, %v5176
    %v5178 = vsub.f32 1.0, %v5177
    %v5179 = vmul.f32 %v5176, %v5178
    %v5180 = vadd.f32 %v5176, %v5179
    %vm5181 = vweird.f32 %v5112
    %vm5182 = vweird.f32 %v5176
    %vm5183 = vmor %vm5181, %vm5182
    %v5184 = vsel %vm5183, %v5176, %v5180
    %v5185 = vand.u32 2147483647, %v5112
    %vm5186 = vcmp.eq.f32.partialorder %v5185, 8.507059e+37
    %v5187 = vand.u32 %v5112, 2147483648
    %v5188 = vor.u32 1.1754944e-38, %v5187
    %v5189 = vsel %vm5186, %v5188, %v5184
    %v5190 = vmul.f32 1.0, %v5189
    %v5191 = vrcp.pop %v5113
    %v5192 = vmul.f32 %v5113, %v5191
    %v5193 = vsub.f32 1.0, %v5192
    %v5194 = vmul.f32 %v5191, %v5193
    %v5195 = vadd.f32 %v5191, %v5194
    %vm5196 = vweird.f32 %v5113
    %vm5197 = vweird.f32 %v5191
    %vm5198 = vmor %vm5196, %vm5197
    %v5199 = vsel %vm5198, %v5191, %v5195
    %v5200 = vand.u32 2147483647, %v5113
    %vm5201 = vcmp.eq.f32.partialorder %v5200, 8.507059e+37
    %v5202 = vand.u32 %v5113, 2147483648
    %v5203 = vor.u32 1.1754944e-38, %v5202
    %v5204 = vsel %vm5201, %v5203, %v5199
    %v5205 = vmul.f32 1.0, %v5204
    %v5206 = vrcp.pop %v5114
    %v5207 = vmul.f32 %v5114, %v5206
    %v5208 = vsub.f32 1.0, %v5207
    %v5209 = vmul.f32 %v5206, %v5208
    %v5210 = vadd.f32 %v5206, %v5209
    %vm5211 = vweird.f32 %v5114
    %vm5212 = vweird.f32 %v5206
    %vm5213 = vmor %vm5211, %vm5212
    %v5214 = vsel %vm5213, %v5206, %v5210
    %v5215 = vand.u32 2147483647, %v5114
    %vm5216 = vcmp.eq.f32.partialorder %v5215, 8.507059e+37
    %v5217 = vand.u32 %v5114, 2147483648
    %v5218 = vor.u32 1.1754944e-38, %v5217
    %v5219 = vsel %vm5216, %v5218, %v5214
    %v5220 = vmul.f32 1.0, %v5219
    %v5221 = vrcp.pop %v5115
    %v5222 = vmul.f32 %v5115, %v5221
    %v5223 = vsub.f32 1.0, %v5222
    %v5224 = vmul.f32 %v5221, %v5223
    %v5225 = vadd.f32 %v5221, %v5224
    %vm5226 = vweird.f32 %v5115
    %vm5227 = vweird.f32 %v5221
    %vm5228 = vmor %vm5226, %vm5227
    %v5229 = vsel %vm5228, %v5221, %v5225
    %v5230 = vand.u32 2147483647, %v5115
    %vm5231 = vcmp.eq.f32.partialorder %v5230, 8.507059e+37
    %v5232 = vand.u32 %v5115, 2147483648
    %v5233 = vor.u32 1.1754944e-38, %v5232
    %v5234 = vsel %vm5231, %v5233, %v5229
    %v5235 = vmul.f32 1.0, %v5234
    %v5236 = vtanh.pop %v4902
    %v5237 = vtanh.pop %v4906
    %v5238 = vtanh.pop %v4910
    %v5239 = vtanh.pop %v4914
    %v5240 = vtanh.pop %v4918
    %v5241 = vtanh.pop %v4922
    %v5242 = vtanh.pop %v4926
    %v5243 = vtanh.pop %v4930
    %v5244 = vxor.u32 %v4903, 2147483648
    %v5245 = vxor.u32 %v4907, 2147483648
    %v5246 = vxor.u32 %v4911, 2147483648
    %v5247 = vxor.u32 %v4915, 2147483648
    %v5248 = vxor.u32 %v4919, 2147483648
    %v5249 = vxor.u32 %v4923, 2147483648
    %v5250 = vxor.u32 %v4927, 2147483648
    %v5251 = vxor.u32 %v4931, 2147483648
    %v5252 = vmul.f32 %v5244, 1.442695
    %v5253 = vpow.pop %v5252
    %v5254 = vmul.f32 %v5245, 1.442695
    %v5255 = vpow.pop %v5254
    %v5256 = vmul.f32 %v5246, 1.442695
    %v5257 = vpow.pop %v5256
    %v5258 = vmul.f32 %v5247, 1.442695
    %v5259 = vpow.pop %v5258
    %v5260 = vmul.f32 %v5248, 1.442695
    %v5261 = vpow.pop %v5260
    %v5262 = vmul.f32 %v5249, 1.442695
    %v5263 = vpow.pop %v5262
    %v5264 = vmul.f32 %v5250, 1.442695
    %v5265 = vpow.pop %v5264
    %v5266 = vmul.f32 %v5251, 1.442695
    %v5267 = vpow.pop %v5266
    %v5268 = vadd.f32 %v5253, 1.0
    %v5269 = vadd.f32 %v5255, 1.0
    %v5270 = vadd.f32 %v5257, 1.0
    %v5271 = vadd.f32 %v5259, 1.0
    %v5272 = vadd.f32 %v5261, 1.0
    %v5273 = vadd.f32 %v5263, 1.0
    %v5274 = vadd.f32 %v5265, 1.0
    %v5275 = vadd.f32 %v5267, 1.0
    %v5276 = vrcp.pop %v5268
    %v5277 = vmul.f32 %v5268, %v5276
    %v5278 = vsub.f32 1.0, %v5277
    %v5279 = vmul.f32 %v5276, %v5278
    %v5280 = vadd.f32 %v5276, %v5279
    %vm5281 = vweird.f32 %v5268
    %vm5282 = vweird.f32 %v5276
    %vm5283 = vmor %vm5281, %vm5282
    %v5284 = vsel %vm5283, %v5276, %v5280
    %v5285 = vand.u32 2147483647, %v5268
    %vm5286 = vcmp.eq.f32.partialorder %v5285, 8.507059e+37
    %v5287 = vand.u32 %v5268, 2147483648
    %v5288 = vor.u32 1.1754944e-38, %v5287
    %v5289 = vsel %vm5286, %v5288, %v5284
    %v5290 = vmul.f32 1.0, %v5289
    %v5291 = vrcp.pop %v5269
    %v5292 = vmul.f32 %v5269, %v5291
    %v5293 = vsub.f32 1.0, %v5292
    %v5294 = vmul.f32 %v5291, %v5293
    %v5295 = vadd.f32 %v5291, %v5294
    %vm5296 = vweird.f32 %v5269
    %vm5297 = vweird.f32 %v5291
    %vm5298 = vmor %vm5296, %vm5297
    %v5299 = vsel %vm5298, %v5291, %v5295
    %v5300 = vand.u32 2147483647, %v5269
    %vm5301 = vcmp.eq.f32.partialorder %v5300, 8.507059e+37
    %v5302 = vand.u32 %v5269, 2147483648
    %v5303 = vor.u32 1.1754944e-38, %v5302
    %v5304 = vsel %vm5301, %v5303, %v5299
    %v5305 = vmul.f32 1.0, %v5304
    %v5306 = vrcp.pop %v5270
    %v5307 = vmul.f32 %v5270, %v5306
    %v5308 = vsub.f32 1.0, %v5307
    %v5309 = vmul.f32 %v5306, %v5308
    %v5310 = vadd.f32 %v5306, %v5309
    %vm5311 = vweird.f32 %v5270
    %vm5312 = vweird.f32 %v5306
    %vm5313 = vmor %vm5311, %vm5312
    %v5314 = vsel %vm5313, %v5306, %v5310
    %v5315 = vand.u32 2147483647, %v5270
    %vm5316 = vcmp.eq.f32.partialorder %v5315, 8.507059e+37
    %v5317 = vand.u32 %v5270, 2147483648
    %v5318 = vor.u32 1.1754944e-38, %v5317
    %v5319 = vsel %vm5316, %v5318, %v5314
    %v5320 = vmul.f32 1.0, %v5319
    %v5321 = vrcp.pop %v5271
    %v5322 = vmul.f32 %v5271, %v5321
    %v5323 = vsub.f32 1.0, %v5322
    %v5324 = vmul.f32 %v5321, %v5323
    %v5325 = vadd.f32 %v5321, %v5324
    %vm5326 = vweird.f32 %v5271
    %vm5327 = vweird.f32 %v5321
    %vm5328 = vmor %vm5326, %vm5327
    %v5329 = vsel %vm5328, %v5321, %v5325
    %v5330 = vand.u32 2147483647, %v5271
    %vm5331 = vcmp.eq.f32.partialorder %v5330, 8.507059e+37
    %v5332 = vand.u32 %v5271, 2147483648
    %v5333 = vor.u32 1.1754944e-38, %v5332
    %v5334 = vsel %vm5331, %v5333, %v5329
    %v5335 = vmul.f32 1.0, %v5334
    %v5336 = vrcp.pop %v5272
    %v5337 = vmul.f32 %v5272, %v5336
    %v5338 = vsub.f32 1.0, %v5337
    %v5339 = vmul.f32 %v5336, %v5338
    %v5340 = vadd.f32 %v5336, %v5339
    %vm5341 = vweird.f32 %v5272
    %vm5342 = vweird.f32 %v5336
    %vm5343 = vmor %vm5341, %vm5342
    %v5344 = vsel %vm5343, %v5336, %v5340
    %v5345 = vand.u32 2147483647, %v5272
    %vm5346 = vcmp.eq.f32.partialorder %v5345, 8.507059e+37
    %v5347 = vand.u32 %v5272, 2147483648
    %v5348 = vor.u32 1.1754944e-38, %v5347
    %v5349 = vsel %vm5346, %v5348, %v5344
    %v5350 = vmul.f32 1.0, %v5349
    %v5351 = vrcp.pop %v5273
    %v5352 = vmul.f32 %v5273, %v5351
    %v5353 = vsub.f32 1.0, %v5352
    %v5354 = vmul.f32 %v5351, %v5353
    %v5355 = vadd.f32 %v5351, %v5354
    %vm5356 = vweird.f32 %v5273
    %vm5357 = vweird.f32 %v5351
    %vm5358 = vmor %vm5356, %vm5357
    %v5359 = vsel %vm5358, %v5351, %v5355
    %v5360 = vand.u32 2147483647, %v5273
    %vm5361 = vcmp.eq.f32.partialorder %v5360, 8.507059e+37
    %v5362 = vand.u32 %v5273, 2147483648
    %v5363 = vor.u32 1.1754944e-38, %v5362
    %v5364 = vsel %vm5361, %v5363, %v5359
    %v5365 = vmul.f32 1.0, %v5364
    %v5366 = vrcp.pop %v5274
    %v5367 = vmul.f32 %v5274, %v5366
    %v5368 = vsub.f32 1.0, %v5367
    %v5369 = vmul.f32 %v5366, %v5368
    %v5370 = vadd.f32 %v5366, %v5369
    %vm5371 = vweird.f32 %v5274
    %vm5372 = vweird.f32 %v5366
    %vm5373 = vmor %vm5371, %vm5372
    %v5374 = vsel %vm5373, %v5366, %v5370
    %v5375 = vand.u32 2147483647, %v5274
    %vm5376 = vcmp.eq.f32.partialorder %v5375, 8.507059e+37
    %v5377 = vand.u32 %v5274, 2147483648
    %v5378 = vor.u32 1.1754944e-38, %v5377
    %v5379 = vsel %vm5376, %v5378, %v5374
    %v5380 = vmul.f32 1.0, %v5379
    %v5381 = vrcp.pop %v5275
    %v5382 = vmul.f32 %v5275, %v5381
    %v5383 = vsub.f32 1.0, %v5382
    %v5384 = vmul.f32 %v5381, %v5383
    %v5385 = vadd.f32 %v5381, %v5384
    %vm5386 = vweird.f32 %v5275
    %vm5387 = vweird.f32 %v5381
    %vm5388 = vmor %vm5386, %vm5387
    %v5389 = vsel %vm5388, %v5381, %v5385
    %v5390 = vand.u32 2147483647, %v5275
    %vm5391 = vcmp.eq.f32.partialorder %v5390, 8.507059e+37
    %v5392 = vand.u32 %v5275, 2147483648
    %v5393 = vor.u32 1.1754944e-38, %v5392
    %v5394 = vsel %vm5391, %v5393, %v5389
    %v5395 = vmul.f32 1.0, %v5394
    %v5404 = vrot.slane %v4709, 7
    %v5405 = vrot.slane %v4710, 7
    %v5406 = vrot.slane %v4711, 7
    %v5407 = vrot.slane %v4712, 7
    %v5408 = vrot.slane %v4713, 7
    %v5409 = vrot.slane %v4714, 7
    %v5410 = vrot.slane %v4715, 7
    %v5411 = vrot.slane %v4716, 7
    %v5420 = vmul.f32 %v5130, %v5404
    %v5421 = vmul.f32 %v5145, %v5405
    %v5422 = vmul.f32 %v5160, %v5406
    %v5423 = vmul.f32 %v5175, %v5407
    %v5424 = vmul.f32 %v5190, %v5408
    %v5425 = vmul.f32 %v5205, %v5409
    %v5426 = vmul.f32 %v5220, %v5410
    %v5427 = vmul.f32 %v5235, %v5411
    %v5428 = vmul.f32 %v4978, %v5236
    %v5429 = vmul.f32 %v4993, %v5237
    %v5430 = vmul.f32 %v5008, %v5238
    %v5431 = vmul.f32 %v5023, %v5239
    %v5432 = vmul.f32 %v5038, %v5240
    %v5433 = vmul.f32 %v5053, %v5241
    %v5434 = vmul.f32 %v5068, %v5242
    %v5435 = vmul.f32 %v5083, %v5243
    %v5436 = vadd.f32 %v5420, %v5428
    %v5437 = vadd.f32 %v5421, %v5429
    %v5438 = vadd.f32 %v5422, %v5430
    %v5439 = vadd.f32 %v5423, %v5431
    %v5440 = vadd.f32 %v5424, %v5432
    %v5441 = vadd.f32 %v5425, %v5433
    %v5442 = vadd.f32 %v5426, %v5434
    %v5443 = vadd.f32 %v5427, %v5435
    %v5444 = vtanh.pop %v5436
    %v5445 = vtanh.pop %v5437
    %v5446 = vtanh.pop %v5438
    %v5447 = vtanh.pop %v5439
    %v5448 = vtanh.pop %v5440
    %v5449 = vtanh.pop %v5441
    %v5450 = vtanh.pop %v5442
    %v5451 = vtanh.pop %v5443
    %v5452 = vmul.f32 %v5290, %v5444
    %v5453 = vmul.f32 %v5305, %v5445
    %v5454 = vmul.f32 %v5320, %v5446
    %v5455 = vmul.f32 %v5335, %v5447
    %v5456 = vmul.f32 %v5350, %v5448
    %v5457 = vmul.f32 %v5365, %v5449
    %v5458 = vmul.f32 %v5380, %v5450
    %v5459 = vmul.f32 %v5395, %v5451
    %v5468 = vrot.slane %v5452, 6
    %v5469 = vrot.slane %v5453, 5
    %v5470 = vsel %vm1100, %v5469, %v5468
    %v5471 = vrot.slane %v5454, 4
    %v5472 = vsel %vm1103, %v5471, %v5470
    %v5473 = vrot.slane %v5455, 3
    %v5474 = vsel %vm1106, %v5473, %v5472
    %v5475 = vrot.slane %v5456, 2
    %v5476 = vsel %vm1109, %v5475, %v5474
    %v5477 = vrot.slane %v5457, 1
    %v5478 = vsel %vm1112, %v5477, %v5476
    %v5479 = vsel %vm1115, %v5458, %v5478
    %v5480 = vrot.slane %v5459, 7
    %v5481 = vsel %vm1118, %v5480, %v5479
    %5483 = vmatpush.msra.mxu0 %v389
    %5484 = vmatpush.msra.mxu0 %v385
    %5485 = vmatpush.msra.mxu0 %v381
    %5486 = vmatpush.msra.mxu0 %v377
    %5487 = vmatpush.msra.mxu0 %v373
    %5488 = vmatpush.msra.mxu0 %v369
    %5489 = vmatpush.msra.mxu0 %v365
    %5490 = vmatpush.msra.mxu0 %v361
    %5491 = vmatpush.msra.mxu0 %v357
    %5492 = vmatpush.msra.mxu0 %v353
    %5493 = vmatpush.msra.mxu0 %v349
    %5494 = vmatpush.msra.mxu0 %v345
    %5495 = vmatpush.msra.mxu0 %v341
    %5496 = vmatpush.msra.mxu0 %v337
    %5497 = vmatpush.msra.mxu0 %v333
    %5498 = vmatpush.msra.mxu0 %v329
    %5499 = vmatmul.f32.gmra.mxu0 %v5481
    %v5500 = vpop.f32.mrf.mxu0
    %v5501 = vadd.f32 0.0, %v5500
    %5502 = vdwg.mxu0
    %5503 = vmatpush.msra.mxu0 %v390
    %5504 = vmatpush.msra.mxu0 %v386
    %5505 = vmatpush.msra.mxu0 %v382
    %5506 = vmatpush.msra.mxu0 %v378
    %5507 = vmatpush.msra.mxu0 %v374
    %5508 = vmatpush.msra.mxu0 %v370
    %5509 = vmatpush.msra.mxu0 %v366
    %5510 = vmatpush.msra.mxu0 %v362
    %5511 = vmatpush.msra.mxu0 %v358
    %5512 = vmatpush.msra.mxu0 %v354
    %5513 = vmatpush.msra.mxu0 %v350
    %5514 = vmatpush.msra.mxu0 %v346
    %5515 = vmatpush.msra.mxu0 %v342
    %5516 = vmatpush.msra.mxu0 %v338
    %5517 = vmatpush.msra.mxu0 %v334
    %5518 = vmatpush.msra.mxu0 %v330
    %5519 = vmatmul.f32.gmra.mxu0 %v5481
    %v5520 = vpop.f32.mrf.mxu0
    %v5521 = vadd.f32 0.0, %v5520
    %5522 = vdwg.mxu0
    %5523 = vmatpush.msra.mxu0 %v391
    %5524 = vmatpush.msra.mxu0 %v387
    %5525 = vmatpush.msra.mxu0 %v383
    %5526 = vmatpush.msra.mxu0 %v379
    %5527 = vmatpush.msra.mxu0 %v375
    %5528 = vmatpush.msra.mxu0 %v371
    %5529 = vmatpush.msra.mxu0 %v367
    %5530 = vmatpush.msra.mxu0 %v363
    %5531 = vmatpush.msra.mxu0 %v359
    %5532 = vmatpush.msra.mxu0 %v355
    %5533 = vmatpush.msra.mxu0 %v351
    %5534 = vmatpush.msra.mxu0 %v347
    %5535 = vmatpush.msra.mxu0 %v343
    %5536 = vmatpush.msra.mxu0 %v339
    %5537 = vmatpush.msra.mxu0 %v335
    %5538 = vmatpush.msra.mxu0 %v331
    %5539 = vmatmul.f32.gmra.mxu0 %v5481
    %v5540 = vpop.f32.mrf.mxu0
    %v5541 = vadd.f32 0.0, %v5540
    %5542 = vdwg.mxu0
    %5543 = vmatpush.msra.mxu0 %v392
    %5544 = vmatpush.msra.mxu0 %v388
    %5545 = vmatpush.msra.mxu0 %v384
    %5546 = vmatpush.msra.mxu0 %v380
    %5547 = vmatpush.msra.mxu0 %v376
    %5548 = vmatpush.msra.mxu0 %v372
    %5549 = vmatpush.msra.mxu0 %v368
    %5550 = vmatpush.msra.mxu0 %v364
    %5551 = vmatpush.msra.mxu0 %v360
    %5552 = vmatpush.msra.mxu0 %v356
    %5553 = vmatpush.msra.mxu0 %v352
    %5554 = vmatpush.msra.mxu0 %v348
    %5555 = vmatpush.msra.mxu0 %v344
    %5556 = vmatpush.msra.mxu0 %v340
    %5557 = vmatpush.msra.mxu0 %v336
    %5558 = vmatpush.msra.mxu0 %v332
    %5559 = vmatmul.f32.gmra.mxu0 %v5481
    %v5560 = vpop.f32.mrf.mxu0
    %v5561 = vadd.f32 0.0, %v5560
    %5562 = vdwg.mxu0
    %v5567 = vrot.slane %v5501, 1
    %v5568 = vrot.slane %v5521, 1
    %v5569 = vrot.slane %v5541, 1
    %v5570 = vrot.slane %v5561, 1
    %v5571 = vrot.slane %v5501, 2
    %v5572 = vrot.slane %v5521, 2
    %v5573 = vrot.slane %v5541, 2
    %v5574 = vrot.slane %v5561, 2
    %v5575 = vrot.slane %v5501, 3
    %v5576 = vrot.slane %v5521, 3
    %v5577 = vrot.slane %v5541, 3
    %v5578 = vrot.slane %v5561, 3
    %v5579 = vrot.slane %v5501, 4
    %v5580 = vrot.slane %v5521, 4
    %v5581 = vrot.slane %v5541, 4
    %v5582 = vrot.slane %v5561, 4
    %v5583 = vrot.slane %v5501, 5
    %v5584 = vrot.slane %v5521, 5
    %v5585 = vrot.slane %v5541, 5
    %v5586 = vrot.slane %v5561, 5
    %v5587 = vrot.slane %v5501, 6
    %v5588 = vrot.slane %v5521, 6
    %v5589 = vrot.slane %v5541, 6
    %v5590 = vrot.slane %v5561, 6
    %v5591 = vrot.slane %v5501, 7
    %v5592 = vrot.slane %v5521, 7
    %v5593 = vrot.slane %v5541, 7
    %v5594 = vrot.slane %v5561, 7
    %v5627 = vadd.f32 %v183, %v5567
    %v5628 = vadd.f32 %v224, %v5568
    %v5629 = vadd.f32 %v265, %v5569
    %v5630 = vadd.f32 %v306, %v5570
    %v5631 = vadd.f32 %v186, %v5571
    %v5632 = vadd.f32 %v227, %v5572
    %v5633 = vadd.f32 %v268, %v5573
    %v5634 = vadd.f32 %v309, %v5574
    %v5635 = vadd.f32 %v189, %v5575
    %v5636 = vadd.f32 %v230, %v5576
    %v5637 = vadd.f32 %v271, %v5577
    %v5638 = vadd.f32 %v312, %v5578
    %v5639 = vadd.f32 %v192, %v5579
    %v5640 = vadd.f32 %v233, %v5580
    %v5641 = vadd.f32 %v274, %v5581
    %v5642 = vadd.f32 %v315, %v5582
    %v5643 = vadd.f32 %v195, %v5583
    %v5644 = vadd.f32 %v236, %v5584
    %v5645 = vadd.f32 %v277, %v5585
    %v5646 = vadd.f32 %v318, %v5586
    %v5647 = vadd.f32 %v198, %v5587
    %v5648 = vadd.f32 %v239, %v5588
    %v5649 = vadd.f32 %v280, %v5589
    %v5650 = vadd.f32 %v321, %v5590
    %v5651 = vadd.f32 %v201, %v5591
    %v5652 = vadd.f32 %v242, %v5592
    %v5653 = vadd.f32 %v283, %v5593
    %v5654 = vadd.f32 %v324, %v5594
    %v5655 = vadd.f32 %v204, %v5501
    %v5656 = vadd.f32 %v245, %v5521
    %v5657 = vadd.f32 %v286, %v5541
    %v5658 = vadd.f32 %v327, %v5561
    %v5659 = vxor.u32 %v5627, 2147483648
    %v5660 = vxor.u32 %v5631, 2147483648
    %v5661 = vxor.u32 %v5635, 2147483648
    %v5662 = vxor.u32 %v5639, 2147483648
    %v5663 = vxor.u32 %v5643, 2147483648
    %v5664 = vxor.u32 %v5647, 2147483648
    %v5665 = vxor.u32 %v5651, 2147483648
    %v5666 = vxor.u32 %v5655, 2147483648
    %v5667 = vmul.f32 %v5659, 1.442695
    %v5668 = vpow.pop %v5667
    %v5669 = vmul.f32 %v5660, 1.442695
    %v5670 = vpow.pop %v5669
    %v5671 = vmul.f32 %v5661, 1.442695
    %v5672 = vpow.pop %v5671
    %v5673 = vmul.f32 %v5662, 1.442695
    %v5674 = vpow.pop %v5673
    %v5675 = vmul.f32 %v5663, 1.442695
    %v5676 = vpow.pop %v5675
    %v5677 = vmul.f32 %v5664, 1.442695
    %v5678 = vpow.pop %v5677
    %v5679 = vmul.f32 %v5665, 1.442695
    %v5680 = vpow.pop %v5679
    %v5681 = vmul.f32 %v5666, 1.442695
    %v5682 = vpow.pop %v5681
    %v5683 = vadd.f32 %v5668, 1.0
    %v5684 = vadd.f32 %v5670, 1.0
    %v5685 = vadd.f32 %v5672, 1.0
    %v5686 = vadd.f32 %v5674, 1.0
    %v5687 = vadd.f32 %v5676, 1.0
    %v5688 = vadd.f32 %v5678, 1.0
    %v5689 = vadd.f32 %v5680, 1.0
    %v5690 = vadd.f32 %v5682, 1.0
    %v5691 = vrcp.pop %v5683
    %v5692 = vmul.f32 %v5683, %v5691
    %v5693 = vsub.f32 1.0, %v5692
    %v5694 = vmul.f32 %v5691, %v5693
    %v5695 = vadd.f32 %v5691, %v5694
    %vm5696 = vweird.f32 %v5683
    %vm5697 = vweird.f32 %v5691
    %vm5698 = vmor %vm5696, %vm5697
    %v5699 = vsel %vm5698, %v5691, %v5695
    %v5700 = vand.u32 2147483647, %v5683
    %vm5701 = vcmp.eq.f32.partialorder %v5700, 8.507059e+37
    %v5702 = vand.u32 %v5683, 2147483648
    %v5703 = vor.u32 1.1754944e-38, %v5702
    %v5704 = vsel %vm5701, %v5703, %v5699
    %v5705 = vmul.f32 1.0, %v5704
    %v5706 = vrcp.pop %v5684
    %v5707 = vmul.f32 %v5684, %v5706
    %v5708 = vsub.f32 1.0, %v5707
    %v5709 = vmul.f32 %v5706, %v5708
    %v5710 = vadd.f32 %v5706, %v5709
    %vm5711 = vweird.f32 %v5684
    %vm5712 = vweird.f32 %v5706
    %vm5713 = vmor %vm5711, %vm5712
    %v5714 = vsel %vm5713, %v5706, %v5710
    %v5715 = vand.u32 2147483647, %v5684
    %vm5716 = vcmp.eq.f32.partialorder %v5715, 8.507059e+37
    %v5717 = vand.u32 %v5684, 2147483648
    %v5718 = vor.u32 1.1754944e-38, %v5717
    %v5719 = vsel %vm5716, %v5718, %v5714
    %v5720 = vmul.f32 1.0, %v5719
    %v5721 = vrcp.pop %v5685
    %v5722 = vmul.f32 %v5685, %v5721
    %v5723 = vsub.f32 1.0, %v5722
    %v5724 = vmul.f32 %v5721, %v5723
    %v5725 = vadd.f32 %v5721, %v5724
    %vm5726 = vweird.f32 %v5685
    %vm5727 = vweird.f32 %v5721
    %vm5728 = vmor %vm5726, %vm5727
    %v5729 = vsel %vm5728, %v5721, %v5725
    %v5730 = vand.u32 2147483647, %v5685
    %vm5731 = vcmp.eq.f32.partialorder %v5730, 8.507059e+37
    %v5732 = vand.u32 %v5685, 2147483648
    %v5733 = vor.u32 1.1754944e-38, %v5732
    %v5734 = vsel %vm5731, %v5733, %v5729
    %v5735 = vmul.f32 1.0, %v5734
    %v5736 = vrcp.pop %v5686
    %v5737 = vmul.f32 %v5686, %v5736
    %v5738 = vsub.f32 1.0, %v5737
    %v5739 = vmul.f32 %v5736, %v5738
    %v5740 = vadd.f32 %v5736, %v5739
    %vm5741 = vweird.f32 %v5686
    %vm5742 = vweird.f32 %v5736
    %vm5743 = vmor %vm5741, %vm5742
    %v5744 = vsel %vm5743, %v5736, %v5740
    %v5745 = vand.u32 2147483647, %v5686
    %vm5746 = vcmp.eq.f32.partialorder %v5745, 8.507059e+37
    %v5747 = vand.u32 %v5686, 2147483648
    %v5748 = vor.u32 1.1754944e-38, %v5747
    %v5749 = vsel %vm5746, %v5748, %v5744
    %v5750 = vmul.f32 1.0, %v5749
    %v5751 = vrcp.pop %v5687
    %v5752 = vmul.f32 %v5687, %v5751
    %v5753 = vsub.f32 1.0, %v5752
    %v5754 = vmul.f32 %v5751, %v5753
    %v5755 = vadd.f32 %v5751, %v5754
    %vm5756 = vweird.f32 %v5687
    %vm5757 = vweird.f32 %v5751
    %vm5758 = vmor %vm5756, %vm5757
    %v5759 = vsel %vm5758, %v5751, %v5755
    %v5760 = vand.u32 2147483647, %v5687
    %vm5761 = vcmp.eq.f32.partialorder %v5760, 8.507059e+37
    %v5762 = vand.u32 %v5687, 2147483648
    %v5763 = vor.u32 1.1754944e-38, %v5762
    %v5764 = vsel %vm5761, %v5763, %v5759
    %v5765 = vmul.f32 1.0, %v5764
    %v5766 = vrcp.pop %v5688
    %v5767 = vmul.f32 %v5688, %v5766
    %v5768 = vsub.f32 1.0, %v5767
    %v5769 = vmul.f32 %v5766, %v5768
    %v5770 = vadd.f32 %v5766, %v5769
    %vm5771 = vweird.f32 %v5688
    %vm5772 = vweird.f32 %v5766
    %vm5773 = vmor %vm5771, %vm5772
    %v5774 = vsel %vm5773, %v5766, %v5770
    %v5775 = vand.u32 2147483647, %v5688
    %vm5776 = vcmp.eq.f32.partialorder %v5775, 8.507059e+37
    %v5777 = vand.u32 %v5688, 2147483648
    %v5778 = vor.u32 1.1754944e-38, %v5777
    %v5779 = vsel %vm5776, %v5778, %v5774
    %v5780 = vmul.f32 1.0, %v5779
    %v5781 = vrcp.pop %v5689
    %v5782 = vmul.f32 %v5689, %v5781
    %v5783 = vsub.f32 1.0, %v5782
    %v5784 = vmul.f32 %v5781, %v5783
    %v5785 = vadd.f32 %v5781, %v5784
    %vm5786 = vweird.f32 %v5689
    %vm5787 = vweird.f32 %v5781
    %vm5788 = vmor %vm5786, %vm5787
    %v5789 = vsel %vm5788, %v5781, %v5785
    %v5790 = vand.u32 2147483647, %v5689
    %vm5791 = vcmp.eq.f32.partialorder %v5790, 8.507059e+37
    %v5792 = vand.u32 %v5689, 2147483648
    %v5793 = vor.u32 1.1754944e-38, %v5792
    %v5794 = vsel %vm5791, %v5793, %v5789
    %v5795 = vmul.f32 1.0, %v5794
    %v5796 = vrcp.pop %v5690
    %v5797 = vmul.f32 %v5690, %v5796
    %v5798 = vsub.f32 1.0, %v5797
    %v5799 = vmul.f32 %v5796, %v5798
    %v5800 = vadd.f32 %v5796, %v5799
    %vm5801 = vweird.f32 %v5690
    %vm5802 = vweird.f32 %v5796
    %vm5803 = vmor %vm5801, %vm5802
    %v5804 = vsel %vm5803, %v5796, %v5800
    %v5805 = vand.u32 2147483647, %v5690
    %vm5806 = vcmp.eq.f32.partialorder %v5805, 8.507059e+37
    %v5807 = vand.u32 %v5690, 2147483648
    %v5808 = vor.u32 1.1754944e-38, %v5807
    %v5809 = vsel %vm5806, %v5808, %v5804
    %v5810 = vmul.f32 1.0, %v5809
    %v5811 = vxor.u32 %v5628, 2147483648
    %v5812 = vxor.u32 %v5632, 2147483648
    %v5813 = vxor.u32 %v5636, 2147483648
    %v5814 = vxor.u32 %v5640, 2147483648
    %v5815 = vxor.u32 %v5644, 2147483648
    %v5816 = vxor.u32 %v5648, 2147483648
    %v5817 = vxor.u32 %v5652, 2147483648
    %v5818 = vxor.u32 %v5656, 2147483648
    %v5819 = vmul.f32 %v5811, 1.442695
    %v5820 = vpow.pop %v5819
    %v5821 = vmul.f32 %v5812, 1.442695
    %v5822 = vpow.pop %v5821
    %v5823 = vmul.f32 %v5813, 1.442695
    %v5824 = vpow.pop %v5823
    %v5825 = vmul.f32 %v5814, 1.442695
    %v5826 = vpow.pop %v5825
    %v5827 = vmul.f32 %v5815, 1.442695
    %v5828 = vpow.pop %v5827
    %v5829 = vmul.f32 %v5816, 1.442695
    %v5830 = vpow.pop %v5829
    %v5831 = vmul.f32 %v5817, 1.442695
    %v5832 = vpow.pop %v5831
    %v5833 = vmul.f32 %v5818, 1.442695
    %v5834 = vpow.pop %v5833
    %v5835 = vadd.f32 %v5820, 1.0
    %v5836 = vadd.f32 %v5822, 1.0
    %v5837 = vadd.f32 %v5824, 1.0
    %v5838 = vadd.f32 %v5826, 1.0
    %v5839 = vadd.f32 %v5828, 1.0
    %v5840 = vadd.f32 %v5830, 1.0
    %v5841 = vadd.f32 %v5832, 1.0
    %v5842 = vadd.f32 %v5834, 1.0
    %v5843 = vrcp.pop %v5835
    %v5844 = vmul.f32 %v5835, %v5843
    %v5845 = vsub.f32 1.0, %v5844
    %v5846 = vmul.f32 %v5843, %v5845
    %v5847 = vadd.f32 %v5843, %v5846
    %vm5848 = vweird.f32 %v5835
    %vm5849 = vweird.f32 %v5843
    %vm5850 = vmor %vm5848, %vm5849
    %v5851 = vsel %vm5850, %v5843, %v5847
    %v5852 = vand.u32 2147483647, %v5835
    %vm5853 = vcmp.eq.f32.partialorder %v5852, 8.507059e+37
    %v5854 = vand.u32 %v5835, 2147483648
    %v5855 = vor.u32 1.1754944e-38, %v5854
    %v5856 = vsel %vm5853, %v5855, %v5851
    %v5857 = vmul.f32 1.0, %v5856
    %v5858 = vrcp.pop %v5836
    %v5859 = vmul.f32 %v5836, %v5858
    %v5860 = vsub.f32 1.0, %v5859
    %v5861 = vmul.f32 %v5858, %v5860
    %v5862 = vadd.f32 %v5858, %v5861
    %vm5863 = vweird.f32 %v5836
    %vm5864 = vweird.f32 %v5858
    %vm5865 = vmor %vm5863, %vm5864
    %v5866 = vsel %vm5865, %v5858, %v5862
    %v5867 = vand.u32 2147483647, %v5836
    %vm5868 = vcmp.eq.f32.partialorder %v5867, 8.507059e+37
    %v5869 = vand.u32 %v5836, 2147483648
    %v5870 = vor.u32 1.1754944e-38, %v5869
    %v5871 = vsel %vm5868, %v5870, %v5866
    %v5872 = vmul.f32 1.0, %v5871
    %v5873 = vrcp.pop %v5837
    %v5874 = vmul.f32 %v5837, %v5873
    %v5875 = vsub.f32 1.0, %v5874
    %v5876 = vmul.f32 %v5873, %v5875
    %v5877 = vadd.f32 %v5873, %v5876
    %vm5878 = vweird.f32 %v5837
    %vm5879 = vweird.f32 %v5873
    %vm5880 = vmor %vm5878, %vm5879
    %v5881 = vsel %vm5880, %v5873, %v5877
    %v5882 = vand.u32 2147483647, %v5837
    %vm5883 = vcmp.eq.f32.partialorder %v5882, 8.507059e+37
    %v5884 = vand.u32 %v5837, 2147483648
    %v5885 = vor.u32 1.1754944e-38, %v5884
    %v5886 = vsel %vm5883, %v5885, %v5881
    %v5887 = vmul.f32 1.0, %v5886
    %v5888 = vrcp.pop %v5838
    %v5889 = vmul.f32 %v5838, %v5888
    %v5890 = vsub.f32 1.0, %v5889
    %v5891 = vmul.f32 %v5888, %v5890
    %v5892 = vadd.f32 %v5888, %v5891
    %vm5893 = vweird.f32 %v5838
    %vm5894 = vweird.f32 %v5888
    %vm5895 = vmor %vm5893, %vm5894
    %v5896 = vsel %vm5895, %v5888, %v5892
    %v5897 = vand.u32 2147483647, %v5838
    %vm5898 = vcmp.eq.f32.partialorder %v5897, 8.507059e+37
    %v5899 = vand.u32 %v5838, 2147483648
    %v5900 = vor.u32 1.1754944e-38, %v5899
    %v5901 = vsel %vm5898, %v5900, %v5896
    %v5902 = vmul.f32 1.0, %v5901
    %v5903 = vrcp.pop %v5839
    %v5904 = vmul.f32 %v5839, %v5903
    %v5905 = vsub.f32 1.0, %v5904
    %v5906 = vmul.f32 %v5903, %v5905
    %v5907 = vadd.f32 %v5903, %v5906
    %vm5908 = vweird.f32 %v5839
    %vm5909 = vweird.f32 %v5903
    %vm5910 = vmor %vm5908, %vm5909
    %v5911 = vsel %vm5910, %v5903, %v5907
    %v5912 = vand.u32 2147483647, %v5839
    %vm5913 = vcmp.eq.f32.partialorder %v5912, 8.507059e+37
    %v5914 = vand.u32 %v5839, 2147483648
    %v5915 = vor.u32 1.1754944e-38, %v5914
    %v5916 = vsel %vm5913, %v5915, %v5911
    %v5917 = vmul.f32 1.0, %v5916
    %v5918 = vrcp.pop %v5840
    %v5919 = vmul.f32 %v5840, %v5918
    %v5920 = vsub.f32 1.0, %v5919
    %v5921 = vmul.f32 %v5918, %v5920
    %v5922 = vadd.f32 %v5918, %v5921
    %vm5923 = vweird.f32 %v5840
    %vm5924 = vweird.f32 %v5918
    %vm5925 = vmor %vm5923, %vm5924
    %v5926 = vsel %vm5925, %v5918, %v5922
    %v5927 = vand.u32 2147483647, %v5840
    %vm5928 = vcmp.eq.f32.partialorder %v5927, 8.507059e+37
    %v5929 = vand.u32 %v5840, 2147483648
    %v5930 = vor.u32 1.1754944e-38, %v5929
    %v5931 = vsel %vm5928, %v5930, %v5926
    %v5932 = vmul.f32 1.0, %v5931
    %v5933 = vrcp.pop %v5841
    %v5934 = vmul.f32 %v5841, %v5933
    %v5935 = vsub.f32 1.0, %v5934
    %v5936 = vmul.f32 %v5933, %v5935
    %v5937 = vadd.f32 %v5933, %v5936
    %vm5938 = vweird.f32 %v5841
    %vm5939 = vweird.f32 %v5933
    %vm5940 = vmor %vm5938, %vm5939
    %v5941 = vsel %vm5940, %v5933, %v5937
    %v5942 = vand.u32 2147483647, %v5841
    %vm5943 = vcmp.eq.f32.partialorder %v5942, 8.507059e+37
    %v5944 = vand.u32 %v5841, 2147483648
    %v5945 = vor.u32 1.1754944e-38, %v5944
    %v5946 = vsel %vm5943, %v5945, %v5941
    %v5947 = vmul.f32 1.0, %v5946
    %v5948 = vrcp.pop %v5842
    %v5949 = vmul.f32 %v5842, %v5948
    %v5950 = vsub.f32 1.0, %v5949
    %v5951 = vmul.f32 %v5948, %v5950
    %v5952 = vadd.f32 %v5948, %v5951
    %vm5953 = vweird.f32 %v5842
    %vm5954 = vweird.f32 %v5948
    %vm5955 = vmor %vm5953, %vm5954
    %v5956 = vsel %vm5955, %v5948, %v5952
    %v5957 = vand.u32 2147483647, %v5842
    %vm5958 = vcmp.eq.f32.partialorder %v5957, 8.507059e+37
    %v5959 = vand.u32 %v5842, 2147483648
    %v5960 = vor.u32 1.1754944e-38, %v5959
    %v5961 = vsel %vm5958, %v5960, %v5956
    %v5962 = vmul.f32 1.0, %v5961
    %v5963 = vtanh.pop %v5629
    %v5964 = vtanh.pop %v5633
    %v5965 = vtanh.pop %v5637
    %v5966 = vtanh.pop %v5641
    %v5967 = vtanh.pop %v5645
    %v5968 = vtanh.pop %v5649
    %v5969 = vtanh.pop %v5653
    %v5970 = vtanh.pop %v5657
    %v5971 = vxor.u32 %v5630, 2147483648
    %v5972 = vxor.u32 %v5634, 2147483648
    %v5973 = vxor.u32 %v5638, 2147483648
    %v5974 = vxor.u32 %v5642, 2147483648
    %v5975 = vxor.u32 %v5646, 2147483648
    %v5976 = vxor.u32 %v5650, 2147483648
    %v5977 = vxor.u32 %v5654, 2147483648
    %v5978 = vxor.u32 %v5658, 2147483648
    %v5979 = vmul.f32 %v5971, 1.442695
    %v5980 = vpow.pop %v5979
    %v5981 = vmul.f32 %v5972, 1.442695
    %v5982 = vpow.pop %v5981
    %v5983 = vmul.f32 %v5973, 1.442695
    %v5984 = vpow.pop %v5983
    %v5985 = vmul.f32 %v5974, 1.442695
    %v5986 = vpow.pop %v5985
    %v5987 = vmul.f32 %v5975, 1.442695
    %v5988 = vpow.pop %v5987
    %v5989 = vmul.f32 %v5976, 1.442695
    %v5990 = vpow.pop %v5989
    %v5991 = vmul.f32 %v5977, 1.442695
    %v5992 = vpow.pop %v5991
    %v5993 = vmul.f32 %v5978, 1.442695
    %v5994 = vpow.pop %v5993
    %v5995 = vadd.f32 %v5980, 1.0
    %v5996 = vadd.f32 %v5982, 1.0
    %v5997 = vadd.f32 %v5984, 1.0
    %v5998 = vadd.f32 %v5986, 1.0
    %v5999 = vadd.f32 %v5988, 1.0
    %v6000 = vadd.f32 %v5990, 1.0
    %v6001 = vadd.f32 %v5992, 1.0
    %v6002 = vadd.f32 %v5994, 1.0
    %v6003 = vrcp.pop %v5995
    %v6004 = vmul.f32 %v5995, %v6003
    %v6005 = vsub.f32 1.0, %v6004
    %v6006 = vmul.f32 %v6003, %v6005
    %v6007 = vadd.f32 %v6003, %v6006
    %vm6008 = vweird.f32 %v5995
    %vm6009 = vweird.f32 %v6003
    %vm6010 = vmor %vm6008, %vm6009
    %v6011 = vsel %vm6010, %v6003, %v6007
    %v6012 = vand.u32 2147483647, %v5995
    %vm6013 = vcmp.eq.f32.partialorder %v6012, 8.507059e+37
    %v6014 = vand.u32 %v5995, 2147483648
    %v6015 = vor.u32 1.1754944e-38, %v6014
    %v6016 = vsel %vm6013, %v6015, %v6011
    %v6017 = vmul.f32 1.0, %v6016
    %v6018 = vrcp.pop %v5996
    %v6019 = vmul.f32 %v5996, %v6018
    %v6020 = vsub.f32 1.0, %v6019
    %v6021 = vmul.f32 %v6018, %v6020
    %v6022 = vadd.f32 %v6018, %v6021
    %vm6023 = vweird.f32 %v5996
    %vm6024 = vweird.f32 %v6018
    %vm6025 = vmor %vm6023, %vm6024
    %v6026 = vsel %vm6025, %v6018, %v6022
    %v6027 = vand.u32 2147483647, %v5996
    %vm6028 = vcmp.eq.f32.partialorder %v6027, 8.507059e+37
    %v6029 = vand.u32 %v5996, 2147483648
    %v6030 = vor.u32 1.1754944e-38, %v6029
    %v6031 = vsel %vm6028, %v6030, %v6026
    %v6032 = vmul.f32 1.0, %v6031
    %v6033 = vrcp.pop %v5997
    %v6034 = vmul.f32 %v5997, %v6033
    %v6035 = vsub.f32 1.0, %v6034
    %v6036 = vmul.f32 %v6033, %v6035
    %v6037 = vadd.f32 %v6033, %v6036
    %vm6038 = vweird.f32 %v5997
    %vm6039 = vweird.f32 %v6033
    %vm6040 = vmor %vm6038, %vm6039
    %v6041 = vsel %vm6040, %v6033, %v6037
    %v6042 = vand.u32 2147483647, %v5997
    %vm6043 = vcmp.eq.f32.partialorder %v6042, 8.507059e+37
    %v6044 = vand.u32 %v5997, 2147483648
    %v6045 = vor.u32 1.1754944e-38, %v6044
    %v6046 = vsel %vm6043, %v6045, %v6041
    %v6047 = vmul.f32 1.0, %v6046
    %v6048 = vrcp.pop %v5998
    %v6049 = vmul.f32 %v5998, %v6048
    %v6050 = vsub.f32 1.0, %v6049
    %v6051 = vmul.f32 %v6048, %v6050
    %v6052 = vadd.f32 %v6048, %v6051
    %vm6053 = vweird.f32 %v5998
    %vm6054 = vweird.f32 %v6048
    %vm6055 = vmor %vm6053, %vm6054
    %v6056 = vsel %vm6055, %v6048, %v6052
    %v6057 = vand.u32 2147483647, %v5998
    %vm6058 = vcmp.eq.f32.partialorder %v6057, 8.507059e+37
    %v6059 = vand.u32 %v5998, 2147483648
    %v6060 = vor.u32 1.1754944e-38, %v6059
    %v6061 = vsel %vm6058, %v6060, %v6056
    %v6062 = vmul.f32 1.0, %v6061
    %v6063 = vrcp.pop %v5999
    %v6064 = vmul.f32 %v5999, %v6063
    %v6065 = vsub.f32 1.0, %v6064
    %v6066 = vmul.f32 %v6063, %v6065
    %v6067 = vadd.f32 %v6063, %v6066
    %vm6068 = vweird.f32 %v5999
    %vm6069 = vweird.f32 %v6063
    %vm6070 = vmor %vm6068, %vm6069
    %v6071 = vsel %vm6070, %v6063, %v6067
    %v6072 = vand.u32 2147483647, %v5999
    %vm6073 = vcmp.eq.f32.partialorder %v6072, 8.507059e+37
    %v6074 = vand.u32 %v5999, 2147483648
    %v6075 = vor.u32 1.1754944e-38, %v6074
    %v6076 = vsel %vm6073, %v6075, %v6071
    %v6077 = vmul.f32 1.0, %v6076
    %v6078 = vrcp.pop %v6000
    %v6079 = vmul.f32 %v6000, %v6078
    %v6080 = vsub.f32 1.0, %v6079
    %v6081 = vmul.f32 %v6078, %v6080
    %v6082 = vadd.f32 %v6078, %v6081
    %vm6083 = vweird.f32 %v6000
    %vm6084 = vweird.f32 %v6078
    %vm6085 = vmor %vm6083, %vm6084
    %v6086 = vsel %vm6085, %v6078, %v6082
    %v6087 = vand.u32 2147483647, %v6000
    %vm6088 = vcmp.eq.f32.partialorder %v6087, 8.507059e+37
    %v6089 = vand.u32 %v6000, 2147483648
    %v6090 = vor.u32 1.1754944e-38, %v6089
    %v6091 = vsel %vm6088, %v6090, %v6086
    %v6092 = vmul.f32 1.0, %v6091
    %v6093 = vrcp.pop %v6001
    %v6094 = vmul.f32 %v6001, %v6093
    %v6095 = vsub.f32 1.0, %v6094
    %v6096 = vmul.f32 %v6093, %v6095
    %v6097 = vadd.f32 %v6093, %v6096
    %vm6098 = vweird.f32 %v6001
    %vm6099 = vweird.f32 %v6093
    %vm6100 = vmor %vm6098, %vm6099
    %v6101 = vsel %vm6100, %v6093, %v6097
    %v6102 = vand.u32 2147483647, %v6001
    %vm6103 = vcmp.eq.f32.partialorder %v6102, 8.507059e+37
    %v6104 = vand.u32 %v6001, 2147483648
    %v6105 = vor.u32 1.1754944e-38, %v6104
    %v6106 = vsel %vm6103, %v6105, %v6101
    %v6107 = vmul.f32 1.0, %v6106
    %v6108 = vrcp.pop %v6002
    %v6109 = vmul.f32 %v6002, %v6108
    %v6110 = vsub.f32 1.0, %v6109
    %v6111 = vmul.f32 %v6108, %v6110
    %v6112 = vadd.f32 %v6108, %v6111
    %vm6113 = vweird.f32 %v6002
    %vm6114 = vweird.f32 %v6108
    %vm6115 = vmor %vm6113, %vm6114
    %v6116 = vsel %vm6115, %v6108, %v6112
    %v6117 = vand.u32 2147483647, %v6002
    %vm6118 = vcmp.eq.f32.partialorder %v6117, 8.507059e+37
    %v6119 = vand.u32 %v6002, 2147483648
    %v6120 = vor.u32 1.1754944e-38, %v6119
    %v6121 = vsel %vm6118, %v6120, %v6116
    %v6122 = vmul.f32 1.0, %v6121
    %v6131 = vrot.slane %v5436, 7
    %v6132 = vrot.slane %v5437, 7
    %v6133 = vrot.slane %v5438, 7
    %v6134 = vrot.slane %v5439, 7
    %v6135 = vrot.slane %v5440, 7
    %v6136 = vrot.slane %v5441, 7
    %v6137 = vrot.slane %v5442, 7
    %v6138 = vrot.slane %v5443, 7
    %v6147 = vmul.f32 %v5857, %v6131
    %v6148 = vmul.f32 %v5872, %v6132
    %v6149 = vmul.f32 %v5887, %v6133
    %v6150 = vmul.f32 %v5902, %v6134
    %v6151 = vmul.f32 %v5917, %v6135
    %v6152 = vmul.f32 %v5932, %v6136
    %v6153 = vmul.f32 %v5947, %v6137
    %v6154 = vmul.f32 %v5962, %v6138
    %v6155 = vmul.f32 %v5705, %v5963
    %v6156 = vmul.f32 %v5720, %v5964
    %v6157 = vmul.f32 %v5735, %v5965
    %v6158 = vmul.f32 %v5750, %v5966
    %v6159 = vmul.f32 %v5765, %v5967
    %v6160 = vmul.f32 %v5780, %v5968
    %v6161 = vmul.f32 %v5795, %v5969
    %v6162 = vmul.f32 %v5810, %v5970
    %v6163 = vadd.f32 %v6147, %v6155
    %v6164 = vadd.f32 %v6148, %v6156
    %v6165 = vadd.f32 %v6149, %v6157
    %v6166 = vadd.f32 %v6150, %v6158
    %v6167 = vadd.f32 %v6151, %v6159
    %v6168 = vadd.f32 %v6152, %v6160
    %v6169 = vadd.f32 %v6153, %v6161
    %v6170 = vadd.f32 %v6154, %v6162
    %v6171 = vtanh.pop %v6163
    %v6172 = vtanh.pop %v6164
    %v6173 = vtanh.pop %v6165
    %v6174 = vtanh.pop %v6166
    %v6175 = vtanh.pop %v6167
    %v6176 = vtanh.pop %v6168
    %v6177 = vtanh.pop %v6169
    %v6178 = vtanh.pop %v6170
    %v6179 = vmul.f32 %v6017, %v6171
    %v6180 = vmul.f32 %v6032, %v6172
    %v6181 = vmul.f32 %v6047, %v6173
    %v6182 = vmul.f32 %v6062, %v6174
    %v6183 = vmul.f32 %v6077, %v6175
    %v6184 = vmul.f32 %v6092, %v6176
    %v6185 = vmul.f32 %v6107, %v6177
    %v6186 = vmul.f32 %v6122, %v6178
    %v6195 = vrot.slane %v6180, 7
    %v6196 = vrot.slane %v6181, 6
    %v6197 = vsel %vm1100, %v6196, %v6195
    %v6198 = vrot.slane %v6182, 5
    %v6199 = vsel %vm1103, %v6198, %v6197
    %v6200 = vrot.slane %v6183, 4
    %v6201 = vsel %vm1106, %v6200, %v6199
    %v6202 = vrot.slane %v6184, 3
    %v6203 = vsel %vm1109, %v6202, %v6201
    %v6204 = vrot.slane %v6185, 2
    %v6205 = vsel %vm1112, %v6204, %v6203
    %v6206 = vrot.slane %v6186, 1
    %v6207 = vsel %vm1115, %v6206, %v6205
    %6210 = vst [vmem:[#allocation2 - $0x7] sm:$0x80] %v6179
    %6211 = vst [vmem:[#allocation2 + $0x1] sm:$0x7f] %v6207
    %v6220 = vrot.slane %v6164, 7
    %v6221 = vrot.slane %v6165, 6
    %v6222 = vsel %vm1100, %v6221, %v6220
    %v6223 = vrot.slane %v6166, 5
    %v6224 = vsel %vm1103, %v6223, %v6222
    %v6225 = vrot.slane %v6167, 4
    %v6226 = vsel %vm1106, %v6225, %v6224
    %v6227 = vrot.slane %v6168, 3
    %v6228 = vsel %vm1109, %v6227, %v6226
    %v6229 = vrot.slane %v6169, 2
    %v6230 = vsel %vm1112, %v6229, %v6228
    %v6231 = vrot.slane %v6170, 1
    %v6232 = vsel %vm1115, %v6231, %v6230
    %6235 = vst [vmem:[#allocation3 - $0x7] sm:$0x80] %v6163
    %6236 = vst [vmem:[#allocation3 + $0x1] sm:$0x7f] %v6232
    // Predicated region
    $region50: #{tpu_custom_call.1} parent=1 // pred_check
      %p6237 = pneg %p100
    $region51: #{tpu_custom_call.1} parent=1 // pred_check_branch
      %6239 = sbr.rel (%p6237) target = $region53
    $region52: #{tpu_custom_call.1} parent=1 // pred_region
      %v6240 = vld [vmem:[#allocation12] sm:$0xff]
      %v6241 = vld [vmem:[#allocation12 + $0x8] sm:$0xff]
      %v6242 = vld [vmem:[#allocation12 + $0x10] sm:$0xff]
      %v6243 = vld [vmem:[#allocation12 + $0x18] sm:$0xff]
      %v6244 = vld [vmem:[#allocation12 + $0x20] sm:$0xff]
      %v6245 = vld [vmem:[#allocation12 + $0x28] sm:$0xff]
      %v6246 = vld [vmem:[#allocation12 + $0x30] sm:$0xff]
      %v6247 = vld [vmem:[#allocation12 + $0x38] sm:$0xff]
      %v6248 = vld [vmem:[#allocation12 + $0x40] sm:$0xff]
      %v6249 = vld [vmem:[#allocation12 + $0x48] sm:$0xff]
      %v6250 = vld [vmem:[#allocation12 + $0x50] sm:$0xff]
      %v6251 = vld [vmem:[#allocation12 + $0x58] sm:$0xff]
      %v6252 = vld [vmem:[#allocation12 + $0x60] sm:$0xff]
      %v6253 = vld [vmem:[#allocation12 + $0x68] sm:$0xff]
      %v6254 = vld [vmem:[#allocation12 + $0x70] sm:$0xff]
      %v6255 = vld [vmem:[#allocation12 + $0x78] sm:$0xff]
      %v6256 = vld [vmem:[%s5] sm:$0x1]
      %v6258 = vperm.slane %v6256, 0
      %v6260 = vrot.slane %v6179, 7
      %v6261 = vrot.slane %v6180, 6
      %v6262 = vsel %vm1100, %v6261, %v6260
      %v6263 = vrot.slane %v6181, 5
      %v6264 = vsel %vm1103, %v6263, %v6262
      %v6265 = vrot.slane %v6182, 4
      %v6266 = vsel %vm1106, %v6265, %v6264
      %v6267 = vrot.slane %v6183, 3
      %v6268 = vsel %vm1109, %v6267, %v6266
      %v6269 = vrot.slane %v6184, 2
      %v6270 = vsel %vm1112, %v6269, %v6268
      %v6271 = vrot.slane %v6185, 1
      %v6272 = vsel %vm1115, %v6271, %v6270
      %v6273 = vsel %vm1118, %v6186, %v6272
      %6275 = vmatpush.msra.mxu0 %v6255
      %6276 = vmatpush.msra.mxu0 %v6254
      %6277 = vmatpush.msra.mxu0 %v6253
      %6278 = vmatpush.msra.mxu0 %v6252
      %6279 = vmatpush.msra.mxu0 %v6251
      %6280 = vmatpush.msra.mxu0 %v6250
      %6281 = vmatpush.msra.mxu0 %v6249
      %6282 = vmatpush.msra.mxu0 %v6248
      %6283 = vmatpush.msra.mxu0 %v6247
      %6284 = vmatpush.msra.mxu0 %v6246
      %6285 = vmatpush.msra.mxu0 %v6245
      %6286 = vmatpush.msra.mxu0 %v6244
      %6287 = vmatpush.msra.mxu0 %v6243
      %6288 = vmatpush.msra.mxu0 %v6242
      %6289 = vmatpush.msra.mxu0 %v6241
      %6290 = vmatpush.msra.mxu0 %v6240
      %6291 = vmatmul.f32.gmra.mxu0 %v6273
      %v6292 = vpop.f32.mrf.mxu0
      %v6293 = vadd.f32 %v6258, %v6292
      %6294 = vdwg.mxu0
      %6295 = vst [vmem:[#allocation13] sm:$0xff] %v6293
    $region53: #{tpu_custom_call.1} parent=1 // pred_fallthru
      _
    // Predicated region
    $region54: #{tpu_custom_call.1} parent=1 // pred_check
      _
    $region55: #{tpu_custom_call.1} parent=1 // pred_check_branch
      %6297 = sbr.rel (0) target = $region57
    $region56: #{tpu_custom_call.1} parent=1 // pred_region
      %6299 = vsyncadd [#allocation6], 0
      %s6301 = sshll.u32 [#allocation13], 4
      %s6302 = int_to_ptr.vmem [resolvable:$true] %s6301
      %s6303 = sshll.u32 %s6, 4
      %s6304 = int_to_ptr.hbm [resolvable:$true] %s6303
      %6306 = dma.vmem_to_hbm [thread:$0]  %s6302, 128, %s6304, [#allocation6]
    $region57: #{tpu_custom_call.1} parent=1 // pred_fallthru
      _
    // Predicated region
    $region58: #{tpu_custom_call.1} parent=1 // pred_check
      _
    $region59: #{tpu_custom_call.1} parent=1 // pred_check_branch
      %6308 = sbr.rel (0) target = $region61
    $region60: #{tpu_custom_call.1} parent=1 // pred_region
      %6310 = dma.done [#allocation6], 128
    $region61: #{tpu_custom_call.1} parent=1 // pred_fallthru
      _
    %6311 = vsyncpa [#allocation5], 1
    %6312 = vsyncpa [#allocation8], 1
    %6313 = vsyncpa [#allocation11], 1
    %6314 = vsyncpa [#allocation6], 1

</llo_original>
